<compile_context>
chip_gen: v7x
topology: tpu7x:2x2x1
jax: 0.10.0
libtpu: 0.0.40
codegen_flags: <defaults>
</compile_context>

<pallas_src>
import math
import functools

import jax
import jax.numpy as jnp
from jax.experimental import pallas as pl
from jax.experimental.pallas import tpu as pltpu


# ----------------------------------------------------------------------------
# Small helpers
# ----------------------------------------------------------------------------

def _cp(dims):
    """CompilerParams with dimension_semantics, tolerant of jax version drift."""
    for name in ("CompilerParams", "TPUCompilerParams"):
        cls = getattr(pltpu, name, None)
        if cls is not None:
            try:
                return cls(dimension_semantics=dims)
            except Exception:
                pass
    return None


def _approx_recip(x):
    if hasattr(pl, "reciprocal"):
        return pl.reciprocal(x, approx=True)
    return 1.0 / x


def _row_tile(m):
    # TODO(synk): at production sizes also tile N/K with an f32 accumulator
    # (v7x VMEM is 64 MiB); at these shapes whole-weight blocks fit easily.
    for t in (512, 256, 128):
        if m % t == 0:
            return t
    return m


def _layernorm(z, gamma, beta):
    mu = jnp.mean(z, axis=-1, keepdims=True)
    var = jnp.mean((z - mu) ** 2, axis=-1, keepdims=True)
    return (z - mu) * jax.lax.rsqrt(var + 1e-5) * gamma + beta


# ----------------------------------------------------------------------------
# Pallas kernels
# ----------------------------------------------------------------------------

def _attn_block_kernel(qin_ref, kvin_ref, bias_ref,
                       wq_ref, bq_ref, wkv_ref, bkv_ref, wc_ref, bc_ref,
                       g_ref, beta_ref, o_ref, *, heads, d_k, scale):
    """Fused: Q/K/V projections + multi-head attention + out-proj + residual + LN.

    Block shapes (per batch element b):
      qin:(1,Sq,D) kvin:(1,Sk,D) bias:(1,Sq,Sk)  weights full  out:(1,Sq,D)
    Weights arrive in bf16; activations/elementwise math stay f32.
    """
    x = qin_ref[...][0]          # (Sq, D) f32   (also the residual)
    kv = kvin_ref[...][0]        # (Sk, D) f32
    bias = bias_ref[...][0]      # (Sq, Sk) f32 additive mask (0 / -1e9)

    xb = x.astype(jnp.bfloat16)
    kvb = kv.astype(jnp.bfloat16)

    # Projections (bf16 inputs, f32 accumulate).  wkv = [wk | wv] packed (D, 2D).
    q = jnp.dot(xb, wq_ref[...], preferred_element_type=jnp.float32) + bq_ref[...]
    kvp = jnp.dot(kvb, wkv_ref[...], preferred_element_type=jnp.float32) + bkv_ref[...]
    d_model = heads * d_k
    k = kvp[:, :d_model]
    v = kvp[:, d_model:]

    # Per-head attention (static unroll over heads; tiny tiles at these sizes).
    ctx_parts = []
    for h in range(heads):
        lo, hi = h * d_k, (h + 1) * d_k
        qh = q[:, lo:hi].astype(jnp.bfloat16)
        kh = k[:, lo:hi].astype(jnp.bfloat16)
        vh = v[:, lo:hi].astype(jnp.bfloat16)
        s = jax.lax.dot_general(qh, kh, (((1,), (1,)), ((), ())),
                                preferred_element_type=jnp.float32)
        s = s * scale + bias
        mx = jnp.max(s, axis=-1, keepdims=True)
        e = jnp.exp(s - mx)
        denom = jnp.sum(e, axis=-1, keepdims=True)
        w = e * _approx_recip(denom)
        ctx_parts.append(jnp.dot(w.astype(jnp.bfloat16), vh,
                                 preferred_element_type=jnp.float32))
    ctx = jnp.concatenate(ctx_parts, axis=-1)        # (Sq, D) f32

    # Output projection + residual + LayerNorm epilogue (all fused here).
    out = jnp.dot(ctx.astype(jnp.bfloat16), wc_ref[...],
                  preferred_element_type=jnp.float32) + bc_ref[...]
    z = out + x
    o_ref[...] = _layernorm(z, g_ref[...], beta_ref[...])[None, :, :]


def _ffn_block_kernel(x_ref, w1_ref, b1_ref, w2_ref, b2_ref, g_ref, b_ref, o_ref):
    """Fused: fc1 + ReLU + fc2 + residual + LayerNorm. bf16 matmuls, f32 elementwise."""
    x = x_ref[...]                                       # (tm, D) f32
    h = jnp.dot(x.astype(jnp.bfloat16), w1_ref[...],
                preferred_element_type=jnp.float32) + b1_ref[...]
    h = jnp.maximum(h, 0.0)
    y = jnp.dot(h.astype(jnp.bfloat16), w2_ref[...],
                preferred_element_type=jnp.float32) + b2_ref[...]
    z = y + x
    o_ref[...] = _layernorm(z, g_ref[...], b_ref[...])


def _logits_lsm_kernel(x_ref, w_ref, b_ref, o_ref):
    """Fused: logit projection + log_softmax (exact, f32)."""
    logits = jnp.dot(x_ref[...].astype(jnp.bfloat16), w_ref[...],
                     preferred_element_type=jnp.float32) + b_ref[...]
    mx = jnp.max(logits, axis=-1, keepdims=True)
    s = logits - mx
    lse = jnp.log(jnp.sum(jnp.exp(s), axis=-1, keepdims=True))
    o_ref[...] = s - lse
    # TODO(synk): for real vocabularies tile the vocab (N) axis with a two-pass
    # / online log-sum-exp; V=16 here fits a single lane-sparse block.


# ----------------------------------------------------------------------------
# Kernel wrappers
# ----------------------------------------------------------------------------

def attention_block(mha, ln_g, ln_b, q_in, kv_in, bias, heads):
    B, Sq, D = q_in.shape
    Sk = kv_in.shape[1]
    d_k = D // heads
    kern = functools.partial(_attn_block_kernel, heads=heads, d_k=d_k,
                             scale=1.0 / math.sqrt(d_k))
    return pl.pallas_call(
        kern,
        out_shape=jax.ShapeDtypeStruct((B, Sq, D), jnp.float32),
        grid=(B,),
        in_specs=[
            pl.BlockSpec((1, Sq, D), lambda b: (b, 0, 0)),
            pl.BlockSpec((1, Sk, D), lambda b: (b, 0, 0)),
            pl.BlockSpec((1, Sq, Sk), lambda b: (b, 0, 0)),
            pl.BlockSpec((D, D), lambda b: (0, 0)),        # wq (bf16)
            pl.BlockSpec((1, D), lambda b: (0, 0)),        # bq
            pl.BlockSpec((D, 2 * D), lambda b: (0, 0)),    # wkv (bf16)
            pl.BlockSpec((1, 2 * D), lambda b: (0, 0)),    # bkv
            pl.BlockSpec((D, D), lambda b: (0, 0)),        # wc (bf16)
            pl.BlockSpec((1, D), lambda b: (0, 0)),        # bc
            pl.BlockSpec((1, D), lambda b: (0, 0)),        # ln gamma
            pl.BlockSpec((1, D), lambda b: (0, 0)),        # ln beta
        ],
        out_specs=pl.BlockSpec((1, Sq, D), lambda b: (b, 0, 0)),
        compiler_params=_cp(("parallel",)),
    )(q_in, kv_in, bias, mha["wq"], mha["bq"], mha["wkv"], mha["bkv"],
      mha["wc"], mha["bc"], ln_g, ln_b)


def ffn_block(ff, ln_g, ln_b, x):
    B, S, D = x.shape
    M = B * S
    F = ff["w1"].shape[1]
    tm = _row_tile(M)
    out = pl.pallas_call(
        _ffn_block_kernel,
        out_shape=jax.ShapeDtypeStruct((M, D), jnp.float32),
        grid=(M // tm,),
        in_specs=[
            pl.BlockSpec((tm, D), lambda i: (i, 0)),
            pl.BlockSpec((D, F), lambda i: (0, 0)),        # w1 (bf16)
            pl.BlockSpec((1, F), lambda i: (0, 0)),
            pl.BlockSpec((F, D), lambda i: (0, 0)),        # w2 (bf16)
            pl.BlockSpec((1, D), lambda i: (0, 0)),
            pl.BlockSpec((1, D), lambda i: (0, 0)),
            pl.BlockSpec((1, D), lambda i: (0, 0)),
        ],
        out_specs=pl.BlockSpec((tm, D), lambda i: (i, 0)),
        compiler_params=_cp(("parallel",)),
    )(x.reshape(M, D), ff["w1"], ff["b1"], ff["w2"], ff["b2"], ln_g, ln_b)
    return out.reshape(B, S, D)


def logits_log_softmax(w_logit, b_logit, x):
    B, S, D = x.shape
    M = B * S
    V = w_logit.shape[1]
    tm = _row_tile(M)
    out = pl.pallas_call(
        _logits_lsm_kernel,
        out_shape=jax.ShapeDtypeStruct((M, V), jnp.float32),
        grid=(M // tm,),
        in_specs=[
            pl.BlockSpec((tm, D), lambda i: (i, 0)),
            pl.BlockSpec((D, V), lambda i: (0, 0)),        # w_logit (bf16)
            pl.BlockSpec((1, V), lambda i: (0, 0)),
        ],
        out_specs=pl.BlockSpec((tm, V), lambda i: (i, 0)),
        compiler_params=_cp(("parallel",)),
    )(x.reshape(M, D), w_logit, b_logit)
    return out.reshape(B, S, V)


# ----------------------------------------------------------------------------
# Model glue (embedding gather / mask bias / layer loops in plain JAX)
# ----------------------------------------------------------------------------

def embeddings(embed_table, pe, word_ids, d_model):
    emb = jnp.take(embed_table, word_ids, axis=0) * math.sqrt(d_model)
    return emb + pe[:, : word_ids.shape[1], :]


def make_additive_bias(mask, batch, s_q, s_k):
    # 0 where attended, -1e9 where masked (matches masked_fill(-1e9) semantics
    # after softmax); no head replication — bias is only (B, Sq, Sk).
    bias = jnp.where(mask == 0, jnp.float32(-1.0e9), jnp.float32(0.0))
    bias = jnp.broadcast_to(bias, (batch, 1, s_q, s_k))
    return bias[:, 0]


def transformer_forward(pp, src_words, src_mask, tgt_words, tgt_mask,
                        d_model, heads):
    B, S_src = src_words.shape
    S_tgt = tgt_words.shape[1]

    enc_bias = make_additive_bias(src_mask, B, S_src, S_src)
    tgt_bias = make_additive_bias(tgt_mask, B, S_tgt, S_tgt)
    cross_bias = make_additive_bias(src_mask, B, S_tgt, S_src)

    # ---- encode ----
    x = embeddings(pp["embed"], pp["pe"], src_words, d_model)
    for lp in pp["encoder"]:
        x = attention_block(lp["attn"], lp["ln_g"], lp["ln_b"], x, x, enc_bias, heads)
        x = ffn_block(lp["ff"], lp["ln_g"], lp["ln_b"], x)
    encoded = x

    # ---- decode ----
    y = embeddings(pp["embed"], pp["pe"], tgt_words, d_model)
    for lp in pp["decoder"]:
        y = attention_block(lp["self_attn"], lp["ln_g"], lp["ln_b"], y, y, tgt_bias, heads)
        y = attention_block(lp["src_attn"], lp["ln_g"], lp["ln_b"], y, encoded, cross_bias, heads)
        y = ffn_block(lp["ff"], lp["ln_g"], lp["ln_b"], y)

    return logits_log_softmax(pp["w_logit"], pp["b_logit"], y)


# ----------------------------------------------------------------------------
# Deterministic parameter construction (matches the PyTorch reference layout)
# ----------------------------------------------------------------------------

def make_positional_encoding(max_len, d_model):
    # Reproduces the (slightly unusual) formula in the PyTorch reference exactly.
    pe = [[0.0] * d_model for _ in range(max_len)]
    for pos in range(max_len):
        for i in range(0, d_model, 2):
            pe[pos][i] = math.sin(pos / 10000 ** (2 * i / d_model))
            pe[pos][i + 1] = math.cos(pos / 10000 ** (2 * (i + 1) / d_model))
    return jnp.asarray(pe, dtype=jnp.float32)[None, :, :]   # (1, max_len, d_model)


def init_linear(key, fan_in, fan_out):
    k1, k2 = jax.random.split(key)
    bound = 1.0 / math.sqrt(fan_in)
    w = jax.random.uniform(k1, (fan_in, fan_out), jnp.float32, -bound, bound)
    b = jax.random.uniform(k2, (fan_out,), jnp.float32, -bound, bound)
    return w, b


def init_mha(key, d_model):
    ks = jax.random.split(key, 4)
    wq, bq = init_linear(ks[0], d_model, d_model)
    wk, bk = init_linear(ks[1], d_model, d_model)
    wv, bv = init_linear(ks[2], d_model, d_model)
    wc, bc = init_linear(ks[3], d_model, d_model)
    return dict(wq=wq, bq=bq, wk=wk, bk=bk, wv=wv, bv=bv, wc=wc, bc=bc)


def init_ff(key, d_model, middle_dim):
    k1, k2 = jax.random.split(key)
    w1, b1 = init_linear(k1, d_model, middle_dim)
    w2, b2 = init_linear(k2, middle_dim, d_model)
    return dict(w1=w1, b1=b1, w2=w2, b2=b2)


def init_params(key, d_model, heads, num_layers, vocab_size, middle_dim, max_len):
    keys = jax.random.split(key, 2 + 2 * num_layers + 1)
    params = {}
    params["embed"] = jax.random.normal(keys[0], (vocab_size, d_model), jnp.float32) * 0.1
    params["pe"] = make_positional_encoding(max_len, d_model)

    params["encoder"] = []
    for i in range(num_layers):
        k1, k2 = jax.random.split(keys[1 + i])
        params["encoder"].append(dict(
            attn=init_mha(k1, d_model),
            ff=init_ff(k2, d_model, middle_dim),
            ln_g=jnp.ones((d_model,), jnp.float32),
            ln_b=jnp.zeros((d_model,), jnp.float32),
        ))

    params["decoder"] = []
    for i in range(num_layers):
        k1, k2, k3 = jax.random.split(keys[1 + num_layers + i], 3)
        params["decoder"].append(dict(
            self_attn=init_mha(k1, d_model),
            src_attn=init_mha(k2, d_model),
            ff=init_ff(k3, d_model, middle_dim),
            ln_g=jnp.ones((d_model,), jnp.float32),
            ln_b=jnp.zeros((d_model,), jnp.float32),
        ))

    w_logit, b_logit = init_linear(keys[-1], d_model, vocab_size)
    params["w_logit"] = w_logit
    params["b_logit"] = b_logit
    return params


def pack_params(raw):
    """Pack raw f32 params into kernel-ready form: bf16 weights, wk|wv concatenated,
    biases / LN params reshaped to lane-broadcast (1, N) rows."""
    def pack_mha(m):
        return dict(
            wq=m["wq"].astype(jnp.bfloat16),
            bq=m["bq"].reshape(1, -1).astype(jnp.float32),
            wkv=jnp.concatenate([m["wk"], m["wv"]], axis=1).astype(jnp.bfloat16),
            bkv=jnp.concatenate([m["bk"], m["bv"]], axis=0).reshape(1, -1).astype(jnp.float32),
            wc=m["wc"].astype(jnp.bfloat16),
            bc=m["bc"].reshape(1, -1).astype(jnp.float32),
        )

    def pack_ff(f):
        return dict(
            w1=f["w1"].astype(jnp.bfloat16), b1=f["b1"].reshape(1, -1).astype(jnp.float32),
            w2=f["w2"].astype(jnp.bfloat16), b2=f["b2"].reshape(1, -1).astype(jnp.float32),
        )

    packed = dict(
        embed=raw["embed"],
        pe=raw["pe"],
        w_logit=raw["w_logit"].astype(jnp.bfloat16),
        b_logit=raw["b_logit"].reshape(1, -1).astype(jnp.float32),
        encoder=[],
        decoder=[],
    )
    for lp in raw["encoder"]:
        packed["encoder"].append(dict(
            attn=pack_mha(lp["attn"]), ff=pack_ff(lp["ff"]),
            ln_g=lp["ln_g"].reshape(1, -1), ln_b=lp["ln_b"].reshape(1, -1)))
    for lp in raw["decoder"]:
        packed["decoder"].append(dict(
            self_attn=pack_mha(lp["self_attn"]), src_attn=pack_mha(lp["src_attn"]),
            ff=pack_ff(lp["ff"]),
            ln_g=lp["ln_g"].reshape(1, -1), ln_b=lp["ln_b"].reshape(1, -1)))
    return packed


# ----------------------------------------------------------------------------
# Main
# ----------------------------------------------------------------------------

if __name__ == "__main__":
    # Small config
    d_model = 32
    heads = 4
    num_layers = 2
    vocab_size = 16          # len(word_map)
    middle_dim = 2048        # FeedForward default in the reference
    max_len = 50
    B, S = 2, 8

    key = jax.random.PRNGKey(0)
    pkey, skey, tkey = jax.random.split(key, 3)

    raw_params = init_params(pkey, d_model, heads, num_layers, vocab_size,
                             middle_dim, max_len)
    params = pack_params(raw_params)

    src_words = jax.random.randint(skey, (B, S), 0, vocab_size, dtype=jnp.int32)
    target_words = jax.random.randint(tkey, (B, S), 0, vocab_size, dtype=jnp.int32)

    # src_mask: (B, 1, 1, S) — all positions valid
    src_mask = jnp.ones((B, 1, 1, S), dtype=jnp.float32)
    # target_mask: (B, 1, S, S) — causal (lower-triangular)
    target_mask = jnp.tril(jnp.ones((S, S), dtype=jnp.float32))[None, None, :, :]
    target_mask = jnp.broadcast_to(target_mask, (B, 1, S, S))

    fwd = jax.jit(functools.partial(transformer_forward, d_model=d_model, heads=heads))
    out = fwd(params, src_words, src_mask, target_words, target_mask)
    out = jax.block_until_ready(out)

    assert out.shape == (B, S, vocab_size), out.shape
    # log-softmax rows should sum to ~1 in prob space
    assert jnp.allclose(jnp.sum(jnp.exp(out), axis=-1), 1.0, atol=1e-3)
    assert bool(jnp.all(jnp.isfinite(out)))
    print("KERNEL_OK")
</pallas_src>

<mosaic_0001>
module attributes {stable_mosaic.version = 11 : i64} {
  func.func @_logits_lsm_kernel(%arg0: i32, %arg1: memref<16x32xf32, #tpu.memory_space<vmem>>, %arg2: memref<32x16xbf16, #tpu.memory_space<vmem>>, %arg3: memref<1x16xf32, #tpu.memory_space<vmem>>, %arg4: memref<16x16xf32, #tpu.memory_space<vmem>>) attributes {dimension_semantics = [#tpu.dimension_semantics<parallel>], iteration_bounds = array<i64: 1>, scalar_prefetch = 0 : i64, scratch_operands = 0 : i64, tpu.core_type = #tpu.core_type<tc>, window_params = [{transform_indices = @transform_0, window_bounds = array<i64: 16, 32>}, {pipeline_mode = #tpu.pipeline_mode<synchronous>, transform_indices = @transform_1, window_bounds = array<i64: 32, 16>}, {pipeline_mode = #tpu.pipeline_mode<synchronous>, transform_indices = @transform_2, window_bounds = array<i64: 1, 16>}, {transform_indices = @transform_3, window_bounds = array<i64: 16, 16>}]} {
    %c0 = arith.constant 0 : index
    %c0_0 = arith.constant 0 : index
    %0 = vector.load %arg1[%c0, %c0_0] : memref<16x32xf32, #tpu.memory_space<vmem>>, vector<16x32xf32>
    %1 = arith.truncf %0 : vector<16x32xf32> to vector<16x32xbf16>
    %c0_1 = arith.constant 0 : index
    %c0_2 = arith.constant 0 : index
    %2 = vector.load %arg2[%c0_1, %c0_2] : memref<32x16xbf16, #tpu.memory_space<vmem>>, vector<32x16xbf16>
    %cst = arith.constant dense<0.000000e+00> : vector<16x16xf32>
    %3 = tpu.matmul %1, %2, %cst {dimension_numbers = #tpu.dot_dimension_numbers<[1], [0], [0], [1], [0, 0, 1, 1], [], []>} : vector<16x32xbf16>, vector<32x16xbf16>, vector<16x16xf32> -> vector<16x16xf32>
    %c0_3 = arith.constant 0 : index
    %c0_4 = arith.constant 0 : index
    %4 = vector.load %arg3[%c0_3, %c0_4] : memref<1x16xf32, #tpu.memory_space<vmem>>, vector<1x16xf32>
    %5 = vector.broadcast %4 : vector<1x16xf32> to vector<16x16xf32>
    %6 = arith.addf %3, %5 : vector<16x16xf32>
    %cst_5 = arith.constant dense<0xFF800000> : vector<16xf32>
    %7 = vector.multi_reduction <maximumf>, %6, %cst_5 [1] : vector<16x16xf32> to vector<16xf32>
    %8 = vector.shape_cast %7 : vector<16xf32> to vector<16x1xf32>
    %9 = vector.broadcast %8 : vector<16x1xf32> to vector<16x16xf32>
    %10 = arith.subf %6, %9 : vector<16x16xf32>
    %11 = math.exp %10 : vector<16x16xf32>
    %cst_6 = arith.constant dense<0.000000e+00> : vector<16xf32>
    %12 = vector.multi_reduction <add>, %11, %cst_6 [1] : vector<16x16xf32> to vector<16xf32>
    %13 = vector.shape_cast %12 : vector<16xf32> to vector<16x1xf32>
    %14 = math.log %13 : vector<16x1xf32>
    %15 = vector.broadcast %14 : vector<16x1xf32> to vector<16x16xf32>
    %16 = arith.subf %10, %15 : vector<16x16xf32>
    %c0_7 = arith.constant 0 : index
    %c0_8 = arith.constant 0 : index
    %17 = vector.load %arg4[%c0_7, %c0_8] : memref<16x16xf32, #tpu.memory_space<vmem>>, vector<16x16xf32>
    tpu.vector_store %arg4[%c0_7, %c0_8], %16 {strides = array<i32>} : memref<16x16xf32, #tpu.memory_space<vmem>>, vector<16x16xf32>,
    return
  }
  func.func @transform_0(%arg0: i32) -> (i32, i32) {
    %c0_i32 = arith.constant 0 : i32
    %c0_i32_0 = arith.constant 0 : i32
    return %arg0, %c0_i32 : i32, i32
  }
  func.func @transform_1(%arg0: i32) -> (i32, i32) {
    %c0_i32 = arith.constant 0 : i32
    %c0_i32_0 = arith.constant 0 : i32
    %c0_i32_1 = arith.constant 0 : i32
    return %c0_i32, %c0_i32_0 : i32, i32
  }
  func.func @transform_2(%arg0: i32) -> (i32, i32) {
    %c0_i32 = arith.constant 0 : i32
    %c0_i32_0 = arith.constant 0 : i32
    %c0_i32_1 = arith.constant 0 : i32
    return %c0_i32, %c0_i32_0 : i32, i32
  }
  func.func @transform_3(%arg0: i32) -> (i32, i32) {
    %c0_i32 = arith.constant 0 : i32
    %c0_i32_0 = arith.constant 0 : i32
    return %arg0, %c0_i32 : i32, i32
  }
}

module attributes {stable_mosaic.version = 11 : i64} {
  func.func @_ffn_block_kernel(%arg0: i32, %arg1: memref<16x32xf32, #tpu.memory_space<vmem>>, %arg2: memref<32x2048xbf16, #tpu.memory_space<vmem>>, %arg3: memref<1x2048xf32, #tpu.memory_space<vmem>>, %arg4: memref<2048x32xbf16, #tpu.memory_space<vmem>>, %arg5: memref<1x32xf32, #tpu.memory_space<vmem>>, %arg6: memref<1x32xf32, #tpu.memory_space<vmem>>, %arg7: memref<1x32xf32, #tpu.memory_space<vmem>>, %arg8: memref<16x32xf32, #tpu.memory_space<vmem>>) attributes {dimension_semantics = [#tpu.dimension_semantics<parallel>], iteration_bounds = array<i64: 1>, scalar_prefetch = 0 : i64, scratch_operands = 0 : i64, tpu.core_type = #tpu.core_type<tc>, window_params = [{transform_indices = @transform_0, window_bounds = array<i64: 16, 32>}, {pipeline_mode = #tpu.pipeline_mode<synchronous>, transform_indices = @transform_1, window_bounds = array<i64: 32, 2048>}, {pipeline_mode = #tpu.pipeline_mode<synchronous>, transform_indices = @transform_2, window_bounds = array<i64: 1, 2048>}, {pipeline_mode = #tpu.pipeline_mode<synchronous>, transform_indices = @transform_3, window_bounds = array<i64: 2048, 32>}, {pipeline_mode = #tpu.pipeline_mode<synchronous>, transform_indices = @transform_4, window_bounds = array<i64: 1, 32>}, {pipeline_mode = #tpu.pipeline_mode<synchronous>, transform_indices = @transform_5, window_bounds = array<i64: 1, 32>}, {pipeline_mode = #tpu.pipeline_mode<synchronous>, transform_indices = @transform_6, window_bounds = array<i64: 1, 32>}, {transform_indices = @transform_7, window_bounds = array<i64: 16, 32>}]} {
    %c0 = arith.constant 0 : index
    %c0_0 = arith.constant 0 : index
    %0 = vector.load %arg1[%c0, %c0_0] : memref<16x32xf32, #tpu.memory_space<vmem>>, vector<16x32xf32>
    %1 = arith.truncf %0 : vector<16x32xf32> to vector<16x32xbf16>
    %c0_1 = arith.constant 0 : index
    %c0_2 = arith.constant 0 : index
    %2 = vector.load %arg2[%c0_1, %c0_2] : memref<32x2048xbf16, #tpu.memory_space<vmem>>, vector<32x2048xbf16>
    %cst = arith.constant dense<0.000000e+00> : vector<16x2048xf32>
    %3 = tpu.matmul %1, %2, %cst {dimension_numbers = #tpu.dot_dimension_numbers<[1], [0], [0], [1], [0, 0, 1, 1], [], []>} : vector<16x32xbf16>, vector<32x2048xbf16>, vector<16x2048xf32> -> vector<16x2048xf32>
    %c0_3 = arith.constant 0 : index
    %c0_4 = arith.constant 0 : index
    %4 = vector.load %arg3[%c0_3, %c0_4] : memref<1x2048xf32, #tpu.memory_space<vmem>>, vector<1x2048xf32>
    %5 = vector.broadcast %4 : vector<1x2048xf32> to vector<16x2048xf32>
    %6 = arith.addf %3, %5 : vector<16x2048xf32>
    %cst_5 = arith.constant 0.000000e+00 : f32
    %7 = vector.broadcast %cst_5 : f32 to vector<16x2048xf32>
    %8 = arith.maximumf %6, %7 : vector<16x2048xf32>
    %9 = arith.truncf %8 : vector<16x2048xf32> to vector<16x2048xbf16>
    %c0_6 = arith.constant 0 : index
    %c0_7 = arith.constant 0 : index
    %10 = vector.load %arg4[%c0_6, %c0_7] : memref<2048x32xbf16, #tpu.memory_space<vmem>>, vector<2048x32xbf16>
    %cst_8 = arith.constant dense<0.000000e+00> : vector<16x32xf32>
    %11 = tpu.matmul %9, %10, %cst_8 {dimension_numbers = #tpu.dot_dimension_numbers<[1], [0], [0], [1], [0, 0, 1, 1], [], []>} : vector<16x2048xbf16>, vector<2048x32xbf16>, vector<16x32xf32> -> vector<16x32xf32>
    %c0_9 = arith.constant 0 : index
    %c0_10 = arith.constant 0 : index
    %12 = vector.load %arg5[%c0_9, %c0_10] : memref<1x32xf32, #tpu.memory_space<vmem>>, vector<1x32xf32>
    %13 = vector.broadcast %12 : vector<1x32xf32> to vector<16x32xf32>
    %14 = arith.addf %11, %13 : vector<16x32xf32>
    %15 = arith.addf %14, %0 : vector<16x32xf32>
    %c0_11 = arith.constant 0 : index
    %c0_12 = arith.constant 0 : index
    %16 = vector.load %arg6[%c0_11, %c0_12] : memref<1x32xf32, #tpu.memory_space<vmem>>, vector<1x32xf32>
    %c0_13 = arith.constant 0 : index
    %c0_14 = arith.constant 0 : index
    %17 = vector.load %arg7[%c0_13, %c0_14] : memref<1x32xf32, #tpu.memory_space<vmem>>, vector<1x32xf32>
    %cst_15 = arith.constant dense<0.000000e+00> : vector<16xf32>
    %18 = vector.multi_reduction <add>, %15, %cst_15 [1] : vector<16x32xf32> to vector<16xf32>
    %19 = vector.shape_cast %18 : vector<16xf32> to vector<16x1xf32>
    %cst_16 = arith.constant 3.200000e+01 : f32
    %20 = vector.broadcast %cst_16 : f32 to vector<16x1xf32>
    %21 = arith.divf %19, %20 : vector<16x1xf32>
    %22 = vector.broadcast %21 : vector<16x1xf32> to vector<16x32xf32>
    %23 = arith.subf %15, %22 : vector<16x32xf32>
    %24 = arith.mulf %23, %23 : vector<16x32xf32>
    %cst_17 = arith.constant dense<0.000000e+00> : vector<16xf32>
    %25 = vector.multi_reduction <add>, %24, %cst_17 [1] : vector<16x32xf32> to vector<16xf32>
    %26 = vector.shape_cast %25 : vector<16xf32> to vector<16x1xf32>
    %cst_18 = arith.constant 3.200000e+01 : f32
    %27 = vector.broadcast %cst_18 : f32 to vector<16x1xf32>
    %28 = arith.divf %26, %27 : vector<16x1xf32>
    %29 = vector.broadcast %21 : vector<16x1xf32> to vector<16x32xf32>
    %30 = arith.subf %15, %29 : vector<16x32xf32>
    %cst_19 = arith.constant 9.99999974E-6 : f32
    %31 = vector.broadcast %cst_19 : f32 to vector<16x1xf32>
    %32 = arith.addf %28, %31 : vector<16x1xf32>
    %33 = math.rsqrt %32 : vector<16x1xf32>
    %34 = vector.broadcast %33 : vector<16x1xf32> to vector<16x32xf32>
    %35 = arith.mulf %30, %34 : vector<16x32xf32>
    %36 = vector.broadcast %16 : vector<1x32xf32> to vector<16x32xf32>
    %37 = arith.mulf %35, %36 : vector<16x32xf32>
    %38 = vector.broadcast %17 : vector<1x32xf32> to vector<16x32xf32>
    %39 = arith.addf %37, %38 : vector<16x32xf32>
    %c0_20 = arith.constant 0 : index
    %c0_21 = arith.constant 0 : index
    %40 = vector.load %arg8[%c0_20, %c0_21] : memref<16x32xf32, #tpu.memory_space<vmem>>, vector<16x32xf32>
    tpu.vector_store %arg8[%c0_20, %c0_21], %39 {strides = array<i32>} : memref<16x32xf32, #tpu.memory_space<vmem>>, vector<16x32xf32>,
    return
  }
  func.func @transform_0(%arg0: i32) -> (i32, i32) {
    %c0_i32 = arith.constant 0 : i32
    %c0_i32_0 = arith.constant 0 : i32
    return %arg0, %c0_i32 : i32, i32
  }
  func.func @transform_1(%arg0: i32) -> (i32, i32) {
    %c0_i32 = arith.constant 0 : i32
    %c0_i32_0 = arith.constant 0 : i32
    %c0_i32_1 = arith.constant 0 : i32
    return %c0_i32, %c0_i32_0 : i32, i32
  }
  func.func @transform_2(%arg0: i32) -> (i32, i32) {
    %c0_i32 = arith.constant 0 : i32
    %c0_i32_0 = arith.constant 0 : i32
    %c0_i32_1 = arith.constant 0 : i32
    return %c0_i32, %c0_i32_0 : i32, i32
  }
  func.func @transform_3(%arg0: i32) -> (i32, i32) {
    %c0_i32 = arith.constant 0 : i32
    %c0_i32_0 = arith.constant 0 : i32
    %c0_i32_1 = arith.constant 0 : i32
    return %c0_i32, %c0_i32_0 : i32, i32
  }
  func.func @transform_4(%arg0: i32) -> (i32, i32) {
    %c0_i32 = arith.constant 0 : i32
    %c0_i32_0 = arith.constant 0 : i32
    %c0_i32_1 = arith.constant 0 : i32
    return %c0_i32, %c0_i32_0 : i32, i32
  }
  func.func @transform_5(%arg0: i32) -> (i32, i32) {
    %c0_i32 = arith.constant 0 : i32
    %c0_i32_0 = arith.constant 0 : i32
    %c0_i32_1 = arith.constant 0 : i32
    return %c0_i32, %c0_i32_0 : i32, i32
  }
  func.func @transform_6(%arg0: i32) -> (i32, i32) {
    %c0_i32 = arith.constant 0 : i32
    %c0_i32_0 = arith.constant 0 : i32
    %c0_i32_1 = arith.constant 0 : i32
    return %c0_i32, %c0_i32_0 : i32, i32
  }
  func.func @transform_7(%arg0: i32) -> (i32, i32) {
    %c0_i32 = arith.constant 0 : i32
    %c0_i32_0 = arith.constant 0 : i32
    return %arg0, %c0_i32 : i32, i32
  }
}

module attributes {stable_mosaic.version = 11 : i64} {
  func.func @_attn_block_kernel(%arg0: i32, %arg1: memref<1x8x32xf32, #tpu.memory_space<vmem>>, %arg2: memref<1x8x32xf32, #tpu.memory_space<vmem>>, %arg3: memref<1x8x8xf32, #tpu.memory_space<vmem>>, %arg4: memref<32x32xbf16, #tpu.memory_space<vmem>>, %arg5: memref<1x32xf32, #tpu.memory_space<vmem>>, %arg6: memref<32x64xbf16, #tpu.memory_space<vmem>>, %arg7: memref<1x64xf32, #tpu.memory_space<vmem>>, %arg8: memref<32x32xbf16, #tpu.memory_space<vmem>>, %arg9: memref<1x32xf32, #tpu.memory_space<vmem>>, %arg10: memref<1x32xf32, #tpu.memory_space<vmem>>, %arg11: memref<1x32xf32, #tpu.memory_space<vmem>>, %arg12: memref<1x8x32xf32, #tpu.memory_space<vmem>>) attributes {dimension_semantics = [#tpu.dimension_semantics<parallel>], iteration_bounds = array<i64: 2>, scalar_prefetch = 0 : i64, scratch_operands = 0 : i64, tpu.core_type = #tpu.core_type<tc>, window_params = [{transform_indices = @transform_0, window_bounds = array<i64: 1, 8, 32>}, {transform_indices = @transform_1, window_bounds = array<i64: 1, 8, 32>}, {transform_indices = @transform_2, window_bounds = array<i64: 1, 8, 8>}, {pipeline_mode = #tpu.pipeline_mode<synchronous>, transform_indices = @transform_3, window_bounds = array<i64: 32, 32>}, {pipeline_mode = #tpu.pipeline_mode<synchronous>, transform_indices = @transform_4, window_bounds = array<i64: 1, 32>}, {pipeline_mode = #tpu.pipeline_mode<synchronous>, transform_indices = @transform_5, window_bounds = array<i64: 32, 64>}, {pipeline_mode = #tpu.pipeline_mode<synchronous>, transform_indices = @transform_6, window_bounds = array<i64: 1, 64>}, {pipeline_mode = #tpu.pipeline_mode<synchronous>, transform_indices = @transform_7, window_bounds = array<i64: 32, 32>}, {pipeline_mode = #tpu.pipeline_mode<synchronous>, transform_indices = @transform_8, window_bounds = array<i64: 1, 32>}, {pipeline_mode = #tpu.pipeline_mode<synchronous>, transform_indices = @transform_9, window_bounds = array<i64: 1, 32>}, {pipeline_mode = #tpu.pipeline_mode<synchronous>, transform_indices = @transform_10, window_bounds = array<i64: 1, 32>}, {transform_indices = @transform_11, window_bounds = array<i64: 1, 8, 32>}]} {
    %c0 = arith.constant 0 : index
    %c0_0 = arith.constant 0 : index
    %c0_1 = arith.constant 0 : index
    %0 = vector.load %arg1[%c0, %c0_0, %c0_1] : memref<1x8x32xf32, #tpu.memory_space<vmem>>, vector<1x8x32xf32>
    %1 = vector.shape_cast %0 : vector<1x8x32xf32> to vector<8x32xf32>
    %c0_2 = arith.constant 0 : index
    %c0_3 = arith.constant 0 : index
    %c0_4 = arith.constant 0 : index
    %2 = vector.load %arg2[%c0_2, %c0_3, %c0_4] : memref<1x8x32xf32, #tpu.memory_space<vmem>>, vector<1x8x32xf32>
    %3 = vector.shape_cast %2 : vector<1x8x32xf32> to vector<8x32xf32>
    %c0_5 = arith.constant 0 : index
    %c0_6 = arith.constant 0 : index
    %c0_7 = arith.constant 0 : index
    %4 = vector.load %arg3[%c0_5, %c0_6, %c0_7] : memref<1x8x8xf32, #tpu.memory_space<vmem>>, vector<1x8x8xf32>
    %5 = vector.shape_cast %4 : vector<1x8x8xf32> to vector<8x8xf32>
    %6 = arith.truncf %1 : vector<8x32xf32> to vector<8x32xbf16>
    %7 = arith.truncf %3 : vector<8x32xf32> to vector<8x32xbf16>
    %c0_8 = arith.constant 0 : index
    %c0_9 = arith.constant 0 : index
    %8 = vector.load %arg4[%c0_8, %c0_9] : memref<32x32xbf16, #tpu.memory_space<vmem>>, vector<32x32xbf16>
    %cst = arith.constant dense<0.000000e+00> : vector<8x32xf32>
    %9 = tpu.matmul %6, %8, %cst {dimension_numbers = #tpu.dot_dimension_numbers<[1], [0], [0], [1], [0, 0, 1, 1], [], []>} : vector<8x32xbf16>, vector<32x32xbf16>, vector<8x32xf32> -> vector<8x32xf32>
    %c0_10 = arith.constant 0 : index
    %c0_11 = arith.constant 0 : index
    %10 = vector.load %arg5[%c0_10, %c0_11] : memref<1x32xf32, #tpu.memory_space<vmem>>, vector<1x32xf32>
    %11 = vector.broadcast %10 : vector<1x32xf32> to vector<8x32xf32>
    %12 = arith.addf %9, %11 : vector<8x32xf32>
    %c0_12 = arith.constant 0 : index
    %c0_13 = arith.constant 0 : index
    %13 = vector.load %arg6[%c0_12, %c0_13] : memref<32x64xbf16, #tpu.memory_space<vmem>>, vector<32x64xbf16>
    %cst_14 = arith.constant dense<0.000000e+00> : vector<8x64xf32>
    %14 = tpu.matmul %7, %13, %cst_14 {dimension_numbers = #tpu.dot_dimension_numbers<[1], [0], [0], [1], [0, 0, 1, 1], [], []>} : vector<8x32xbf16>, vector<32x64xbf16>, vector<8x64xf32> -> vector<8x64xf32>
    %c0_15 = arith.constant 0 : index
    %c0_16 = arith.constant 0 : index
    %15 = vector.load %arg7[%c0_15, %c0_16] : memref<1x64xf32, #tpu.memory_space<vmem>>, vector<1x64xf32>
    %16 = vector.broadcast %15 : vector<1x64xf32> to vector<8x64xf32>
    %17 = arith.addf %14, %16 : vector<8x64xf32>
    %18 = vector.extract_strided_slice %17 {offsets = [0, 0], sizes = [8, 32], strides = [1, 1]} : vector<8x64xf32> to vector<8x32xf32>
    %19 = vector.extract_strided_slice %17 {offsets = [0, 32], sizes = [8, 32], strides = [1, 1]} : vector<8x64xf32> to vector<8x32xf32>
    %20 = vector.extract_strided_slice %12 {offsets = [0, 0], sizes = [8, 8], strides = [1, 1]} : vector<8x32xf32> to vector<8x8xf32>
    %21 = arith.truncf %20 : vector<8x8xf32> to vector<8x8xbf16>
    %22 = vector.extract_strided_slice %18 {offsets = [0, 0], sizes = [8, 8], strides = [1, 1]} : vector<8x32xf32> to vector<8x8xf32>
    %23 = arith.truncf %22 : vector<8x8xf32> to vector<8x8xbf16>
    %24 = vector.extract_strided_slice %19 {offsets = [0, 0], sizes = [8, 8], strides = [1, 1]} : vector<8x32xf32> to vector<8x8xf32>
    %25 = arith.truncf %24 : vector<8x8xf32> to vector<8x8xbf16>
    %cst_17 = arith.constant dense<0.000000e+00> : vector<8x8xf32>
    %26 = tpu.matmul %21, %23, %cst_17 {dimension_numbers = #tpu.dot_dimension_numbers<[1], [1], [0], [0], [0, 0, 1, 0], [], []>} : vector<8x8xbf16>, vector<8x8xbf16>, vector<8x8xf32> -> vector<8x8xf32>
    %cst_18 = arith.constant 0.353553385 : f32
    %27 = vector.broadcast %cst_18 : f32 to vector<8x8xf32>
    %28 = arith.mulf %26, %27 : vector<8x8xf32>
    %29 = arith.addf %28, %5 : vector<8x8xf32>
    %cst_19 = arith.constant dense<0xFF800000> : vector<8xf32>
    %30 = vector.multi_reduction <maximumf>, %29, %cst_19 [1] : vector<8x8xf32> to vector<8xf32>
    %31 = vector.shape_cast %30 : vector<8xf32> to vector<8x1xf32>
    %32 = vector.broadcast %31 : vector<8x1xf32> to vector<8x8xf32>
    %33 = arith.subf %29, %32 : vector<8x8xf32>
    %34 = math.exp %33 : vector<8x8xf32>
    %cst_20 = arith.constant dense<0.000000e+00> : vector<8xf32>
    %35 = vector.multi_reduction <add>, %34, %cst_20 [1] : vector<8x8xf32> to vector<8xf32>
    %36 = vector.shape_cast %35 : vector<8xf32> to vector<8x1xf32>
    %37 = tpu.reciprocal %36 {approx = true} : vector<8x1xf32> -> vector<8x1xf32>
    %38 = vector.broadcast %37 : vector<8x1xf32> to vector<8x8xf32>
    %39 = arith.mulf %34, %38 : vector<8x8xf32>
    %40 = arith.truncf %39 : vector<8x8xf32> to vector<8x8xbf16>
    %cst_21 = arith.constant dense<0.000000e+00> : vector<8x8xf32>
    %41 = tpu.matmul %40, %25, %cst_21 {dimension_numbers = #tpu.dot_dimension_numbers<[1], [0], [0], [1], [0, 0, 1, 1], [], []>} : vector<8x8xbf16>, vector<8x8xbf16>, vector<8x8xf32> -> vector<8x8xf32>
    %42 = vector.extract_strided_slice %12 {offsets = [0, 8], sizes = [8, 8], strides = [1, 1]} : vector<8x32xf32> to vector<8x8xf32>
    %43 = arith.truncf %42 : vector<8x8xf32> to vector<8x8xbf16>
    %44 = vector.extract_strided_slice %18 {offsets = [0, 8], sizes = [8, 8], strides = [1, 1]} : vector<8x32xf32> to vector<8x8xf32>
    %45 = arith.truncf %44 : vector<8x8xf32> to vector<8x8xbf16>
    %46 = vector.extract_strided_slice %19 {offsets = [0, 8], sizes = [8, 8], strides = [1, 1]} : vector<8x32xf32> to vector<8x8xf32>
    %47 = arith.truncf %46 : vector<8x8xf32> to vector<8x8xbf16>
    %cst_22 = arith.constant dense<0.000000e+00> : vector<8x8xf32>
    %48 = tpu.matmul %43, %45, %cst_22 {dimension_numbers = #tpu.dot_dimension_numbers<[1], [1], [0], [0], [0, 0, 1, 0], [], []>} : vector<8x8xbf16>, vector<8x8xbf16>, vector<8x8xf32> -> vector<8x8xf32>
    %cst_23 = arith.constant 0.353553385 : f32
    %49 = vector.broadcast %cst_23 : f32 to vector<8x8xf32>
    %50 = arith.mulf %48, %49 : vector<8x8xf32>
    %51 = arith.addf %50, %5 : vector<8x8xf32>
    %cst_24 = arith.constant dense<0xFF800000> : vector<8xf32>
    %52 = vector.multi_reduction <maximumf>, %51, %cst_24 [1] : vector<8x8xf32> to vector<8xf32>
    %53 = vector.shape_cast %52 : vector<8xf32> to vector<8x1xf32>
    %54 = vector.broadcast %53 : vector<8x1xf32> to vector<8x8xf32>
    %55 = arith.subf %51, %54 : vector<8x8xf32>
    %56 = math.exp %55 : vector<8x8xf32>
    %cst_25 = arith.constant dense<0.000000e+00> : vector<8xf32>
    %57 = vector.multi_reduction <add>, %56, %cst_25 [1] : vector<8x8xf32> to vector<8xf32>
    %58 = vector.shape_cast %57 : vector<8xf32> to vector<8x1xf32>
    %59 = tpu.reciprocal %58 {approx = true} : vector<8x1xf32> -> vector<8x1xf32>
    %60 = vector.broadcast %59 : vector<8x1xf32> to vector<8x8xf32>
    %61 = arith.mulf %56, %60 : vector<8x8xf32>
    %62 = arith.truncf %61 : vector<8x8xf32> to vector<8x8xbf16>
    %cst_26 = arith.constant dense<0.000000e+00> : vector<8x8xf32>
    %63 = tpu.matmul %62, %47, %cst_26 {dimension_numbers = #tpu.dot_dimension_numbers<[1], [0], [0], [1], [0, 0, 1, 1], [], []>} : vector<8x8xbf16>, vector<8x8xbf16>, vector<8x8xf32> -> vector<8x8xf32>
    %64 = vector.extract_strided_slice %12 {offsets = [0, 16], sizes = [8, 8], strides = [1, 1]} : vector<8x32xf32> to vector<8x8xf32>
    %65 = arith.truncf %64 : vector<8x8xf32> to vector<8x8xbf16>
    %66 = vector.extract_strided_slice %18 {offsets = [0, 16], sizes = [8, 8], strides = [1, 1]} : vector<8x32xf32> to vector<8x8xf32>
    %67 = arith.truncf %66 : vector<8x8xf32> to vector<8x8xbf16>
    %68 = vector.extract_strided_slice %19 {offsets = [0, 16], sizes = [8, 8], strides = [1, 1]} : vector<8x32xf32> to vector<8x8xf32>
    %69 = arith.truncf %68 : vector<8x8xf32> to vector<8x8xbf16>
    %cst_27 = arith.constant dense<0.000000e+00> : vector<8x8xf32>
    %70 = tpu.matmul %65, %67, %cst_27 {dimension_numbers = #tpu.dot_dimension_numbers<[1], [1], [0], [0], [0, 0, 1, 0], [], []>} : vector<8x8xbf16>, vector<8x8xbf16>, vector<8x8xf32> -> vector<8x8xf32>
    %cst_28 = arith.constant 0.353553385 : f32
    %71 = vector.broadcast %cst_28 : f32 to vector<8x8xf32>
    %72 = arith.mulf %70, %71 : vector<8x8xf32>
    %73 = arith.addf %72, %5 : vector<8x8xf32>
    %cst_29 = arith.constant dense<0xFF800000> : vector<8xf32>
    %74 = vector.multi_reduction <maximumf>, %73, %cst_29 [1] : vector<8x8xf32> to vector<8xf32>
    %75 = vector.shape_cast %74 : vector<8xf32> to vector<8x1xf32>
    %76 = vector.broadcast %75 : vector<8x1xf32> to vector<8x8xf32>
    %77 = arith.subf %73, %76 : vector<8x8xf32>
    %78 = math.exp %77 : vector<8x8xf32>
    %cst_30 = arith.constant dense<0.000000e+00> : vector<8xf32>
    %79 = vector.multi_reduction <add>, %78, %cst_30 [1] : vector<8x8xf32> to vector<8xf32>
    %80 = vector.shape_cast %79 : vector<8xf32> to vector<8x1xf32>
    %81 = tpu.reciprocal %80 {approx = true} : vector<8x1xf32> -> vector<8x1xf32>
    %82 = vector.broadcast %81 : vector<8x1xf32> to vector<8x8xf32>
    %83 = arith.mulf %78, %82 : vector<8x8xf32>
    %84 = arith.truncf %83 : vector<8x8xf32> to vector<8x8xbf16>
    %cst_31 = arith.constant dense<0.000000e+00> : vector<8x8xf32>
    %85 = tpu.matmul %84, %69, %cst_31 {dimension_numbers = #tpu.dot_dimension_numbers<[1], [0], [0], [1], [0, 0, 1, 1], [], []>} : vector<8x8xbf16>, vector<8x8xbf16>, vector<8x8xf32> -> vector<8x8xf32>
    %86 = vector.extract_strided_slice %12 {offsets = [0, 24], sizes = [8, 8], strides = [1, 1]} : vector<8x32xf32> to vector<8x8xf32>
    %87 = arith.truncf %86 : vector<8x8xf32> to vector<8x8xbf16>
    %88 = vector.extract_strided_slice %18 {offsets = [0, 24], sizes = [8, 8], strides = [1, 1]} : vector<8x32xf32> to vector<8x8xf32>
    %89 = arith.truncf %88 : vector<8x8xf32> to vector<8x8xbf16>
    %90 = vector.extract_strided_slice %19 {offsets = [0, 24], sizes = [8, 8], strides = [1, 1]} : vector<8x32xf32> to vector<8x8xf32>
    %91 = arith.truncf %90 : vector<8x8xf32> to vector<8x8xbf16>
    %cst_32 = arith.constant dense<0.000000e+00> : vector<8x8xf32>
    %92 = tpu.matmul %87, %89, %cst_32 {dimension_numbers = #tpu.dot_dimension_numbers<[1], [1], [0], [0], [0, 0, 1, 0], [], []>} : vector<8x8xbf16>, vector<8x8xbf16>, vector<8x8xf32> -> vector<8x8xf32>
    %cst_33 = arith.constant 0.353553385 : f32
    %93 = vector.broadcast %cst_33 : f32 to vector<8x8xf32>
    %94 = arith.mulf %92, %93 : vector<8x8xf32>
    %95 = arith.addf %94, %5 : vector<8x8xf32>
    %cst_34 = arith.constant dense<0xFF800000> : vector<8xf32>
    %96 = vector.multi_reduction <maximumf>, %95, %cst_34 [1] : vector<8x8xf32> to vector<8xf32>
    %97 = vector.shape_cast %96 : vector<8xf32> to vector<8x1xf32>
    %98 = vector.broadcast %97 : vector<8x1xf32> to vector<8x8xf32>
    %99 = arith.subf %95, %98 : vector<8x8xf32>
    %100 = math.exp %99 : vector<8x8xf32>
    %cst_35 = arith.constant dense<0.000000e+00> : vector<8xf32>
    %101 = vector.multi_reduction <add>, %100, %cst_35 [1] : vector<8x8xf32> to vector<8xf32>
    %102 = vector.shape_cast %101 : vector<8xf32> to vector<8x1xf32>
    %103 = tpu.reciprocal %102 {approx = true} : vector<8x1xf32> -> vector<8x1xf32>
    %104 = vector.broadcast %103 : vector<8x1xf32> to vector<8x8xf32>
    %105 = arith.mulf %100, %104 : vector<8x8xf32>
    %106 = arith.truncf %105 : vector<8x8xf32> to vector<8x8xbf16>
    %cst_36 = arith.constant dense<0.000000e+00> : vector<8x8xf32>
    %107 = tpu.matmul %106, %91, %cst_36 {dimension_numbers = #tpu.dot_dimension_numbers<[1], [0], [0], [1], [0, 0, 1, 1], [], []>} : vector<8x8xbf16>, vector<8x8xbf16>, vector<8x8xf32> -> vector<8x8xf32>
    %108 = tpu.concatenate %41, %63, %85, %107 in 1 : vector<8x8xf32>, vector<8x8xf32>, vector<8x8xf32>, vector<8x8xf32> -> vector<8x32xf32>
    %109 = arith.truncf %108 : vector<8x32xf32> to vector<8x32xbf16>
    %c0_37 = arith.constant 0 : index
    %c0_38 = arith.constant 0 : index
    %110 = vector.load %arg8[%c0_37, %c0_38] : memref<32x32xbf16, #tpu.memory_space<vmem>>, vector<32x32xbf16>
    %cst_39 = arith.constant dense<0.000000e+00> : vector<8x32xf32>
    %111 = tpu.matmul %109, %110, %cst_39 {dimension_numbers = #tpu.dot_dimension_numbers<[1], [0], [0], [1], [0, 0, 1, 1], [], []>} : vector<8x32xbf16>, vector<32x32xbf16>, vector<8x32xf32> -> vector<8x32xf32>
    %c0_40 = arith.constant 0 : index
    %c0_41 = arith.constant 0 : index
    %112 = vector.load %arg9[%c0_40, %c0_41] : memref<1x32xf32, #tpu.memory_space<vmem>>, vector<1x32xf32>
    %113 = vector.broadcast %112 : vector<1x32xf32> to vector<8x32xf32>
    %114 = arith.addf %111, %113 : vector<8x32xf32>
    %115 = arith.addf %114, %1 : vector<8x32xf32>
    %c0_42 = arith.constant 0 : index
    %c0_43 = arith.constant 0 : index
    %116 = vector.load %arg10[%c0_42, %c0_43] : memref<1x32xf32, #tpu.memory_space<vmem>>, vector<1x32xf32>
    %c0_44 = arith.constant 0 : index
    %c0_45 = arith.constant 0 : index
    %117 = vector.load %arg11[%c0_44, %c0_45] : memref<1x32xf32, #tpu.memory_space<vmem>>, vector<1x32xf32>
    %cst_46 = arith.constant dense<0.000000e+00> : vector<8xf32>
    %118 = vector.multi_reduction <add>, %115, %cst_46 [1] : vector<8x32xf32> to vector<8xf32>
    %119 = vector.shape_cast %118 : vector<8xf32> to vector<8x1xf32>
    %cst_47 = arith.constant 3.200000e+01 : f32
    %120 = vector.broadcast %cst_47 : f32 to vector<8x1xf32>
    %121 = arith.divf %119, %120 : vector<8x1xf32>
    %122 = vector.broadcast %121 : vector<8x1xf32> to vector<8x32xf32>
    %123 = arith.subf %115, %122 : vector<8x32xf32>
    %124 = arith.mulf %123, %123 : vector<8x32xf32>
    %cst_48 = arith.constant dense<0.000000e+00> : vector<8xf32>
    %125 = vector.multi_reduction <add>, %124, %cst_48 [1] : vector<8x32xf32> to vector<8xf32>
    %126 = vector.shape_cast %125 : vector<8xf32> to vector<8x1xf32>
    %cst_49 = arith.constant 3.200000e+01 : f32
    %127 = vector.broadcast %cst_49 : f32 to vector<8x1xf32>
    %128 = arith.divf %126, %127 : vector<8x1xf32>
    %129 = vector.broadcast %121 : vector<8x1xf32> to vector<8x32xf32>
    %130 = arith.subf %115, %129 : vector<8x32xf32>
    %cst_50 = arith.constant 9.99999974E-6 : f32
    %131 = vector.broadcast %cst_50 : f32 to vector<8x1xf32>
    %132 = arith.addf %128, %131 : vector<8x1xf32>
    %133 = math.rsqrt %132 : vector<8x1xf32>
    %134 = vector.broadcast %133 : vector<8x1xf32> to vector<8x32xf32>
    %135 = arith.mulf %130, %134 : vector<8x32xf32>
    %136 = vector.broadcast %116 : vector<1x32xf32> to vector<8x32xf32>
    %137 = arith.mulf %135, %136 : vector<8x32xf32>
    %138 = vector.broadcast %117 : vector<1x32xf32> to vector<8x32xf32>
    %139 = arith.addf %137, %138 : vector<8x32xf32>
    %140 = vector.shape_cast %139 : vector<8x32xf32> to vector<1x8x32xf32>
    %c0_51 = arith.constant 0 : index
    %c0_52 = arith.constant 0 : index
    %c0_53 = arith.constant 0 : index
    %141 = vector.load %arg12[%c0_51, %c0_52, %c0_53] : memref<1x8x32xf32, #tpu.memory_space<vmem>>, vector<1x8x32xf32>
    tpu.vector_store %arg12[%c0_51, %c0_52, %c0_53], %140 {strides = array<i32>} : memref<1x8x32xf32, #tpu.memory_space<vmem>>, vector<1x8x32xf32>,
    return
  }
  func.func @transform_0(%arg0: i32) -> (i32, i32, i32) {
    %c0_i32 = arith.constant 0 : i32
    %c0_i32_0 = arith.constant 0 : i32
    %c0_i32_1 = arith.constant 0 : i32
    return %arg0, %c0_i32, %c0_i32_0 : i32, i32, i32
  }
  func.func @transform_1(%arg0: i32) -> (i32, i32, i32) {
    %c0_i32 = arith.constant 0 : i32
    %c0_i32_0 = arith.constant 0 : i32
    %c0_i32_1 = arith.constant 0 : i32
    return %arg0, %c0_i32, %c0_i32_0 : i32, i32, i32
  }
  func.func @transform_2(%arg0: i32) -> (i32, i32, i32) {
    %c0_i32 = arith.constant 0 : i32
    %c0_i32_0 = arith.constant 0 : i32
    %c0_i32_1 = arith.constant 0 : i32
    return %arg0, %c0_i32, %c0_i32_0 : i32, i32, i32
  }
  func.func @transform_3(%arg0: i32) -> (i32, i32) {
    %c0_i32 = arith.constant 0 : i32
    %c0_i32_0 = arith.constant 0 : i32
    %c0_i32_1 = arith.constant 0 : i32
    return %c0_i32, %c0_i32_0 : i32, i32
  }
  func.func @transform_4(%arg0: i32) -> (i32, i32) {
    %c0_i32 = arith.constant 0 : i32
    %c0_i32_0 = arith.constant 0 : i32
    %c0_i32_1 = arith.constant 0 : i32
    return %c0_i32, %c0_i32_0 : i32, i32
  }
  func.func @transform_5(%arg0: i32) -> (i32, i32) {
    %c0_i32 = arith.constant 0 : i32
    %c0_i32_0 = arith.constant 0 : i32
    %c0_i32_1 = arith.constant 0 : i32
    return %c0_i32, %c0_i32_0 : i32, i32
  }
  func.func @transform_6(%arg0: i32) -> (i32, i32) {
    %c0_i32 = arith.constant 0 : i32
    %c0_i32_0 = arith.constant 0 : i32
    %c0_i32_1 = arith.constant 0 : i32
    return %c0_i32, %c0_i32_0 : i32, i32
  }
  func.func @transform_7(%arg0: i32) -> (i32, i32) {
    %c0_i32 = arith.constant 0 : i32
    %c0_i32_0 = arith.constant 0 : i32
    %c0_i32_1 = arith.constant 0 : i32
    return %c0_i32, %c0_i32_0 : i32, i32
  }
  func.func @transform_8(%arg0: i32) -> (i32, i32) {
    %c0_i32 = arith.constant 0 : i32
    %c0_i32_0 = arith.constant 0 : i32
    %c0_i32_1 = arith.constant 0 : i32
    return %c0_i32, %c0_i32_0 : i32, i32
  }
  func.func @transform_9(%arg0: i32) -> (i32, i32) {
    %c0_i32 = arith.constant 0 : i32
    %c0_i32_0 = arith.constant 0 : i32
    %c0_i32_1 = arith.constant 0 : i32
    return %c0_i32, %c0_i32_0 : i32, i32
  }
  func.func @transform_10(%arg0: i32) -> (i32, i32) {
    %c0_i32 = arith.constant 0 : i32
    %c0_i32_0 = arith.constant 0 : i32
    %c0_i32_1 = arith.constant 0 : i32
    return %c0_i32, %c0_i32_0 : i32, i32
  }
  func.func @transform_11(%arg0: i32) -> (i32, i32, i32) {
    %c0_i32 = arith.constant 0 : i32
    %c0_i32_0 = arith.constant 0 : i32
    %c0_i32_1 = arith.constant 0 : i32
    return %arg0, %c0_i32, %c0_i32_0 : i32, i32, i32
  }
}

</mosaic_0001>

<llo_original>
// kernel: transformer_forward.21
$region0: #{transformer_forward.21}
  #allocation0 [shape = 'u32[]', space=smem, size = 0x4, offset = 0x4, fixed_abs, tag = 'smem constant byte address 0x4 - core index']
  #allocation1 [shape = 'u32[144,128]{1,0:T(1,128)}', space=vmem, size = 0x12000, scoped, tag = 'internal scratch']
  %s0 = inlined_call_operand.vmem [shape: f32[16,32], index: 0, kind: input, shape index: {}]
  %s1 = inlined_call_operand.vmem [shape: bf16[32,16], index: 1, kind: input, shape index: {}]
  %s2 = inlined_call_operand.vmem [shape: f32[1,16], index: 2, kind: input, shape index: {}]
  %s3 = inlined_call_operand.hbm [shape: f32[16,16], index: 3, kind: output, shape index: {}]
  %s4 = sld [smem:[#allocation0]]
  $region22: #{transformer_forward.21} parent=0
    _
  %s6 = ssub.s32 1, %s4
  %s7 = scalar_select 0, %s6, %s4
  $region1: #{transformer_forward.21} parent=0
    #allocation2 [shape = 'u8[8192]{0}', space=vmem, size = 0x2000, scoped, tag = 'output window, operand 0, single buffered']
    #allocation3 [shape = 's32[1]{0}', space=sflag, size = 0x4, scoped, tag = 'scoped memory for transformer_forward.21']
    %8 = vsyncpa [#allocation3], 0
    // Predicated region
    $region2: #{transformer_forward.21} parent=1 // pred_check
      _
    $region3: #{transformer_forward.21} parent=1 // pred_check_branch
      %10 = sbr.rel (0) target = $region5
    $region4: #{transformer_forward.21} parent=1 // pred_region
      _
    $region5: #{transformer_forward.21} parent=1 // pred_fallthru
      _
    // Predicated region
    $region6: #{transformer_forward.21} parent=1 // pred_check
      _
    $region7: #{transformer_forward.21} parent=1 // pred_check_branch
      %12 = sbr.rel (0) target = $region9
    $region8: #{transformer_forward.21} parent=1 // pred_region
      _
    $region9: #{transformer_forward.21} parent=1 // pred_fallthru
      _
    // Predicated region
    $region10: #{transformer_forward.21} parent=1 // pred_check
      _
    $region11: #{transformer_forward.21} parent=1 // pred_check_branch
      %14 = sbr.rel (0) target = $region13
    $region12: #{transformer_forward.21} parent=1 // pred_region
      _
    $region13: #{transformer_forward.21} parent=1 // pred_fallthru
      _
    %v16 = vld [vmem:[%s0] sm:$0xff]
    %v17 = vld [vmem:[%s0 + $0x8] sm:$0xff]
    %v18 = vpack.c.bf16 %v17, %v16
    %v19 = vld [vmem:[%s1] sm:$0xf]
    %v20 = vld [vmem:[%s1 + $0x4] sm:$0xf]
    %v21 = vld [vmem:[%s1 + $0x8] sm:$0xf]
    %v22 = vld [vmem:[%s1 + $0xc] sm:$0xf]
    %v23 = vld [vmem:[%s2] sm:$0x1]
    %v25 = vlaneseq
    %v26 = vshrl.u32 %v25, 7
    %v27 = vsub.s32 0, %v26
    %v28 = vrot.slane %v23, %v27
    %v34 = vunpack.c.l.b16 %v19
    %v35 = vunpack.c.l.b16 %v20
    %v36 = vunpack.c.l.b16 %v21
    %v37 = vunpack.c.l.b16 %v22
    %v38 = vpack.c.b16 %v35, %v34
    %v39 = vpack.c.b16 %v37, %v36
    %vm42 = vcmask 261120
    %v44 = vsel %vm42, %v18, 0
    %46 = vmatprep.subr.bf16.mxu0 0
    %47 = vmatpush1.bf16.msra.mxu0 %v38
    %48 = vmatprep.subr.bf16.mxu0 0
    %49 = vmatpush1.bf16.msra.mxu0 %v39
    %50 = vmatprep.subr.bf16.mxu0 0
    %51 = vmatpush1.bf16.msra.mxu0 0
    %52 = vmatprep.subr.bf16.mxu0 0
    %53 = vmatpush1.bf16.msra.mxu0 0
    %54 = vmatprep.subr.bf16.mxu0 0
    %55 = vmatpush1.bf16.msra.mxu0 0
    %56 = vmatprep.subr.bf16.mxu0 0
    %57 = vmatpush1.bf16.msra.mxu0 0
    %58 = vmatprep.subr.bf16.mxu0 0
    %59 = vmatpush1.bf16.msra.mxu0 0
    %60 = vmatprep.subr.bf16.mxu0 0
    %61 = vmatpush1.bf16.msra.mxu0 0
    %62 = vmatprep.subr.bf16.mxu0 0
    %63 = vmatpush1.bf16.msra.mxu0 0
    %64 = vmatprep.subr.bf16.mxu0 0
    %65 = vmatpush1.bf16.msra.mxu0 0
    %66 = vmatprep.subr.bf16.mxu0 0
    %67 = vmatpush1.bf16.msra.mxu0 0
    %68 = vmatprep.subr.bf16.mxu0 0
    %69 = vmatpush1.bf16.msra.mxu0 0
    %70 = vmatprep.subr.bf16.mxu0 0
    %71 = vmatpush1.bf16.msra.mxu0 0
    %72 = vmatprep.subr.bf16.mxu0 0
    %73 = vmatpush1.bf16.msra.mxu0 0
    %74 = vmatprep.subr.bf16.mxu0 0
    %75 = vmatpush1.bf16.msra.mxu0 0
    %76 = vmatprep.subr.bf16.mxu0 0
    %77 = vmatpush1.bf16.msra.mxu0 0
    %78 = vmatprep.mubr.bf16.mxu0 0
    %79 = vmatmul.mubr.bf16.gmra.mrb[0].mxu0 %v44
    %v80 = vpop.f32.mrb[0].mxu0
    %v81 = vadd.f32 %v28, %v80
    %v82 = vpop.f32.mrb[0].mxu0
    %v83 = vpop.f32.mrb[0].mxu0
    %v84 = vadd.f32 %v28, %v83
    %v85 = vpop.f32.mrb[0].mxu0
    %86 = vdwg.mxu0
    %vm87 = vcmask 130048
    %v88 = vsel %vm87, %v81, -inf
    %89 = vmax.xlane.f32.xlu0 %v88
    %v90 = vpop.xlane.xlu0 %89
    %v91 = vsel %vm87, %v84, -inf
    %92 = vmax.xlane.f32.xlu0 %v91
    %v93 = vpop.xlane.xlu0 %92
    %v94 = vsub.f32 %v81, %v90
    %v95 = vsub.f32 %v84, %v93
    %v96 = vmul.f32 %v94, 1.442695
    %v97 = vpow.pop %v96
    %v98 = vmul.f32 %v95, 1.442695
    %v99 = vpow.pop %v98
    %v100 = vsel %vm87, %v97, 0.0
    %101 = vadd.xlane.f32.xlu0 %v100
    %v102 = vpop.xlane.xlu0 %101
    %v103 = vsel %vm87, %v99, 0.0
    %104 = vadd.xlane.f32.xlu0 %v103
    %v105 = vpop.xlane.xlu0 %104
    %v106 = vlog2.pop %v102
    %v107 = vmul.f32 %v106, 0.6931472
    %v108 = vlog2.pop %v105
    %v109 = vmul.f32 %v108, 0.6931472
    %v110 = vsub.f32 %v94, %v107
    %v111 = vsub.f32 %v95, %v109
    %112 = vst.msk [vmem:[#allocation2] sm:$0xff] %vm87, %v110
    %113 = vst.msk [vmem:[#allocation2 + $0x8] sm:$0xff] %vm87, %v111
    // Predicated region
    $region14: #{transformer_forward.21} parent=1 // pred_check
      _
    $region15: #{transformer_forward.21} parent=1 // pred_check_branch
      %115 = sbr.rel (0) target = $region17
    $region16: #{transformer_forward.21} parent=1 // pred_region
      %s117 = ssub.s32 256, 256
      %118 = vsyncadd [#allocation3], %s117
      %s119 = sshll.u32 [#allocation2], 4
      %s120 = int_to_ptr.vmem [resolvable:$true] %s119
      %125 = dma.vmem_to_hbm [thread:$0]  %s120, 256, %s3, [#allocation3], 128, 128, 8
    $region17: #{transformer_forward.21} parent=1 // pred_fallthru
      _
    // Predicated region
    $region18: #{transformer_forward.21} parent=1 // pred_check
      _
    $region19: #{transformer_forward.21} parent=1 // pred_check_branch
      %127 = sbr.rel (0) target = $region21
    $region20: #{transformer_forward.21} parent=1 // pred_region
      %128 = dma.done [#allocation3], 256
    $region21: #{transformer_forward.21} parent=1 // pred_fallthru
      _
    %129 = vsyncpa [#allocation3], 1

// kernel: transformer_forward.11
$region0: #{transformer_forward.11}
  #allocation0 [shape = 'u32[]', space=smem, size = 0x4, offset = 0x4, fixed_abs, tag = 'smem constant byte address 0x4 - core index']
  #allocation1 [shape = 'u32[144,128]{1,0:T(1,128)}', space=vmem, size = 0x12000, scoped, tag = 'internal scratch']
  %s0 = inlined_call_operand.vmem [shape: f32[2,8,32], index: 0, kind: input, shape index: {}, may-alias: {0,1}]
  %s1 = inlined_call_operand.vmem [shape: f32[2,8,32], index: 1, kind: input, shape index: {}, may-alias: {0,1}]
  %s2 = inlined_call_operand.vmem [shape: f32[2,8,8], index: 2, kind: input, shape index: {}]
  %s3 = inlined_call_operand.vmem [shape: bf16[32,32], index: 3, kind: input, shape index: {}]
  %s4 = inlined_call_operand.vmem [shape: f32[1,32], index: 4, kind: input, shape index: {}]
  %s5 = inlined_call_operand.vmem [shape: bf16[32,64], index: 5, kind: input, shape index: {}]
  %s6 = inlined_call_operand.vmem [shape: f32[1,64], index: 6, kind: input, shape index: {}]
  %s7 = inlined_call_operand.vmem [shape: bf16[32,32], index: 7, kind: input, shape index: {}]
  %s8 = inlined_call_operand.vmem [shape: f32[1,32], index: 8, kind: input, shape index: {}]
  %s9 = inlined_call_operand.vmem [shape: f32[1,32], index: 9, kind: input, shape index: {}]
  %s10 = inlined_call_operand.vmem [shape: f32[1,32], index: 10, kind: input, shape index: {}]
  %s11 = inlined_call_operand.vmem [shape: f32[2,8,32], index: 11, kind: output, shape index: {}]
  %s12 = sld [smem:[#allocation0]]
  $region77: #{transformer_forward.11} parent=0
    _
  %s14 = ssub.s32 1, %s12
  %s15 = scalar_select 0, %s14, %s12
  loop: start=0, step=1, limit=4
  $region2: #{transformer_forward.11} parent=0 // loop_pre_header
    _
  $region3: #{transformer_forward.11} parent=0 // loop_header
    %s17 = sphi 0, %s21
    %p18 = scmp.ge.s32.totalorder %s17, 4
    %s27 = sphi 0, %s29
    %s30 = sphi 0, %s27
    %s31 = sphi 0, %s30
    %s47 = sphi 0, %s31
    %s53 = sphi 0, %s55
    %s56 = sphi 0, %s53
    %s57 = sphi 0, %s56
    %s73 = sphi 0, %s57
    %s79 = sphi 0, %s81
    %s82 = sphi 0, %s79
    %s83 = sphi 0, %s82
    %s99 = sphi 0, %s83
    %s103 = sphi 0, %s103
    %s105 = sphi 0, %s103
    %s106 = sphi 0, %s105
    %s120 = sphi 0, %s106
    %s124 = sphi 0, %s124
    %s126 = sphi 0, %s124
    %s127 = sphi 0, %s126
    %s141 = sphi 0, %s127
    %s145 = sphi 0, %s145
    %s147 = sphi 0, %s145
    %s148 = sphi 0, %s147
    %s162 = sphi 0, %s148
    %s166 = sphi 0, %s166
    %s168 = sphi 0, %s166
    %s169 = sphi 0, %s168
    %s183 = sphi 0, %s169
    %s187 = sphi 0, %s187
    %s189 = sphi 0, %s187
    %s190 = sphi 0, %s189
    %s204 = sphi 0, %s190
    %s208 = sphi 0, %s208
    %s210 = sphi 0, %s208
    %s211 = sphi 0, %s210
    %s225 = sphi 0, %s211
    %s229 = sphi 0, %s229
    %s231 = sphi 0, %s229
    %s232 = sphi 0, %s231
    %s246 = sphi 0, %s232
    %s250 = sphi 0, %s250
    %s252 = sphi 0, %s250
    %s253 = sphi 0, %s252
    %s267 = sphi 0, %s253
    %s273 = sphi 0, %s275
    %s276 = sphi 0, %s273
    %s277 = sphi 0, %s276
    %s293 = sphi 0, %s277
  $region4: #{transformer_forward.11} parent=0 // loop_header_branch
    %20 = sbr.rel (%p18) target = $region8
  $region5: #{transformer_forward.11} parent=0 // loop_body
    %s22 = ssub.s32 %s17, 1
    %s23 = ssub.s32 %s17, 2
    %s24 = sadd.s32 %s17, 1
    %s25 = ssub.s32 %s17, %s24
    %p26 = scmp.eq.s32.totalorder %s25, 0
    %s28 = sadd.s32 %s27, 1
    %s29 = scalar_select %p26, %s27, %s28
    %p32 = pneg %p26
    %p33 = scmp.eq.s32.totalorder %s17, 1
    %p34 = por %p32, %p33
    %p35 = scmp.ne.s32.totalorder %s27, %s30
    %p36 = scmp.eq.s32.totalorder %s17, 0
    %p37 = por %p35, %p36
    %p38 = scmp.ne.s32.totalorder %s27, %s30
    %p39 = scmp.eq.s32.totalorder %s22, 1
    %p40 = por %p38, %p39
    %p41 = scmp.ne.s32.totalorder %s30, %s31
    %p42 = scmp.eq.s32.totalorder %s22, 0
    %p43 = por %p41, %p42
    %p44 = scmp.ne.s32.totalorder %s30, %s31
    %p45 = scmp.eq.s32.totalorder %s23, 1
    %p46 = por %p44, %p45
    %p48 = scmp.ne.s32.totalorder %s31, %s47
    %p49 = scmp.eq.s32.totalorder %s23, 0
    %p50 = por %p48, %p49
    %s51 = ssub.s32 %s17, %s24
    %p52 = scmp.eq.s32.totalorder %s51, 0
    %s54 = sadd.s32 %s53, 1
    %s55 = scalar_select %p52, %s53, %s54
    %p58 = pneg %p52
    %p59 = scmp.eq.s32.totalorder %s17, 1
    %p60 = por %p58, %p59
    %p61 = scmp.ne.s32.totalorder %s53, %s56
    %p62 = scmp.eq.s32.totalorder %s17, 0
    %p63 = por %p61, %p62
    %p64 = scmp.ne.s32.totalorder %s53, %s56
    %p65 = scmp.eq.s32.totalorder %s22, 1
    %p66 = por %p64, %p65
    %p67 = scmp.ne.s32.totalorder %s56, %s57
    %p68 = scmp.eq.s32.totalorder %s22, 0
    %p69 = por %p67, %p68
    %p70 = scmp.ne.s32.totalorder %s56, %s57
    %p71 = scmp.eq.s32.totalorder %s23, 1
    %p72 = por %p70, %p71
    %p74 = scmp.ne.s32.totalorder %s57, %s73
    %p75 = scmp.eq.s32.totalorder %s23, 0
    %p76 = por %p74, %p75
    %s77 = ssub.s32 %s17, %s24
    %p78 = scmp.eq.s32.totalorder %s77, 0
    %s80 = sadd.s32 %s79, 1
    %s81 = scalar_select %p78, %s79, %s80
    %p84 = pneg %p78
    %p85 = scmp.eq.s32.totalorder %s17, 1
    %p86 = por %p84, %p85
    %p87 = scmp.ne.s32.totalorder %s79, %s82
    %p88 = scmp.eq.s32.totalorder %s17, 0
    %p89 = por %p87, %p88
    %p90 = scmp.ne.s32.totalorder %s79, %s82
    %p91 = scmp.eq.s32.totalorder %s22, 1
    %p92 = por %p90, %p91
    %p93 = scmp.ne.s32.totalorder %s82, %s83
    %p94 = scmp.eq.s32.totalorder %s22, 0
    %p95 = por %p93, %p94
    %p96 = scmp.ne.s32.totalorder %s82, %s83
    %p97 = scmp.eq.s32.totalorder %s23, 1
    %p98 = por %p96, %p97
    %p100 = scmp.ne.s32.totalorder %s83, %s99
    %p101 = scmp.eq.s32.totalorder %s23, 0
    %p102 = por %p100, %p101
    %s104 = sadd.s32 %s103, 1
    %p107 = scmp.eq.s32.totalorder %s17, 1
    %p108 = scmp.ne.s32.totalorder %s103, %s105
    %p109 = scmp.eq.s32.totalorder %s17, 0
    %p110 = por %p108, %p109
    %p111 = scmp.ne.s32.totalorder %s103, %s105
    %p112 = scmp.eq.s32.totalorder %s22, 1
    %p113 = por %p111, %p112
    %p114 = scmp.ne.s32.totalorder %s105, %s106
    %p115 = scmp.eq.s32.totalorder %s22, 0
    %p116 = por %p114, %p115
    %p117 = scmp.ne.s32.totalorder %s105, %s106
    %p118 = scmp.eq.s32.totalorder %s23, 1
    %p119 = por %p117, %p118
    %p121 = scmp.ne.s32.totalorder %s106, %s120
    %p122 = scmp.eq.s32.totalorder %s23, 0
    %p123 = por %p121, %p122
    %s125 = sadd.s32 %s124, 1
    %p128 = scmp.eq.s32.totalorder %s17, 1
    %p129 = scmp.ne.s32.totalorder %s124, %s126
    %p130 = scmp.eq.s32.totalorder %s17, 0
    %p131 = por %p129, %p130
    %p132 = scmp.ne.s32.totalorder %s124, %s126
    %p133 = scmp.eq.s32.totalorder %s22, 1
    %p134 = por %p132, %p133
    %p135 = scmp.ne.s32.totalorder %s126, %s127
    %p136 = scmp.eq.s32.totalorder %s22, 0
    %p137 = por %p135, %p136
    %p138 = scmp.ne.s32.totalorder %s126, %s127
    %p139 = scmp.eq.s32.totalorder %s23, 1
    %p140 = por %p138, %p139
    %p142 = scmp.ne.s32.totalorder %s127, %s141
    %p143 = scmp.eq.s32.totalorder %s23, 0
    %p144 = por %p142, %p143
    %s146 = sadd.s32 %s145, 1
    %p149 = scmp.eq.s32.totalorder %s17, 1
    %p150 = scmp.ne.s32.totalorder %s145, %s147
    %p151 = scmp.eq.s32.totalorder %s17, 0
    %p152 = por %p150, %p151
    %p153 = scmp.ne.s32.totalorder %s145, %s147
    %p154 = scmp.eq.s32.totalorder %s22, 1
    %p155 = por %p153, %p154
    %p156 = scmp.ne.s32.totalorder %s147, %s148
    %p157 = scmp.eq.s32.totalorder %s22, 0
    %p158 = por %p156, %p157
    %p159 = scmp.ne.s32.totalorder %s147, %s148
    %p160 = scmp.eq.s32.totalorder %s23, 1
    %p161 = por %p159, %p160
    %p163 = scmp.ne.s32.totalorder %s148, %s162
    %p164 = scmp.eq.s32.totalorder %s23, 0
    %p165 = por %p163, %p164
    %s167 = sadd.s32 %s166, 1
    %p170 = scmp.eq.s32.totalorder %s17, 1
    %p171 = scmp.ne.s32.totalorder %s166, %s168
    %p172 = scmp.eq.s32.totalorder %s17, 0
    %p173 = por %p171, %p172
    %p174 = scmp.ne.s32.totalorder %s166, %s168
    %p175 = scmp.eq.s32.totalorder %s22, 1
    %p176 = por %p174, %p175
    %p177 = scmp.ne.s32.totalorder %s168, %s169
    %p178 = scmp.eq.s32.totalorder %s22, 0
    %p179 = por %p177, %p178
    %p180 = scmp.ne.s32.totalorder %s168, %s169
    %p181 = scmp.eq.s32.totalorder %s23, 1
    %p182 = por %p180, %p181
    %p184 = scmp.ne.s32.totalorder %s169, %s183
    %p185 = scmp.eq.s32.totalorder %s23, 0
    %p186 = por %p184, %p185
    %s188 = sadd.s32 %s187, 1
    %p191 = scmp.eq.s32.totalorder %s17, 1
    %p192 = scmp.ne.s32.totalorder %s187, %s189
    %p193 = scmp.eq.s32.totalorder %s17, 0
    %p194 = por %p192, %p193
    %p195 = scmp.ne.s32.totalorder %s187, %s189
    %p196 = scmp.eq.s32.totalorder %s22, 1
    %p197 = por %p195, %p196
    %p198 = scmp.ne.s32.totalorder %s189, %s190
    %p199 = scmp.eq.s32.totalorder %s22, 0
    %p200 = por %p198, %p199
    %p201 = scmp.ne.s32.totalorder %s189, %s190
    %p202 = scmp.eq.s32.totalorder %s23, 1
    %p203 = por %p201, %p202
    %p205 = scmp.ne.s32.totalorder %s190, %s204
    %p206 = scmp.eq.s32.totalorder %s23, 0
    %p207 = por %p205, %p206
    %s209 = sadd.s32 %s208, 1
    %p212 = scmp.eq.s32.totalorder %s17, 1
    %p213 = scmp.ne.s32.totalorder %s208, %s210
    %p214 = scmp.eq.s32.totalorder %s17, 0
    %p215 = por %p213, %p214
    %p216 = scmp.ne.s32.totalorder %s208, %s210
    %p217 = scmp.eq.s32.totalorder %s22, 1
    %p218 = por %p216, %p217
    %p219 = scmp.ne.s32.totalorder %s210, %s211
    %p220 = scmp.eq.s32.totalorder %s22, 0
    %p221 = por %p219, %p220
    %p222 = scmp.ne.s32.totalorder %s210, %s211
    %p223 = scmp.eq.s32.totalorder %s23, 1
    %p224 = por %p222, %p223
    %p226 = scmp.ne.s32.totalorder %s211, %s225
    %p227 = scmp.eq.s32.totalorder %s23, 0
    %p228 = por %p226, %p227
    %s230 = sadd.s32 %s229, 1
    %p233 = scmp.eq.s32.totalorder %s17, 1
    %p234 = scmp.ne.s32.totalorder %s229, %s231
    %p235 = scmp.eq.s32.totalorder %s17, 0
    %p236 = por %p234, %p235
    %p237 = scmp.ne.s32.totalorder %s229, %s231
    %p238 = scmp.eq.s32.totalorder %s22, 1
    %p239 = por %p237, %p238
    %p240 = scmp.ne.s32.totalorder %s231, %s232
    %p241 = scmp.eq.s32.totalorder %s22, 0
    %p242 = por %p240, %p241
    %p243 = scmp.ne.s32.totalorder %s231, %s232
    %p244 = scmp.eq.s32.totalorder %s23, 1
    %p245 = por %p243, %p244
    %p247 = scmp.ne.s32.totalorder %s232, %s246
    %p248 = scmp.eq.s32.totalorder %s23, 0
    %p249 = por %p247, %p248
    %s251 = sadd.s32 %s250, 1
    %p254 = scmp.eq.s32.totalorder %s17, 1
    %p255 = scmp.ne.s32.totalorder %s250, %s252
    %p256 = scmp.eq.s32.totalorder %s17, 0
    %p257 = por %p255, %p256
    %p258 = scmp.ne.s32.totalorder %s250, %s252
    %p259 = scmp.eq.s32.totalorder %s22, 1
    %p260 = por %p258, %p259
    %p261 = scmp.ne.s32.totalorder %s252, %s253
    %p262 = scmp.eq.s32.totalorder %s22, 0
    %p263 = por %p261, %p262
    %p264 = scmp.ne.s32.totalorder %s252, %s253
    %p265 = scmp.eq.s32.totalorder %s23, 1
    %p266 = por %p264, %p265
    %p268 = scmp.ne.s32.totalorder %s253, %s267
    %p269 = scmp.eq.s32.totalorder %s23, 0
    %p270 = por %p268, %p269
    %s271 = ssub.s32 %s17, %s24
    %p272 = scmp.eq.s32.totalorder %s271, 0
    %s274 = sadd.s32 %s273, 1
    %s275 = scalar_select %p272, %s273, %s274
    %p278 = pneg %p272
    %p279 = scmp.eq.s32.totalorder %s17, 1
    %p280 = por %p278, %p279
    %p281 = scmp.ne.s32.totalorder %s273, %s276
    %p282 = scmp.eq.s32.totalorder %s17, 0
    %p283 = por %p281, %p282
    %p284 = scmp.ne.s32.totalorder %s273, %s276
    %p285 = scmp.eq.s32.totalorder %s22, 1
    %p286 = por %p284, %p285
    %p287 = scmp.ne.s32.totalorder %s276, %s277
    %p288 = scmp.eq.s32.totalorder %s22, 0
    %p289 = por %p287, %p288
    %p290 = scmp.ne.s32.totalorder %s276, %s277
    %p291 = scmp.eq.s32.totalorder %s23, 1
    %p292 = por %p290, %p291
    %p294 = scmp.ne.s32.totalorder %s277, %s293
    %p295 = scmp.eq.s32.totalorder %s23, 0
    %p296 = por %p294, %p295
    %p297 = scmp.le.s32.totalorder 1, %s17
    %p298 = scmp.lt.s32.totalorder %s17, 3
    %p299 = pnand %p297, %p298
    %p300 = pneg %p299
    // Predicated region
    $region9: #{transformer_forward.11} parent=5 // pred_check
      _
    $region10: #{transformer_forward.11} parent=5 // pred_check_branch
      %302 = sbr.rel (%p299) target = $region12
    $region11: #{transformer_forward.11} parent=5 // pred_region
      %s303 = ssub.s32 %s17, 1
      // Predicated region
      $region13: #{transformer_forward.11} parent=11 // pred_check
        %p304 = pneg %p116
      $region14: #{transformer_forward.11} parent=11 // pred_check_branch
        %306 = sbr.rel (%p304) target = $region16
      $region15: #{transformer_forward.11} parent=11 // pred_region
        _
      $region16: #{transformer_forward.11} parent=11 // pred_fallthru
        _
      // Predicated region
      $region17: #{transformer_forward.11} parent=11 // pred_check
        %p307 = pneg %p137
      $region18: #{transformer_forward.11} parent=11 // pred_check_branch
        %309 = sbr.rel (%p307) target = $region20
      $region19: #{transformer_forward.11} parent=11 // pred_region
        _
      $region20: #{transformer_forward.11} parent=11 // pred_fallthru
        _
      // Predicated region
      $region21: #{transformer_forward.11} parent=11 // pred_check
        %p310 = pneg %p158
      $region22: #{transformer_forward.11} parent=11 // pred_check_branch
        %312 = sbr.rel (%p310) target = $region24
      $region23: #{transformer_forward.11} parent=11 // pred_region
        _
      $region24: #{transformer_forward.11} parent=11 // pred_fallthru
        _
      // Predicated region
      $region25: #{transformer_forward.11} parent=11 // pred_check
        %p313 = pneg %p179
      $region26: #{transformer_forward.11} parent=11 // pred_check_branch
        %315 = sbr.rel (%p313) target = $region28
      $region27: #{transformer_forward.11} parent=11 // pred_region
        _
      $region28: #{transformer_forward.11} parent=11 // pred_fallthru
        _
      // Predicated region
      $region29: #{transformer_forward.11} parent=11 // pred_check
        %p316 = pneg %p200
      $region30: #{transformer_forward.11} parent=11 // pred_check_branch
        %318 = sbr.rel (%p316) target = $region32
      $region31: #{transformer_forward.11} parent=11 // pred_region
        _
      $region32: #{transformer_forward.11} parent=11 // pred_fallthru
        _
      // Predicated region
      $region33: #{transformer_forward.11} parent=11 // pred_check
        %p319 = pneg %p221
      $region34: #{transformer_forward.11} parent=11 // pred_check_branch
        %321 = sbr.rel (%p319) target = $region36
      $region35: #{transformer_forward.11} parent=11 // pred_region
        _
      $region36: #{transformer_forward.11} parent=11 // pred_fallthru
        _
      // Predicated region
      $region37: #{transformer_forward.11} parent=11 // pred_check
        %p322 = pneg %p242
      $region38: #{transformer_forward.11} parent=11 // pred_check_branch
        %324 = sbr.rel (%p322) target = $region40
      $region39: #{transformer_forward.11} parent=11 // pred_region
        _
      $region40: #{transformer_forward.11} parent=11 // pred_fallthru
        _
      // Predicated region
      $region41: #{transformer_forward.11} parent=11 // pred_check
        %p325 = pneg %p263
      $region42: #{transformer_forward.11} parent=11 // pred_check_branch
        %327 = sbr.rel (%p325) target = $region44
      $region43: #{transformer_forward.11} parent=11 // pred_region
        _
      $region44: #{transformer_forward.11} parent=11 // pred_fallthru
        _
    $region12: #{transformer_forward.11} parent=5 // pred_fallthru
      _
    %p328 = scmp.lt.s32.totalorder %s17, 2
    // Predicated region
    $region45: #{transformer_forward.11} parent=5 // pred_check
      %p329 = pneg %p328
    $region46: #{transformer_forward.11} parent=5 // pred_check_branch
      %331 = sbr.rel (%p329) target = $region48
    $region47: #{transformer_forward.11} parent=5 // pred_region
      // Predicated region
      $region49: #{transformer_forward.11} parent=47 // pred_check
        %p332 = pneg %p37
      $region50: #{transformer_forward.11} parent=47 // pred_check_branch
        %334 = sbr.rel (%p332) target = $region52
      $region51: #{transformer_forward.11} parent=47 // pred_region
        %p335 = scmp.lt.s32.totalorder %s17, 1
        %s336 = scalar_select %p335, %s17, 1
        %s337 = smul.addr %s336, 8
        %s338 = scalar_lea.vmem %s0, %s337
      $region52: #{transformer_forward.11} parent=47 // pred_fallthru
        _
      // Predicated region
      $region53: #{transformer_forward.11} parent=47 // pred_check
        %p339 = pneg %p63
      $region54: #{transformer_forward.11} parent=47 // pred_check_branch
        %341 = sbr.rel (%p339) target = $region56
      $region55: #{transformer_forward.11} parent=47 // pred_region
        %p342 = scmp.lt.s32.totalorder %s17, 1
        %s343 = scalar_select %p342, %s17, 1
        %s344 = smul.addr %s343, 8
        %s345 = scalar_lea.vmem %s1, %s344
      $region56: #{transformer_forward.11} parent=47 // pred_fallthru
        _
      // Predicated region
      $region57: #{transformer_forward.11} parent=47 // pred_check
        %p346 = pneg %p89
      $region58: #{transformer_forward.11} parent=47 // pred_check_branch
        %348 = sbr.rel (%p346) target = $region60
      $region59: #{transformer_forward.11} parent=47 // pred_region
        %p349 = scmp.lt.s32.totalorder %s17, 1
        %s350 = scalar_select %p349, %s17, 1
        %s351 = smul.addr %s350, 8
        %s352 = scalar_lea.vmem %s2, %s351
      $region60: #{transformer_forward.11} parent=47 // pred_fallthru
        _
    $region48: #{transformer_forward.11} parent=5 // pred_fallthru
      _
    %p353 = scmp.le.s32.totalorder 1, %s17
    %p354 = scmp.lt.s32.totalorder %s17, 3
    %p355 = pnand %p353, %p354
    %p356 = pneg %p355
    // Predicated region
    $region61: #{transformer_forward.11} parent=5 // pred_check
      _
    $region62: #{transformer_forward.11} parent=5 // pred_check_branch
      %358 = sbr.rel (%p355) target = $region64
    $region63: #{transformer_forward.11} parent=5 // pred_region
      %s359 = ssub.s32 %s17, 1
      %p360 = scmp.lt.s32.totalorder %s22, 1
      %s361 = scalar_select %p360, %s22, 1
      %s362 = smul.addr %s361, 8
      %s363 = scalar_lea.vmem %s0, %s362
      %p364 = pneg %p43
      %p365 = pneg %p40
      %p366 = scmp.lt.s32.totalorder %s22, 1
      %s367 = scalar_select %p366, %s22, 1
      %s368 = smul.addr %s367, 8
      %s369 = scalar_lea.vmem %s1, %s368
      %p370 = pneg %p69
      %p371 = pneg %p66
      %p372 = scmp.lt.s32.totalorder %s22, 1
      %s373 = scalar_select %p372, %s22, 1
      %s374 = smul.addr %s373, 8
      %s375 = scalar_lea.vmem %s2, %s374
      %p376 = pneg %p95
      %p377 = pneg %p92
      %p378 = pneg %p116
      %p379 = pneg %p113
      %p380 = pneg %p137
      %p381 = pneg %p134
      %p382 = pneg %p158
      %p383 = pneg %p155
      %p384 = pneg %p179
      %p385 = pneg %p176
      %p386 = pneg %p200
      %p387 = pneg %p197
      %p388 = pneg %p221
      %p389 = pneg %p218
      %p390 = pneg %p242
      %p391 = pneg %p239
      %p392 = pneg %p263
      %p393 = pneg %p260
      %p394 = pneg %p289
      %p395 = pneg %p286
      %p396 = scmp.lt.s32.totalorder %s22, 1
      %s397 = scalar_select %p396, %s22, 1
      %s398 = smul.addr %s397, 8
      %s399 = scalar_lea.vmem %s11, %s398
      %p400 = scmp.lt.s32.totalorder %s22, 1
      %s401 = scalar_select %p400, %s22, 1
      %s402 = smul.addr %s401, 8
      %s403 = scalar_lea.vmem %s0, %s402
      %p404 = scmp.lt.s32.totalorder %s22, 1
      %s405 = scalar_select %p404, %s22, 1
      %s406 = smul.addr %s405, 8
      %s407 = scalar_lea.vmem %s1, %s406
      %p408 = scmp.lt.s32.totalorder %s22, 1
      %s409 = scalar_select %p408, %s22, 1
      %s410 = smul.addr %s409, 8
      %s411 = scalar_lea.vmem %s2, %s410
      %p412 = scmp.lt.s32.totalorder %s22, 1
      %s413 = scalar_select %p412, %s22, 1
      %s414 = smul.addr %s413, 8
      %s415 = scalar_lea.vmem %s11, %s414
      %v417 = vld [vmem:[%s403] sm:$0xff]
      %v418 = vld [vmem:[%s407] sm:$0xff]
      %v419 = vld [vmem:[%s411] sm:$0xff]
      %v420 = vpack.c.bf16 %v417, %v417
      %v421 = vpack.c.bf16 %v418, %v418
      %v422 = vld [vmem:[%s3] sm:$0xf]
      %v423 = vld [vmem:[%s3 + $0x4] sm:$0xf]
      %v424 = vld [vmem:[%s3 + $0x8] sm:$0xf]
      %v425 = vld [vmem:[%s3 + $0xc] sm:$0xf]
      %v426 = vld [vmem:[%s4] sm:$0x1]
      %v428 = vlaneseq
      %v429 = vshrl.u32 %v428, 7
      %v430 = vsub.s32 0, %v429
      %v431 = vrot.slane %v426, %v430
      %v437 = vunpack.c.l.b16 %v422
      %v438 = vunpack.c.l.b16 %v423
      %v439 = vunpack.c.l.b16 %v424
      %v440 = vunpack.c.l.b16 %v425
      %v441 = vpack.c.b16 %v438, %v437
      %v442 = vpack.c.b16 %v440, %v439
      %vm445 = vcmask 261120
      %v447 = vsel %vm445, %v420, 0
      %449 = vmatprep.subr.bf16.mxu0 0
      %450 = vmatpush1.bf16.msra.mxu0 %v441
      %451 = vmatprep.subr.bf16.mxu0 0
      %452 = vmatpush1.bf16.msra.mxu0 %v442
      %453 = vmatprep.subr.bf16.mxu0 0
      %454 = vmatpush1.bf16.msra.mxu0 0
      %455 = vmatprep.subr.bf16.mxu0 0
      %456 = vmatpush1.bf16.msra.mxu0 0
      %457 = vmatprep.subr.bf16.mxu0 0
      %458 = vmatpush1.bf16.msra.mxu0 0
      %459 = vmatprep.subr.bf16.mxu0 0
      %460 = vmatpush1.bf16.msra.mxu0 0
      %461 = vmatprep.subr.bf16.mxu0 0
      %462 = vmatpush1.bf16.msra.mxu0 0
      %463 = vmatprep.subr.bf16.mxu0 0
      %464 = vmatpush1.bf16.msra.mxu0 0
      %465 = vmatprep.subr.bf16.mxu0 0
      %466 = vmatpush1.bf16.msra.mxu0 0
      %467 = vmatprep.subr.bf16.mxu0 0
      %468 = vmatpush1.bf16.msra.mxu0 0
      %469 = vmatprep.subr.bf16.mxu0 0
      %470 = vmatpush1.bf16.msra.mxu0 0
      %471 = vmatprep.subr.bf16.mxu0 0
      %472 = vmatpush1.bf16.msra.mxu0 0
      %473 = vmatprep.subr.bf16.mxu0 0
      %474 = vmatpush1.bf16.msra.mxu0 0
      %475 = vmatprep.subr.bf16.mxu0 0
      %476 = vmatpush1.bf16.msra.mxu0 0
      %477 = vmatprep.subr.bf16.mxu0 0
      %478 = vmatpush1.bf16.msra.mxu0 0
      %479 = vmatprep.subr.bf16.mxu0 0
      %480 = vmatpush1.bf16.msra.mxu0 0
      %481 = vmatprep.mubr.bf16.mxu0 0
      %482 = vmatmul.mubr.bf16.gmra.mrb[0].mxu0 %v447
      %v483 = vpop.f32.mrb[0].mxu0
      %v484 = vadd.f32 %v431, %v483
      %v485 = vpop.f32.mrb[0].mxu0
      %v486 = vpop.f32.mrb[0].mxu0
      %v487 = vpop.f32.mrb[0].mxu0
      %488 = vdwg.mxu0
      %v489 = vld [vmem:[%s5] sm:$0xf]
      %v490 = vld [vmem:[%s5 + $0x4] sm:$0xf]
      %v491 = vld [vmem:[%s5 + $0x8] sm:$0xf]
      %v492 = vld [vmem:[%s5 + $0xc] sm:$0xf]
      %v493 = vld [vmem:[%s6] sm:$0x1]
      %v495 = vlaneseq
      %v496 = vshrl.u32 %v495, 7
      %v497 = vsub.s32 0, %v496
      %v498 = vrot.slane %v493, %v497
      %v504 = vunpack.c.l.b16 %v489
      %v505 = vunpack.c.l.b16 %v490
      %v506 = vunpack.c.l.b16 %v491
      %v507 = vunpack.c.l.b16 %v492
      %v508 = vpack.c.b16 %v505, %v504
      %v509 = vpack.c.b16 %v507, %v506
      %v513 = vsel %vm445, %v421, 0
      %515 = vmatprep.subr.bf16.mxu0 0
      %516 = vmatpush1.bf16.msra.mxu0 %v508
      %517 = vmatprep.subr.bf16.mxu0 0
      %518 = vmatpush1.bf16.msra.mxu0 %v509
      %519 = vmatprep.subr.bf16.mxu0 0
      %520 = vmatpush1.bf16.msra.mxu0 0
      %521 = vmatprep.subr.bf16.mxu0 0
      %522 = vmatpush1.bf16.msra.mxu0 0
      %523 = vmatprep.subr.bf16.mxu0 0
      %524 = vmatpush1.bf16.msra.mxu0 0
      %525 = vmatprep.subr.bf16.mxu0 0
      %526 = vmatpush1.bf16.msra.mxu0 0
      %527 = vmatprep.subr.bf16.mxu0 0
      %528 = vmatpush1.bf16.msra.mxu0 0
      %529 = vmatprep.subr.bf16.mxu0 0
      %530 = vmatpush1.bf16.msra.mxu0 0
      %531 = vmatprep.subr.bf16.mxu0 0
      %532 = vmatpush1.bf16.msra.mxu0 0
      %533 = vmatprep.subr.bf16.mxu0 0
      %534 = vmatpush1.bf16.msra.mxu0 0
      %535 = vmatprep.subr.bf16.mxu0 0
      %536 = vmatpush1.bf16.msra.mxu0 0
      %537 = vmatprep.subr.bf16.mxu0 0
      %538 = vmatpush1.bf16.msra.mxu0 0
      %539 = vmatprep.subr.bf16.mxu0 0
      %540 = vmatpush1.bf16.msra.mxu0 0
      %541 = vmatprep.subr.bf16.mxu0 0
      %542 = vmatpush1.bf16.msra.mxu0 0
      %543 = vmatprep.subr.bf16.mxu0 0
      %544 = vmatpush1.bf16.msra.mxu0 0
      %545 = vmatprep.subr.bf16.mxu0 0
      %546 = vmatpush1.bf16.msra.mxu0 0
      %547 = vmatprep.mubr.bf16.mxu0 0
      %548 = vmatmul.mubr.bf16.gmra.mrb[0].mxu0 %v513
      %v549 = vpop.f32.mrb[0].mxu0
      %v550 = vadd.f32 %v498, %v549
      %v551 = vpop.f32.mrb[0].mxu0
      %v552 = vpop.f32.mrb[0].mxu0
      %v553 = vpop.f32.mrb[0].mxu0
      %554 = vdwg.mxu0
      %v555 = vpack.c.bf16 %v484, %v484
      %v556 = vpack.c.bf16 %v550, %v550
      %vm557 = vcmask 64512
      %v559 = vsel %vm557, %v555, 0
      %v562 = vsel %vm557, %v556, 0
      %564 = vmatprep.subr.bf16.mxu0 0
      %565 = vmatpush1.bf16.xpose.msra.mxu0 %v562
      %566 = vmatprep.subr.bf16.mxu0 0
      %567 = vmatpush1.bf16.xpose.msra.mxu0 0
      %568 = vmatprep.subr.bf16.mxu0 0
      %569 = vmatpush1.bf16.xpose.msra.mxu0 0
      %570 = vmatprep.subr.bf16.mxu0 0
      %571 = vmatpush1.bf16.xpose.msra.mxu0 0
      %572 = vmatprep.subr.bf16.mxu0 0
      %573 = vmatpush1.bf16.xpose.msra.mxu0 0
      %574 = vmatprep.subr.bf16.mxu0 0
      %575 = vmatpush1.bf16.xpose.msra.mxu0 0
      %576 = vmatprep.subr.bf16.mxu0 0
      %577 = vmatpush1.bf16.xpose.msra.mxu0 0
      %578 = vmatprep.subr.bf16.mxu0 0
      %579 = vmatpush1.bf16.xpose.msra.mxu0 0
      %580 = vmatprep.subr.bf16.mxu0 0
      %581 = vmatpush1.bf16.xpose.msra.mxu0 0
      %582 = vmatprep.subr.bf16.mxu0 0
      %583 = vmatpush1.bf16.xpose.msra.mxu0 0
      %584 = vmatprep.subr.bf16.mxu0 0
      %585 = vmatpush1.bf16.xpose.msra.mxu0 0
      %586 = vmatprep.subr.bf16.mxu0 0
      %587 = vmatpush1.bf16.xpose.msra.mxu0 0
      %588 = vmatprep.subr.bf16.mxu0 0
      %589 = vmatpush1.bf16.xpose.msra.mxu0 0
      %590 = vmatprep.subr.bf16.mxu0 0
      %591 = vmatpush1.bf16.xpose.msra.mxu0 0
      %592 = vmatprep.subr.bf16.mxu0 0
      %593 = vmatpush1.bf16.xpose.msra.mxu0 0
      %594 = vmatprep.subr.bf16.mxu0 0
      %595 = vmatpush1.bf16.xpose.msra.mxu0 0
      %596 = vmatprep.mubr.bf16.mxu0 0
      %597 = vmatmul.mubr.bf16.gmra.mrb[0].mxu0 %v559
      %v598 = vpop.f32.mrb[0].mxu0
      %v599 = vadd.f32 0.0, %v598
      %v600 = vpop.f32.mrb[0].mxu0
      %v601 = vpop.f32.mrb[0].mxu0
      %v602 = vpop.f32.mrb[0].mxu0
      %603 = vdwg.mxu0
      %v604 = vmul.f32 %v599, 0.35355338
      %v605 = vadd.f32 %v604, %v419
      %v606 = vsel %vm557, %v605, -inf
      %607 = vmax.xlane.f32.xlu0 %v606
      %v608 = vpop.xlane.xlu0 %607
      %v609 = vsub.f32 %v605, %v608
      %v610 = vmul.f32 %v609, 1.442695
      %v611 = vpow.pop %v610
      %v612 = vsel %vm557, %v611, 0.0
      %613 = vadd.xlane.f32.xlu0 %v612
      %v614 = vpop.xlane.xlu0 %613
      %v615 = vrcp.pop %v614
      %v616 = vmul.f32 %v611, %v615
      %v617 = vpack.c.bf16 %v616, %v616
      %619 = vrot.lane.b32.xlu0 %v556, 96
      %v620 = vpop.permute.xlu0 %619
      %v622 = vsel %vm557, %v617, 0
      %vm624 = vcmask 1043456
      %v626 = vsel %vm624, %v620, 0
      %628 = vmatprep.subr.bf16.mxu0 0
      %629 = vmatpush1.bf16.msra.mxu0 %v626
      %630 = vmatprep.subr.bf16.mxu0 0
      %631 = vmatpush1.bf16.msra.mxu0 0
      %632 = vmatprep.subr.bf16.mxu0 0
      %633 = vmatpush1.bf16.msra.mxu0 0
      %634 = vmatprep.subr.bf16.mxu0 0
      %635 = vmatpush1.bf16.msra.mxu0 0
      %636 = vmatprep.subr.bf16.mxu0 0
      %637 = vmatpush1.bf16.msra.mxu0 0
      %638 = vmatprep.subr.bf16.mxu0 0
      %639 = vmatpush1.bf16.msra.mxu0 0
      %640 = vmatprep.subr.bf16.mxu0 0
      %641 = vmatpush1.bf16.msra.mxu0 0
      %642 = vmatprep.subr.bf16.mxu0 0
      %643 = vmatpush1.bf16.msra.mxu0 0
      %644 = vmatprep.subr.bf16.mxu0 0
      %645 = vmatpush1.bf16.msra.mxu0 0
      %646 = vmatprep.subr.bf16.mxu0 0
      %647 = vmatpush1.bf16.msra.mxu0 0
      %648 = vmatprep.subr.bf16.mxu0 0
      %649 = vmatpush1.bf16.msra.mxu0 0
      %650 = vmatprep.subr.bf16.mxu0 0
      %651 = vmatpush1.bf16.msra.mxu0 0
      %652 = vmatprep.subr.bf16.mxu0 0
      %653 = vmatpush1.bf16.msra.mxu0 0
      %654 = vmatprep.subr.bf16.mxu0 0
      %655 = vmatpush1.bf16.msra.mxu0 0
      %656 = vmatprep.subr.bf16.mxu0 0
      %657 = vmatpush1.bf16.msra.mxu0 0
      %658 = vmatprep.subr.bf16.mxu0 0
      %659 = vmatpush1.bf16.msra.mxu0 0
      %660 = vmatprep.mubr.bf16.mxu0 0
      %661 = vmatmul.mubr.bf16.gmra.mrb[0].mxu0 %v622
      %v662 = vpop.f32.mrb[0].mxu0
      %v663 = vadd.f32 0.0, %v662
      %v664 = vpop.f32.mrb[0].mxu0
      %v665 = vpop.f32.mrb[0].mxu0
      %v666 = vpop.f32.mrb[0].mxu0
      %667 = vdwg.mxu0
      %669 = vrot.lane.b32.xlu0 %v555, 120
      %v670 = vpop.permute.xlu0 %669
      %671 = vrot.lane.b32.xlu0 %v556, 120
      %v672 = vpop.permute.xlu0 %671
      %v674 = vsel %vm557, %v670, 0
      %v677 = vsel %vm557, %v672, 0
      %679 = vmatprep.subr.bf16.mxu0 0
      %680 = vmatpush1.bf16.xpose.msra.mxu0 %v677
      %681 = vmatprep.subr.bf16.mxu0 0
      %682 = vmatpush1.bf16.xpose.msra.mxu0 0
      %683 = vmatprep.subr.bf16.mxu0 0
      %684 = vmatpush1.bf16.xpose.msra.mxu0 0
      %685 = vmatprep.subr.bf16.mxu0 0
      %686 = vmatpush1.bf16.xpose.msra.mxu0 0
      %687 = vmatprep.subr.bf16.mxu0 0
      %688 = vmatpush1.bf16.xpose.msra.mxu0 0
      %689 = vmatprep.subr.bf16.mxu0 0
      %690 = vmatpush1.bf16.xpose.msra.mxu0 0
      %691 = vmatprep.subr.bf16.mxu0 0
      %692 = vmatpush1.bf16.xpose.msra.mxu0 0
      %693 = vmatprep.subr.bf16.mxu0 0
      %694 = vmatpush1.bf16.xpose.msra.mxu0 0
      %695 = vmatprep.subr.bf16.mxu0 0
      %696 = vmatpush1.bf16.xpose.msra.mxu0 0
      %697 = vmatprep.subr.bf16.mxu0 0
      %698 = vmatpush1.bf16.xpose.msra.mxu0 0
      %699 = vmatprep.subr.bf16.mxu0 0
      %700 = vmatpush1.bf16.xpose.msra.mxu0 0
      %701 = vmatprep.subr.bf16.mxu0 0
      %702 = vmatpush1.bf16.xpose.msra.mxu0 0
      %703 = vmatprep.subr.bf16.mxu0 0
      %704 = vmatpush1.bf16.xpose.msra.mxu0 0
      %705 = vmatprep.subr.bf16.mxu0 0
      %706 = vmatpush1.bf16.xpose.msra.mxu0 0
      %707 = vmatprep.subr.bf16.mxu0 0
      %708 = vmatpush1.bf16.xpose.msra.mxu0 0
      %709 = vmatprep.subr.bf16.mxu0 0
      %710 = vmatpush1.bf16.xpose.msra.mxu0 0
      %711 = vmatprep.mubr.bf16.mxu0 0
      %712 = vmatmul.mubr.bf16.gmra.mrb[0].mxu0 %v674
      %v713 = vpop.f32.mrb[0].mxu0
      %v714 = vadd.f32 0.0, %v713
      %v715 = vpop.f32.mrb[0].mxu0
      %v716 = vpop.f32.mrb[0].mxu0
      %v717 = vpop.f32.mrb[0].mxu0
      %718 = vdwg.mxu0
      %v719 = vmul.f32 %v714, 0.35355338
      %v720 = vadd.f32 %v719, %v419
      %v721 = vsel %vm557, %v720, -inf
      %722 = vmax.xlane.f32.xlu0 %v721
      %v723 = vpop.xlane.xlu0 %722
      %v724 = vsub.f32 %v720, %v723
      %v725 = vmul.f32 %v724, 1.442695
      %v726 = vpow.pop %v725
      %v727 = vsel %vm557, %v726, 0.0
      %728 = vadd.xlane.f32.xlu0 %v727
      %v729 = vpop.xlane.xlu0 %728
      %v730 = vrcp.pop %v729
      %v731 = vmul.f32 %v726, %v730
      %v732 = vpack.c.bf16 %v731, %v731
      %733 = vrot.lane.b32.xlu0 %v556, 88
      %v734 = vpop.permute.xlu0 %733
      %v736 = vsel %vm557, %v732, 0
      %v739 = vsel %vm624, %v734, 0
      %741 = vmatprep.subr.bf16.mxu0 0
      %742 = vmatpush1.bf16.msra.mxu0 %v739
      %743 = vmatprep.subr.bf16.mxu0 0
      %744 = vmatpush1.bf16.msra.mxu0 0
      %745 = vmatprep.subr.bf16.mxu0 0
      %746 = vmatpush1.bf16.msra.mxu0 0
      %747 = vmatprep.subr.bf16.mxu0 0
      %748 = vmatpush1.bf16.msra.mxu0 0
      %749 = vmatprep.subr.bf16.mxu0 0
      %750 = vmatpush1.bf16.msra.mxu0 0
      %751 = vmatprep.subr.bf16.mxu0 0
      %752 = vmatpush1.bf16.msra.mxu0 0
      %753 = vmatprep.subr.bf16.mxu0 0
      %754 = vmatpush1.bf16.msra.mxu0 0
      %755 = vmatprep.subr.bf16.mxu0 0
      %756 = vmatpush1.bf16.msra.mxu0 0
      %757 = vmatprep.subr.bf16.mxu0 0
      %758 = vmatpush1.bf16.msra.mxu0 0
      %759 = vmatprep.subr.bf16.mxu0 0
      %760 = vmatpush1.bf16.msra.mxu0 0
      %761 = vmatprep.subr.bf16.mxu0 0
      %762 = vmatpush1.bf16.msra.mxu0 0
      %763 = vmatprep.subr.bf16.mxu0 0
      %764 = vmatpush1.bf16.msra.mxu0 0
      %765 = vmatprep.subr.bf16.mxu0 0
      %766 = vmatpush1.bf16.msra.mxu0 0
      %767 = vmatprep.subr.bf16.mxu0 0
      %768 = vmatpush1.bf16.msra.mxu0 0
      %769 = vmatprep.subr.bf16.mxu0 0
      %770 = vmatpush1.bf16.msra.mxu0 0
      %771 = vmatprep.subr.bf16.mxu0 0
      %772 = vmatpush1.bf16.msra.mxu0 0
      %773 = vmatprep.mubr.bf16.mxu0 0
      %774 = vmatmul.mubr.bf16.gmra.mrb[0].mxu0 %v736
      %v775 = vpop.f32.mrb[0].mxu0
      %v776 = vadd.f32 0.0, %v775
      %v777 = vpop.f32.mrb[0].mxu0
      %v778 = vpop.f32.mrb[0].mxu0
      %v779 = vpop.f32.mrb[0].mxu0
      %780 = vdwg.mxu0
      %781 = vrot.lane.b32.xlu0 %v555, 112
      %v782 = vpop.permute.xlu0 %781
      %783 = vrot.lane.b32.xlu0 %v556, 112
      %v784 = vpop.permute.xlu0 %783
      %v786 = vsel %vm557, %v782, 0
      %v789 = vsel %vm557, %v784, 0
      %791 = vmatprep.subr.bf16.mxu0 0
      %792 = vmatpush1.bf16.xpose.msra.mxu0 %v789
      %793 = vmatprep.subr.bf16.mxu0 0
      %794 = vmatpush1.bf16.xpose.msra.mxu0 0
      %795 = vmatprep.subr.bf16.mxu0 0
      %796 = vmatpush1.bf16.xpose.msra.mxu0 0
      %797 = vmatprep.subr.bf16.mxu0 0
      %798 = vmatpush1.bf16.xpose.msra.mxu0 0
      %799 = vmatprep.subr.bf16.mxu0 0
      %800 = vmatpush1.bf16.xpose.msra.mxu0 0
      %801 = vmatprep.subr.bf16.mxu0 0
      %802 = vmatpush1.bf16.xpose.msra.mxu0 0
      %803 = vmatprep.subr.bf16.mxu0 0
      %804 = vmatpush1.bf16.xpose.msra.mxu0 0
      %805 = vmatprep.subr.bf16.mxu0 0
      %806 = vmatpush1.bf16.xpose.msra.mxu0 0
      %807 = vmatprep.subr.bf16.mxu0 0
      %808 = vmatpush1.bf16.xpose.msra.mxu0 0
      %809 = vmatprep.subr.bf16.mxu0 0
      %810 = vmatpush1.bf16.xpose.msra.mxu0 0
      %811 = vmatprep.subr.bf16.mxu0 0
      %812 = vmatpush1.bf16.xpose.msra.mxu0 0
      %813 = vmatprep.subr.bf16.mxu0 0
      %814 = vmatpush1.bf16.xpose.msra.mxu0 0
      %815 = vmatprep.subr.bf16.mxu0 0
      %816 = vmatpush1.bf16.xpose.msra.mxu0 0
      %817 = vmatprep.subr.bf16.mxu0 0
      %818 = vmatpush1.bf16.xpose.msra.mxu0 0
      %819 = vmatprep.subr.bf16.mxu0 0
      %820 = vmatpush1.bf16.xpose.msra.mxu0 0
      %821 = vmatprep.subr.bf16.mxu0 0
      %822 = vmatpush1.bf16.xpose.msra.mxu0 0
      %823 = vmatprep.mubr.bf16.mxu0 0
      %824 = vmatmul.mubr.bf16.gmra.mrb[0].mxu0 %v786
      %v825 = vpop.f32.mrb[0].mxu0
      %v826 = vadd.f32 0.0, %v825
      %v827 = vpop.f32.mrb[0].mxu0
      %v828 = vpop.f32.mrb[0].mxu0
      %v829 = vpop.f32.mrb[0].mxu0
      %830 = vdwg.mxu0
      %v831 = vmul.f32 %v826, 0.35355338
      %v832 = vadd.f32 %v831, %v419
      %v833 = vsel %vm557, %v832, -inf
      %834 = vmax.xlane.f32.xlu0 %v833
      %v835 = vpop.xlane.xlu0 %834
      %v836 = vsub.f32 %v832, %v835
      %v837 = vmul.f32 %v836, 1.442695
      %v838 = vpow.pop %v837
      %v839 = vsel %vm557, %v838, 0.0
      %840 = vadd.xlane.f32.xlu0 %v839
      %v841 = vpop.xlane.xlu0 %840
      %v842 = vrcp.pop %v841
      %v843 = vmul.f32 %v838, %v842
      %v844 = vpack.c.bf16 %v843, %v843
      %845 = vrot.lane.b32.xlu0 %v556, 80
      %v846 = vpop.permute.xlu0 %845
      %v848 = vsel %vm557, %v844, 0
      %v851 = vsel %vm624, %v846, 0
      %853 = vmatprep.subr.bf16.mxu0 0
      %854 = vmatpush1.bf16.msra.mxu0 %v851
      %855 = vmatprep.subr.bf16.mxu0 0
      %856 = vmatpush1.bf16.msra.mxu0 0
      %857 = vmatprep.subr.bf16.mxu0 0
      %858 = vmatpush1.bf16.msra.mxu0 0
      %859 = vmatprep.subr.bf16.mxu0 0
      %860 = vmatpush1.bf16.msra.mxu0 0
      %861 = vmatprep.subr.bf16.mxu0 0
      %862 = vmatpush1.bf16.msra.mxu0 0
      %863 = vmatprep.subr.bf16.mxu0 0
      %864 = vmatpush1.bf16.msra.mxu0 0
      %865 = vmatprep.subr.bf16.mxu0 0
      %866 = vmatpush1.bf16.msra.mxu0 0
      %867 = vmatprep.subr.bf16.mxu0 0
      %868 = vmatpush1.bf16.msra.mxu0 0
      %869 = vmatprep.subr.bf16.mxu0 0
      %870 = vmatpush1.bf16.msra.mxu0 0
      %871 = vmatprep.subr.bf16.mxu0 0
      %872 = vmatpush1.bf16.msra.mxu0 0
      %873 = vmatprep.subr.bf16.mxu0 0
      %874 = vmatpush1.bf16.msra.mxu0 0
      %875 = vmatprep.subr.bf16.mxu0 0
      %876 = vmatpush1.bf16.msra.mxu0 0
      %877 = vmatprep.subr.bf16.mxu0 0
      %878 = vmatpush1.bf16.msra.mxu0 0
      %879 = vmatprep.subr.bf16.mxu0 0
      %880 = vmatpush1.bf16.msra.mxu0 0
      %881 = vmatprep.subr.bf16.mxu0 0
      %882 = vmatpush1.bf16.msra.mxu0 0
      %883 = vmatprep.subr.bf16.mxu0 0
      %884 = vmatpush1.bf16.msra.mxu0 0
      %885 = vmatprep.mubr.bf16.mxu0 0
      %886 = vmatmul.mubr.bf16.gmra.mrb[0].mxu0 %v848
      %v887 = vpop.f32.mrb[0].mxu0
      %v888 = vadd.f32 0.0, %v887
      %v889 = vpop.f32.mrb[0].mxu0
      %v890 = vpop.f32.mrb[0].mxu0
      %v891 = vpop.f32.mrb[0].mxu0
      %892 = vdwg.mxu0
      %893 = vrot.lane.b32.xlu0 %v555, 104
      %v894 = vpop.permute.xlu0 %893
      %895 = vrot.lane.b32.xlu0 %v556, 104
      %v896 = vpop.permute.xlu0 %895
      %v898 = vsel %vm557, %v894, 0
      %v901 = vsel %vm557, %v896, 0
      %903 = vmatprep.subr.bf16.mxu0 0
      %904 = vmatpush1.bf16.xpose.msra.mxu0 %v901
      %905 = vmatprep.subr.bf16.mxu0 0
      %906 = vmatpush1.bf16.xpose.msra.mxu0 0
      %907 = vmatprep.subr.bf16.mxu0 0
      %908 = vmatpush1.bf16.xpose.msra.mxu0 0
      %909 = vmatprep.subr.bf16.mxu0 0
      %910 = vmatpush1.bf16.xpose.msra.mxu0 0
      %911 = vmatprep.subr.bf16.mxu0 0
      %912 = vmatpush1.bf16.xpose.msra.mxu0 0
      %913 = vmatprep.subr.bf16.mxu0 0
      %914 = vmatpush1.bf16.xpose.msra.mxu0 0
      %915 = vmatprep.subr.bf16.mxu0 0
      %916 = vmatpush1.bf16.xpose.msra.mxu0 0
      %917 = vmatprep.subr.bf16.mxu0 0
      %918 = vmatpush1.bf16.xpose.msra.mxu0 0
      %919 = vmatprep.subr.bf16.mxu0 0
      %920 = vmatpush1.bf16.xpose.msra.mxu0 0
      %921 = vmatprep.subr.bf16.mxu0 0
      %922 = vmatpush1.bf16.xpose.msra.mxu0 0
      %923 = vmatprep.subr.bf16.mxu0 0
      %924 = vmatpush1.bf16.xpose.msra.mxu0 0
      %925 = vmatprep.subr.bf16.mxu0 0
      %926 = vmatpush1.bf16.xpose.msra.mxu0 0
      %927 = vmatprep.subr.bf16.mxu0 0
      %928 = vmatpush1.bf16.xpose.msra.mxu0 0
      %929 = vmatprep.subr.bf16.mxu0 0
      %930 = vmatpush1.bf16.xpose.msra.mxu0 0
      %931 = vmatprep.subr.bf16.mxu0 0
      %932 = vmatpush1.bf16.xpose.msra.mxu0 0
      %933 = vmatprep.subr.bf16.mxu0 0
      %934 = vmatpush1.bf16.xpose.msra.mxu0 0
      %935 = vmatprep.mubr.bf16.mxu0 0
      %936 = vmatmul.mubr.bf16.gmra.mrb[0].mxu0 %v898
      %v937 = vpop.f32.mrb[0].mxu0
      %v938 = vadd.f32 0.0, %v937
      %v939 = vpop.f32.mrb[0].mxu0
      %v940 = vpop.f32.mrb[0].mxu0
      %v941 = vpop.f32.mrb[0].mxu0
      %942 = vdwg.mxu0
      %v943 = vmul.f32 %v938, 0.35355338
      %v944 = vadd.f32 %v943, %v419
      %v945 = vsel %vm557, %v944, -inf
      %946 = vmax.xlane.f32.xlu0 %v945
      %v947 = vpop.xlane.xlu0 %946
      %v948 = vsub.f32 %v944, %v947
      %v949 = vmul.f32 %v948, 1.442695
      %v950 = vpow.pop %v949
      %v951 = vsel %vm557, %v950, 0.0
      %952 = vadd.xlane.f32.xlu0 %v951
      %v953 = vpop.xlane.xlu0 %952
      %v954 = vrcp.pop %v953
      %v955 = vmul.f32 %v950, %v954
      %v956 = vpack.c.bf16 %v955, %v955
      %957 = vrot.lane.b32.xlu0 %v556, 72
      %v958 = vpop.permute.xlu0 %957
      %v960 = vsel %vm557, %v956, 0
      %v963 = vsel %vm624, %v958, 0
      %965 = vmatprep.subr.bf16.mxu0 0
      %966 = vmatpush1.bf16.msra.mxu0 %v963
      %967 = vmatprep.subr.bf16.mxu0 0
      %968 = vmatpush1.bf16.msra.mxu0 0
      %969 = vmatprep.subr.bf16.mxu0 0
      %970 = vmatpush1.bf16.msra.mxu0 0
      %971 = vmatprep.subr.bf16.mxu0 0
      %972 = vmatpush1.bf16.msra.mxu0 0
      %973 = vmatprep.subr.bf16.mxu0 0
      %974 = vmatpush1.bf16.msra.mxu0 0
      %975 = vmatprep.subr.bf16.mxu0 0
      %976 = vmatpush1.bf16.msra.mxu0 0
      %977 = vmatprep.subr.bf16.mxu0 0
      %978 = vmatpush1.bf16.msra.mxu0 0
      %979 = vmatprep.subr.bf16.mxu0 0
      %980 = vmatpush1.bf16.msra.mxu0 0
      %981 = vmatprep.subr.bf16.mxu0 0
      %982 = vmatpush1.bf16.msra.mxu0 0
      %983 = vmatprep.subr.bf16.mxu0 0
      %984 = vmatpush1.bf16.msra.mxu0 0
      %985 = vmatprep.subr.bf16.mxu0 0
      %986 = vmatpush1.bf16.msra.mxu0 0
      %987 = vmatprep.subr.bf16.mxu0 0
      %988 = vmatpush1.bf16.msra.mxu0 0
      %989 = vmatprep.subr.bf16.mxu0 0
      %990 = vmatpush1.bf16.msra.mxu0 0
      %991 = vmatprep.subr.bf16.mxu0 0
      %992 = vmatpush1.bf16.msra.mxu0 0
      %993 = vmatprep.subr.bf16.mxu0 0
      %994 = vmatpush1.bf16.msra.mxu0 0
      %995 = vmatprep.subr.bf16.mxu0 0
      %996 = vmatpush1.bf16.msra.mxu0 0
      %997 = vmatprep.mubr.bf16.mxu0 0
      %998 = vmatmul.mubr.bf16.gmra.mrb[0].mxu0 %v960
      %v999 = vpop.f32.mrb[0].mxu0
      %v1000 = vadd.f32 0.0, %v999
      %v1001 = vpop.f32.mrb[0].mxu0
      %v1002 = vpop.f32.mrb[0].mxu0
      %v1003 = vpop.f32.mrb[0].mxu0
      %1004 = vdwg.mxu0
      %1006 = vrot.lane.b32.xlu0 %v776, 8
      %v1007 = vpop.permute.xlu0 %1006
      %1010 = vrot.lane.b32.xlu0 %v888, 16
      %v1011 = vpop.permute.xlu0 %1010
      %1014 = vrot.lane.b32.xlu0 %v1000, 24
      %v1015 = vpop.permute.xlu0 %1014
      %v1017 = vsel %vm557, %v663, %v1007
      %vm1018 = vcmask 130048
      %v1019 = vsel %vm1018, %v1017, %v1011
      %vm1020 = vcmask 195584
      %v1021 = vsel %vm1020, %v1019, %v1015
      %v1022 = vpack.c.bf16 %v1021, %v1021
      %v1023 = vld [vmem:[%s7] sm:$0xf]
      %v1024 = vld [vmem:[%s7 + $0x4] sm:$0xf]
      %v1025 = vld [vmem:[%s7 + $0x8] sm:$0xf]
      %v1026 = vld [vmem:[%s7 + $0xc] sm:$0xf]
      %v1027 = vld [vmem:[%s8] sm:$0x1]
      %v1029 = vlaneseq
      %v1030 = vshrl.u32 %v1029, 7
      %v1031 = vsub.s32 0, %v1030
      %v1032 = vrot.slane %v1027, %v1031
      %v1038 = vunpack.c.l.b16 %v1023
      %v1039 = vunpack.c.l.b16 %v1024
      %v1040 = vunpack.c.l.b16 %v1025
      %v1041 = vunpack.c.l.b16 %v1026
      %v1042 = vpack.c.b16 %v1039, %v1038
      %v1043 = vpack.c.b16 %v1041, %v1040
      %v1047 = vsel %vm445, %v1022, 0
      %1049 = vmatprep.subr.bf16.mxu0 0
      %1050 = vmatpush1.bf16.msra.mxu0 %v1042
      %1051 = vmatprep.subr.bf16.mxu0 0
      %1052 = vmatpush1.bf16.msra.mxu0 %v1043
      %1053 = vmatprep.subr.bf16.mxu0 0
      %1054 = vmatpush1.bf16.msra.mxu0 0
      %1055 = vmatprep.subr.bf16.mxu0 0
      %1056 = vmatpush1.bf16.msra.mxu0 0
      %1057 = vmatprep.subr.bf16.mxu0 0
      %1058 = vmatpush1.bf16.msra.mxu0 0
      %1059 = vmatprep.subr.bf16.mxu0 0
      %1060 = vmatpush1.bf16.msra.mxu0 0
      %1061 = vmatprep.subr.bf16.mxu0 0
      %1062 = vmatpush1.bf16.msra.mxu0 0
      %1063 = vmatprep.subr.bf16.mxu0 0
      %1064 = vmatpush1.bf16.msra.mxu0 0
      %1065 = vmatprep.subr.bf16.mxu0 0
      %1066 = vmatpush1.bf16.msra.mxu0 0
      %1067 = vmatprep.subr.bf16.mxu0 0
      %1068 = vmatpush1.bf16.msra.mxu0 0
      %1069 = vmatprep.subr.bf16.mxu0 0
      %1070 = vmatpush1.bf16.msra.mxu0 0
      %1071 = vmatprep.subr.bf16.mxu0 0
      %1072 = vmatpush1.bf16.msra.mxu0 0
      %1073 = vmatprep.subr.bf16.mxu0 0
      %1074 = vmatpush1.bf16.msra.mxu0 0
      %1075 = vmatprep.subr.bf16.mxu0 0
      %1076 = vmatpush1.bf16.msra.mxu0 0
      %1077 = vmatprep.subr.bf16.mxu0 0
      %1078 = vmatpush1.bf16.msra.mxu0 0
      %1079 = vmatprep.subr.bf16.mxu0 0
      %1080 = vmatpush1.bf16.msra.mxu0 0
      %1081 = vmatprep.mubr.bf16.mxu0 0
      %1082 = vmatmul.mubr.bf16.gmra.mrb[0].mxu0 %v1047
      %v1083 = vpop.f32.mrb[0].mxu0
      %v1084 = vadd.f32 %v1032, %v1083
      %v1085 = vpop.f32.mrb[0].mxu0
      %v1086 = vpop.f32.mrb[0].mxu0
      %v1087 = vpop.f32.mrb[0].mxu0
      %1088 = vdwg.mxu0
      %v1089 = vadd.f32 %v1084, %v417
      %v1090 = vld [vmem:[%s9] sm:$0x1]
      %v1091 = vld [vmem:[%s10] sm:$0x1]
      %v1092 = vsel %vm445, %v1089, 0.0
      %1093 = vadd.xlane.f32.xlu0 %v1092
      %v1094 = vpop.xlane.xlu0 %1093
      %v1095 = vrcp.pop 32.0
      %v1096 = vmul.f32 %v1094, %v1095
      %v1097 = vsub.f32 %v1089, %v1096
      %v1098 = vmul.f32 %v1097, %v1097
      %v1099 = vsel %vm445, %v1098, 0.0
      %1100 = vadd.xlane.f32.xlu0 %v1099
      %v1101 = vpop.xlane.xlu0 %1100
      %v1102 = vmul.f32 %v1101, %v1095
      %v1103 = vadd.f32 %v1102, 1e-05
      %v1104 = vrsqrt.pop %v1103
      %v1105 = vmul.f32 %v1097, %v1104
      %v1107 = vlaneseq
      %v1108 = vshrl.u32 %v1107, 7
      %v1109 = vsub.s32 0, %v1108
      %v1110 = vrot.slane %v1090, %v1109
      %v1112 = vmul.f32 %v1105, %v1110
      %v1114 = vlaneseq
      %v1115 = vshrl.u32 %v1114, 7
      %v1116 = vsub.s32 0, %v1115
      %v1117 = vrot.slane %v1091, %v1116
      %v1119 = vadd.f32 %v1112, %v1117
      %1120 = vst.msk [vmem:[%s415] sm:$0xff] %vm445, %v1119
      %p1121 = scmp.lt.s32.totalorder %s22, 1
      %s1122 = scalar_select %p1121, %s22, 1
      %s1123 = smul.addr %s1122, 8
      %s1124 = scalar_lea.vmem %s11, %s1123
      // Predicated region
      $region65: #{transformer_forward.11} parent=63 // pred_check
        %p1125 = pneg %p286
      $region66: #{transformer_forward.11} parent=63 // pred_check_branch
        %1127 = sbr.rel (%p1125) target = $region68
      $region67: #{transformer_forward.11} parent=63 // pred_region
        _
      $region68: #{transformer_forward.11} parent=63 // pred_fallthru
        _
    $region64: #{transformer_forward.11} parent=5 // pred_fallthru
      _
    %p1128 = scmp.le.s32.totalorder 2, %s17
    // Predicated region
    $region69: #{transformer_forward.11} parent=5 // pred_check
      %p1129 = pneg %p1128
    $region70: #{transformer_forward.11} parent=5 // pred_check_branch
      %1131 = sbr.rel (%p1129) target = $region72
    $region71: #{transformer_forward.11} parent=5 // pred_region
      %s1132 = ssub.s32 %s17, 2
      // Predicated region
      $region73: #{transformer_forward.11} parent=71 // pred_check
        %p1133 = pneg %p292
      $region74: #{transformer_forward.11} parent=71 // pred_check_branch
        %1135 = sbr.rel (%p1133) target = $region76
      $region75: #{transformer_forward.11} parent=71 // pred_region
        %p1136 = scmp.lt.s32.totalorder %s23, 1
        %s1137 = scalar_select %p1136, %s23, 1
        %s1138 = smul.addr %s1137, 8
        %s1139 = scalar_lea.vmem %s11, %s1138
      $region76: #{transformer_forward.11} parent=71 // pred_fallthru
        _
    $region72: #{transformer_forward.11} parent=5 // pred_fallthru
      _
  $region6: #{transformer_forward.11} parent=0 // loop_footer
    %s21 = sadd.s32 1, %s17
  $region7: #{transformer_forward.11} parent=0 // loop_footer_branch
    %16 = sbr.rel target = $region3
  $region8: #{transformer_forward.11} parent=0 // loop_exit
    _

// kernel: transformer_forward.12
$region0: #{transformer_forward.12}
  #allocation0 [shape = 'u32[]', space=smem, size = 0x4, offset = 0x4, fixed_abs, tag = 'smem constant byte address 0x4 - core index']
  #allocation1 [shape = 'u32[144,128]{1,0:T(1,128)}', space=vmem, size = 0x12000, scoped, tag = 'internal scratch']
  %s0 = inlined_call_operand.vmem [shape: f32[16,32], index: 0, kind: input, shape index: {}]
  %s1 = inlined_call_operand.vmem [shape: bf16[32,2048], index: 1, kind: input, shape index: {}]
  %s2 = inlined_call_operand.vmem [shape: f32[1,2048], index: 2, kind: input, shape index: {}]
  %s3 = inlined_call_operand.vmem [shape: bf16[2048,32], index: 3, kind: input, shape index: {}]
  %s4 = inlined_call_operand.vmem [shape: f32[1,32], index: 4, kind: input, shape index: {}]
  %s5 = inlined_call_operand.vmem [shape: f32[1,32], index: 5, kind: input, shape index: {}]
  %s6 = inlined_call_operand.vmem [shape: f32[1,32], index: 6, kind: input, shape index: {}]
  %s7 = inlined_call_operand.vmem [shape: f32[16,32], index: 7, kind: output, shape index: {}]
  %s8 = sld [smem:[#allocation0]]
  $region38: #{transformer_forward.12} parent=0
    _
  %s10 = ssub.s32 1, %s8
  %s11 = scalar_select 0, %s10, %s8
  // Predicated region
  $region2: #{transformer_forward.12} parent=0 // pred_check
    _
  $region3: #{transformer_forward.12} parent=0 // pred_check_branch
    %13 = sbr.rel (0) target = $region5
  $region4: #{transformer_forward.12} parent=0 // pred_region
    _
  $region5: #{transformer_forward.12} parent=0 // pred_fallthru
    _
  // Predicated region
  $region6: #{transformer_forward.12} parent=0 // pred_check
    _
  $region7: #{transformer_forward.12} parent=0 // pred_check_branch
    %15 = sbr.rel (0) target = $region9
  $region8: #{transformer_forward.12} parent=0 // pred_region
    _
  $region9: #{transformer_forward.12} parent=0 // pred_fallthru
    _
  // Predicated region
  $region10: #{transformer_forward.12} parent=0 // pred_check
    _
  $region11: #{transformer_forward.12} parent=0 // pred_check_branch
    %17 = sbr.rel (0) target = $region13
  $region12: #{transformer_forward.12} parent=0 // pred_region
    _
  $region13: #{transformer_forward.12} parent=0 // pred_fallthru
    _
  // Predicated region
  $region14: #{transformer_forward.12} parent=0 // pred_check
    _
  $region15: #{transformer_forward.12} parent=0 // pred_check_branch
    %19 = sbr.rel (0) target = $region17
  $region16: #{transformer_forward.12} parent=0 // pred_region
    _
  $region17: #{transformer_forward.12} parent=0 // pred_fallthru
    _
  // Predicated region
  $region18: #{transformer_forward.12} parent=0 // pred_check
    _
  $region19: #{transformer_forward.12} parent=0 // pred_check_branch
    %21 = sbr.rel (0) target = $region21
  $region20: #{transformer_forward.12} parent=0 // pred_region
    _
  $region21: #{transformer_forward.12} parent=0 // pred_fallthru
    _
  // Predicated region
  $region22: #{transformer_forward.12} parent=0 // pred_check
    _
  $region23: #{transformer_forward.12} parent=0 // pred_check_branch
    %23 = sbr.rel (0) target = $region25
  $region24: #{transformer_forward.12} parent=0 // pred_region
    _
  $region25: #{transformer_forward.12} parent=0 // pred_fallthru
    _
  // Predicated region
  $region26: #{transformer_forward.12} parent=0 // pred_check
    _
  $region27: #{transformer_forward.12} parent=0 // pred_check_branch
    %25 = sbr.rel (0) target = $region29
  $region28: #{transformer_forward.12} parent=0 // pred_region
    _
  $region29: #{transformer_forward.12} parent=0 // pred_fallthru
    _
  %v27 = vld [vmem:[%s0] sm:$0xff]
  %v28 = vld [vmem:[%s0 + $0x8] sm:$0xff]
  %v29 = vpack.c.bf16 %v28, %v27
  %v30 = vld [vmem:[%s1] sm:$0xff]
  %v31 = vld [vmem:[%s1 + $0x8] sm:$0xff]
  %v32 = vld [vmem:[%s1 + $0x10] sm:$0xff]
  %v33 = vld [vmem:[%s1 + $0x18] sm:$0xff]
  %v34 = vld [vmem:[%s1 + $0x20] sm:$0xff]
  %v35 = vld [vmem:[%s1 + $0x28] sm:$0xff]
  %v36 = vld [vmem:[%s1 + $0x30] sm:$0xff]
  %v37 = vld [vmem:[%s1 + $0x38] sm:$0xff]
  %v38 = vld [vmem:[%s1 + $0x40] sm:$0xff]
  %v39 = vld [vmem:[%s1 + $0x48] sm:$0xff]
  %v40 = vld [vmem:[%s1 + $0x50] sm:$0xff]
  %v41 = vld [vmem:[%s1 + $0x58] sm:$0xff]
  %v42 = vld [vmem:[%s1 + $0x60] sm:$0xff]
  %v43 = vld [vmem:[%s1 + $0x68] sm:$0xff]
  %v44 = vld [vmem:[%s1 + $0x70] sm:$0xff]
  %v45 = vld [vmem:[%s1 + $0x78] sm:$0xff]
  %v46 = vld [vmem:[%s1 + $0x80] sm:$0xff]
  %v47 = vld [vmem:[%s1 + $0x88] sm:$0xff]
  %v48 = vld [vmem:[%s1 + $0x90] sm:$0xff]
  %v49 = vld [vmem:[%s1 + $0x98] sm:$0xff]
  %v50 = vld [vmem:[%s1 + $0xa0] sm:$0xff]
  %v51 = vld [vmem:[%s1 + $0xa8] sm:$0xff]
  %v52 = vld [vmem:[%s1 + $0xb0] sm:$0xff]
  %v53 = vld [vmem:[%s1 + $0xb8] sm:$0xff]
  %v54 = vld [vmem:[%s1 + $0xc0] sm:$0xff]
  %v55 = vld [vmem:[%s1 + $0xc8] sm:$0xff]
  %v56 = vld [vmem:[%s1 + $0xd0] sm:$0xff]
  %v57 = vld [vmem:[%s1 + $0xd8] sm:$0xff]
  %v58 = vld [vmem:[%s1 + $0xe0] sm:$0xff]
  %v59 = vld [vmem:[%s1 + $0xe8] sm:$0xff]
  %v60 = vld [vmem:[%s1 + $0xf0] sm:$0xff]
  %v61 = vld [vmem:[%s1 + $0xf8] sm:$0xff]
  %v62 = vld [vmem:[%s2] sm:$0xff]
  %v63 = vld [vmem:[%s2 + $0x8] sm:$0xff]
  %v66 = vlaneseq
  %v67 = vshrl.u32 %v66, 7
  %v68 = vsub.s32 0, %v67
  %v69 = vrot.slane %v62, %v68
  %v70 = vlaneseq
  %v71 = vshrl.u32 %v70, 7
  %v72 = vsub.s32 1, %v71
  %v73 = vrot.slane %v62, %v72
  %v74 = vlaneseq
  %v75 = vshrl.u32 %v74, 7
  %v76 = vsub.s32 2, %v75
  %v77 = vrot.slane %v62, %v76
  %v78 = vlaneseq
  %v79 = vshrl.u32 %v78, 7
  %v80 = vsub.s32 3, %v79
  %v81 = vrot.slane %v62, %v80
  %v82 = vlaneseq
  %v83 = vshrl.u32 %v82, 7
  %v84 = vsub.s32 4, %v83
  %v85 = vrot.slane %v62, %v84
  %v86 = vlaneseq
  %v87 = vshrl.u32 %v86, 7
  %v88 = vsub.s32 5, %v87
  %v89 = vrot.slane %v62, %v88
  %v90 = vlaneseq
  %v91 = vshrl.u32 %v90, 7
  %v92 = vsub.s32 6, %v91
  %v93 = vrot.slane %v62, %v92
  %v94 = vlaneseq
  %v95 = vshrl.u32 %v94, 7
  %v96 = vsub.s32 7, %v95
  %v97 = vrot.slane %v62, %v96
  %v98 = vlaneseq
  %v99 = vshrl.u32 %v98, 7
  %v100 = vsub.s32 0, %v99
  %v101 = vrot.slane %v63, %v100
  %v102 = vlaneseq
  %v103 = vshrl.u32 %v102, 7
  %v104 = vsub.s32 1, %v103
  %v105 = vrot.slane %v63, %v104
  %v106 = vlaneseq
  %v107 = vshrl.u32 %v106, 7
  %v108 = vsub.s32 2, %v107
  %v109 = vrot.slane %v63, %v108
  %v110 = vlaneseq
  %v111 = vshrl.u32 %v110, 7
  %v112 = vsub.s32 3, %v111
  %v113 = vrot.slane %v63, %v112
  %v114 = vlaneseq
  %v115 = vshrl.u32 %v114, 7
  %v116 = vsub.s32 4, %v115
  %v117 = vrot.slane %v63, %v116
  %v118 = vlaneseq
  %v119 = vshrl.u32 %v118, 7
  %v120 = vsub.s32 5, %v119
  %v121 = vrot.slane %v63, %v120
  %v122 = vlaneseq
  %v123 = vshrl.u32 %v122, 7
  %v124 = vsub.s32 6, %v123
  %v125 = vrot.slane %v63, %v124
  %v126 = vlaneseq
  %v127 = vshrl.u32 %v126, 7
  %v128 = vsub.s32 7, %v127
  %v129 = vrot.slane %v63, %v128
  %v178 = vunpack.c.l.b16 %v30
  %v179 = vunpack.c.h.b16 %v30
  %v180 = vunpack.c.l.b16 %v31
  %v181 = vunpack.c.h.b16 %v31
  %v182 = vunpack.c.l.b16 %v32
  %v183 = vunpack.c.h.b16 %v32
  %v184 = vunpack.c.l.b16 %v33
  %v185 = vunpack.c.h.b16 %v33
  %v186 = vunpack.c.l.b16 %v34
  %v187 = vunpack.c.h.b16 %v34
  %v188 = vunpack.c.l.b16 %v35
  %v189 = vunpack.c.h.b16 %v35
  %v190 = vunpack.c.l.b16 %v36
  %v191 = vunpack.c.h.b16 %v36
  %v192 = vunpack.c.l.b16 %v37
  %v193 = vunpack.c.h.b16 %v37
  %v194 = vunpack.c.l.b16 %v38
  %v195 = vunpack.c.h.b16 %v38
  %v196 = vunpack.c.l.b16 %v39
  %v197 = vunpack.c.h.b16 %v39
  %v198 = vunpack.c.l.b16 %v40
  %v199 = vunpack.c.h.b16 %v40
  %v200 = vunpack.c.l.b16 %v41
  %v201 = vunpack.c.h.b16 %v41
  %v202 = vunpack.c.l.b16 %v42
  %v203 = vunpack.c.h.b16 %v42
  %v204 = vunpack.c.l.b16 %v43
  %v205 = vunpack.c.h.b16 %v43
  %v206 = vunpack.c.l.b16 %v44
  %v207 = vunpack.c.h.b16 %v44
  %v208 = vunpack.c.l.b16 %v45
  %v209 = vunpack.c.h.b16 %v45
  %v210 = vunpack.c.l.b16 %v46
  %v211 = vunpack.c.h.b16 %v46
  %v212 = vunpack.c.l.b16 %v47
  %v213 = vunpack.c.h.b16 %v47
  %v214 = vunpack.c.l.b16 %v48
  %v215 = vunpack.c.h.b16 %v48
  %v216 = vunpack.c.l.b16 %v49
  %v217 = vunpack.c.h.b16 %v49
  %v218 = vunpack.c.l.b16 %v50
  %v219 = vunpack.c.h.b16 %v50
  %v220 = vunpack.c.l.b16 %v51
  %v221 = vunpack.c.h.b16 %v51
  %v222 = vunpack.c.l.b16 %v52
  %v223 = vunpack.c.h.b16 %v52
  %v224 = vunpack.c.l.b16 %v53
  %v225 = vunpack.c.h.b16 %v53
  %v226 = vunpack.c.l.b16 %v54
  %v227 = vunpack.c.h.b16 %v54
  %v228 = vunpack.c.l.b16 %v55
  %v229 = vunpack.c.h.b16 %v55
  %v230 = vunpack.c.l.b16 %v56
  %v231 = vunpack.c.h.b16 %v56
  %v232 = vunpack.c.l.b16 %v57
  %v233 = vunpack.c.h.b16 %v57
  %v234 = vunpack.c.l.b16 %v58
  %v235 = vunpack.c.h.b16 %v58
  %v236 = vunpack.c.l.b16 %v59
  %v237 = vunpack.c.h.b16 %v59
  %v238 = vunpack.c.l.b16 %v60
  %v239 = vunpack.c.h.b16 %v60
  %v240 = vunpack.c.l.b16 %v61
  %v241 = vunpack.c.h.b16 %v61
  %v242 = vpack.c.b16 %v194, %v178
  %v243 = vpack.c.b16 %v195, %v179
  %v244 = vpack.c.b16 %v196, %v180
  %v245 = vpack.c.b16 %v197, %v181
  %v246 = vpack.c.b16 %v198, %v182
  %v247 = vpack.c.b16 %v199, %v183
  %v248 = vpack.c.b16 %v200, %v184
  %v249 = vpack.c.b16 %v201, %v185
  %v250 = vpack.c.b16 %v202, %v186
  %v251 = vpack.c.b16 %v203, %v187
  %v252 = vpack.c.b16 %v204, %v188
  %v253 = vpack.c.b16 %v205, %v189
  %v254 = vpack.c.b16 %v206, %v190
  %v255 = vpack.c.b16 %v207, %v191
  %v256 = vpack.c.b16 %v208, %v192
  %v257 = vpack.c.b16 %v209, %v193
  %v258 = vpack.c.b16 %v226, %v210
  %v259 = vpack.c.b16 %v227, %v211
  %v260 = vpack.c.b16 %v228, %v212
  %v261 = vpack.c.b16 %v229, %v213
  %v262 = vpack.c.b16 %v230, %v214
  %v263 = vpack.c.b16 %v231, %v215
  %v264 = vpack.c.b16 %v232, %v216
  %v265 = vpack.c.b16 %v233, %v217
  %v266 = vpack.c.b16 %v234, %v218
  %v267 = vpack.c.b16 %v235, %v219
  %v268 = vpack.c.b16 %v236, %v220
  %v269 = vpack.c.b16 %v237, %v221
  %v270 = vpack.c.b16 %v238, %v222
  %v271 = vpack.c.b16 %v239, %v223
  %v272 = vpack.c.b16 %v240, %v224
  %v273 = vpack.c.b16 %v241, %v225
  %vm306 = vcmask 261120
  %v308 = vsel %vm306, %v29, 0
  %310 = vmatprep.subr.bf16.mxu0 %v243
  %311 = vmatpush1.bf16.msra.mxu0 %v242
  %312 = vmatprep.subr.bf16.mxu0 %v259
  %313 = vmatpush1.bf16.msra.mxu0 %v258
  %314 = vmatprep.subr.bf16.mxu0 0
  %315 = vmatpush1.bf16.msra.mxu0 0
  %316 = vmatprep.subr.bf16.mxu0 0
  %317 = vmatpush1.bf16.msra.mxu0 0
  %318 = vmatprep.subr.bf16.mxu0 0
  %319 = vmatpush1.bf16.msra.mxu0 0
  %320 = vmatprep.subr.bf16.mxu0 0
  %321 = vmatpush1.bf16.msra.mxu0 0
  %322 = vmatprep.subr.bf16.mxu0 0
  %323 = vmatpush1.bf16.msra.mxu0 0
  %324 = vmatprep.subr.bf16.mxu0 0
  %325 = vmatpush1.bf16.msra.mxu0 0
  %326 = vmatprep.subr.bf16.mxu0 0
  %327 = vmatpush1.bf16.msra.mxu0 0
  %328 = vmatprep.subr.bf16.mxu0 0
  %329 = vmatpush1.bf16.msra.mxu0 0
  %330 = vmatprep.subr.bf16.mxu0 0
  %331 = vmatpush1.bf16.msra.mxu0 0
  %332 = vmatprep.subr.bf16.mxu0 0
  %333 = vmatpush1.bf16.msra.mxu0 0
  %334 = vmatprep.subr.bf16.mxu0 0
  %335 = vmatpush1.bf16.msra.mxu0 0
  %336 = vmatprep.subr.bf16.mxu0 0
  %337 = vmatpush1.bf16.msra.mxu0 0
  %338 = vmatprep.subr.bf16.mxu0 0
  %339 = vmatpush1.bf16.msra.mxu0 0
  %340 = vmatprep.subr.bf16.mxu0 0
  %341 = vmatpush1.bf16.msra.mxu0 0
  %342 = vmatprep.mubr.bf16.mxu0 0
  %343 = vmatmul.mubr.bf16.gmra.mrb[0].mxu0 %v308
  %v344 = vpop.f32.mrb[0].mxu0
  %v345 = vadd.f32 %v69, %v344
  %v346 = vpop.f32.mrb[0].mxu0
  %v347 = vadd.f32 %v73, %v346
  %v348 = vpop.f32.mrb[0].mxu0
  %v349 = vadd.f32 %v69, %v348
  %v350 = vpop.f32.mrb[0].mxu0
  %v351 = vadd.f32 %v73, %v350
  %352 = vdwg.mxu0
  %353 = vmatprep.subr.bf16.mxu0 %v245
  %354 = vmatpush1.bf16.msra.mxu0 %v244
  %355 = vmatprep.subr.bf16.mxu0 %v261
  %356 = vmatpush1.bf16.msra.mxu0 %v260
  %357 = vmatprep.subr.bf16.mxu0 0
  %358 = vmatpush1.bf16.msra.mxu0 0
  %359 = vmatprep.subr.bf16.mxu0 0
  %360 = vmatpush1.bf16.msra.mxu0 0
  %361 = vmatprep.subr.bf16.mxu0 0
  %362 = vmatpush1.bf16.msra.mxu0 0
  %363 = vmatprep.subr.bf16.mxu0 0
  %364 = vmatpush1.bf16.msra.mxu0 0
  %365 = vmatprep.subr.bf16.mxu0 0
  %366 = vmatpush1.bf16.msra.mxu0 0
  %367 = vmatprep.subr.bf16.mxu0 0
  %368 = vmatpush1.bf16.msra.mxu0 0
  %369 = vmatprep.subr.bf16.mxu0 0
  %370 = vmatpush1.bf16.msra.mxu0 0
  %371 = vmatprep.subr.bf16.mxu0 0
  %372 = vmatpush1.bf16.msra.mxu0 0
  %373 = vmatprep.subr.bf16.mxu0 0
  %374 = vmatpush1.bf16.msra.mxu0 0
  %375 = vmatprep.subr.bf16.mxu0 0
  %376 = vmatpush1.bf16.msra.mxu0 0
  %377 = vmatprep.subr.bf16.mxu0 0
  %378 = vmatpush1.bf16.msra.mxu0 0
  %379 = vmatprep.subr.bf16.mxu0 0
  %380 = vmatpush1.bf16.msra.mxu0 0
  %381 = vmatprep.subr.bf16.mxu0 0
  %382 = vmatpush1.bf16.msra.mxu0 0
  %383 = vmatprep.subr.bf16.mxu0 0
  %384 = vmatpush1.bf16.msra.mxu0 0
  %385 = vmatprep.mubr.bf16.mxu0 0
  %386 = vmatmul.mubr.bf16.gmra.mrb[0].mxu0 %v308
  %v387 = vpop.f32.mrb[0].mxu0
  %v388 = vadd.f32 %v77, %v387
  %v389 = vpop.f32.mrb[0].mxu0
  %v390 = vadd.f32 %v81, %v389
  %v391 = vpop.f32.mrb[0].mxu0
  %v392 = vadd.f32 %v77, %v391
  %v393 = vpop.f32.mrb[0].mxu0
  %v394 = vadd.f32 %v81, %v393
  %395 = vdwg.mxu0
  %396 = vmatprep.subr.bf16.mxu0 %v247
  %397 = vmatpush1.bf16.msra.mxu0 %v246
  %398 = vmatprep.subr.bf16.mxu0 %v263
  %399 = vmatpush1.bf16.msra.mxu0 %v262
  %400 = vmatprep.subr.bf16.mxu0 0
  %401 = vmatpush1.bf16.msra.mxu0 0
  %402 = vmatprep.subr.bf16.mxu0 0
  %403 = vmatpush1.bf16.msra.mxu0 0
  %404 = vmatprep.subr.bf16.mxu0 0
  %405 = vmatpush1.bf16.msra.mxu0 0
  %406 = vmatprep.subr.bf16.mxu0 0
  %407 = vmatpush1.bf16.msra.mxu0 0
  %408 = vmatprep.subr.bf16.mxu0 0
  %409 = vmatpush1.bf16.msra.mxu0 0
  %410 = vmatprep.subr.bf16.mxu0 0
  %411 = vmatpush1.bf16.msra.mxu0 0
  %412 = vmatprep.subr.bf16.mxu0 0
  %413 = vmatpush1.bf16.msra.mxu0 0
  %414 = vmatprep.subr.bf16.mxu0 0
  %415 = vmatpush1.bf16.msra.mxu0 0
  %416 = vmatprep.subr.bf16.mxu0 0
  %417 = vmatpush1.bf16.msra.mxu0 0
  %418 = vmatprep.subr.bf16.mxu0 0
  %419 = vmatpush1.bf16.msra.mxu0 0
  %420 = vmatprep.subr.bf16.mxu0 0
  %421 = vmatpush1.bf16.msra.mxu0 0
  %422 = vmatprep.subr.bf16.mxu0 0
  %423 = vmatpush1.bf16.msra.mxu0 0
  %424 = vmatprep.subr.bf16.mxu0 0
  %425 = vmatpush1.bf16.msra.mxu0 0
  %426 = vmatprep.subr.bf16.mxu0 0
  %427 = vmatpush1.bf16.msra.mxu0 0
  %428 = vmatprep.mubr.bf16.mxu0 0
  %429 = vmatmul.mubr.bf16.gmra.mrb[0].mxu0 %v308
  %v430 = vpop.f32.mrb[0].mxu0
  %v431 = vadd.f32 %v85, %v430
  %v432 = vpop.f32.mrb[0].mxu0
  %v433 = vadd.f32 %v89, %v432
  %v434 = vpop.f32.mrb[0].mxu0
  %v435 = vadd.f32 %v85, %v434
  %v436 = vpop.f32.mrb[0].mxu0
  %v437 = vadd.f32 %v89, %v436
  %438 = vdwg.mxu0
  %439 = vmatprep.subr.bf16.mxu0 %v249
  %440 = vmatpush1.bf16.msra.mxu0 %v248
  %441 = vmatprep.subr.bf16.mxu0 %v265
  %442 = vmatpush1.bf16.msra.mxu0 %v264
  %443 = vmatprep.subr.bf16.mxu0 0
  %444 = vmatpush1.bf16.msra.mxu0 0
  %445 = vmatprep.subr.bf16.mxu0 0
  %446 = vmatpush1.bf16.msra.mxu0 0
  %447 = vmatprep.subr.bf16.mxu0 0
  %448 = vmatpush1.bf16.msra.mxu0 0
  %449 = vmatprep.subr.bf16.mxu0 0
  %450 = vmatpush1.bf16.msra.mxu0 0
  %451 = vmatprep.subr.bf16.mxu0 0
  %452 = vmatpush1.bf16.msra.mxu0 0
  %453 = vmatprep.subr.bf16.mxu0 0
  %454 = vmatpush1.bf16.msra.mxu0 0
  %455 = vmatprep.subr.bf16.mxu0 0
  %456 = vmatpush1.bf16.msra.mxu0 0
  %457 = vmatprep.subr.bf16.mxu0 0
  %458 = vmatpush1.bf16.msra.mxu0 0
  %459 = vmatprep.subr.bf16.mxu0 0
  %460 = vmatpush1.bf16.msra.mxu0 0
  %461 = vmatprep.subr.bf16.mxu0 0
  %462 = vmatpush1.bf16.msra.mxu0 0
  %463 = vmatprep.subr.bf16.mxu0 0
  %464 = vmatpush1.bf16.msra.mxu0 0
  %465 = vmatprep.subr.bf16.mxu0 0
  %466 = vmatpush1.bf16.msra.mxu0 0
  %467 = vmatprep.subr.bf16.mxu0 0
  %468 = vmatpush1.bf16.msra.mxu0 0
  %469 = vmatprep.subr.bf16.mxu0 0
  %470 = vmatpush1.bf16.msra.mxu0 0
  %471 = vmatprep.mubr.bf16.mxu0 0
  %472 = vmatmul.mubr.bf16.gmra.mrb[0].mxu0 %v308
  %v473 = vpop.f32.mrb[0].mxu0
  %v474 = vadd.f32 %v93, %v473
  %v475 = vpop.f32.mrb[0].mxu0
  %v476 = vadd.f32 %v97, %v475
  %v477 = vpop.f32.mrb[0].mxu0
  %v478 = vadd.f32 %v93, %v477
  %v479 = vpop.f32.mrb[0].mxu0
  %v480 = vadd.f32 %v97, %v479
  %481 = vdwg.mxu0
  %482 = vmatprep.subr.bf16.mxu0 %v251
  %483 = vmatpush1.bf16.msra.mxu0 %v250
  %484 = vmatprep.subr.bf16.mxu0 %v267
  %485 = vmatpush1.bf16.msra.mxu0 %v266
  %486 = vmatprep.subr.bf16.mxu0 0
  %487 = vmatpush1.bf16.msra.mxu0 0
  %488 = vmatprep.subr.bf16.mxu0 0
  %489 = vmatpush1.bf16.msra.mxu0 0
  %490 = vmatprep.subr.bf16.mxu0 0
  %491 = vmatpush1.bf16.msra.mxu0 0
  %492 = vmatprep.subr.bf16.mxu0 0
  %493 = vmatpush1.bf16.msra.mxu0 0
  %494 = vmatprep.subr.bf16.mxu0 0
  %495 = vmatpush1.bf16.msra.mxu0 0
  %496 = vmatprep.subr.bf16.mxu0 0
  %497 = vmatpush1.bf16.msra.mxu0 0
  %498 = vmatprep.subr.bf16.mxu0 0
  %499 = vmatpush1.bf16.msra.mxu0 0
  %500 = vmatprep.subr.bf16.mxu0 0
  %501 = vmatpush1.bf16.msra.mxu0 0
  %502 = vmatprep.subr.bf16.mxu0 0
  %503 = vmatpush1.bf16.msra.mxu0 0
  %504 = vmatprep.subr.bf16.mxu0 0
  %505 = vmatpush1.bf16.msra.mxu0 0
  %506 = vmatprep.subr.bf16.mxu0 0
  %507 = vmatpush1.bf16.msra.mxu0 0
  %508 = vmatprep.subr.bf16.mxu0 0
  %509 = vmatpush1.bf16.msra.mxu0 0
  %510 = vmatprep.subr.bf16.mxu0 0
  %511 = vmatpush1.bf16.msra.mxu0 0
  %512 = vmatprep.subr.bf16.mxu0 0
  %513 = vmatpush1.bf16.msra.mxu0 0
  %514 = vmatprep.mubr.bf16.mxu0 0
  %515 = vmatmul.mubr.bf16.gmra.mrb[0].mxu0 %v308
  %v516 = vpop.f32.mrb[0].mxu0
  %v517 = vadd.f32 %v101, %v516
  %v518 = vpop.f32.mrb[0].mxu0
  %v519 = vadd.f32 %v105, %v518
  %v520 = vpop.f32.mrb[0].mxu0
  %v521 = vadd.f32 %v101, %v520
  %v522 = vpop.f32.mrb[0].mxu0
  %v523 = vadd.f32 %v105, %v522
  %524 = vdwg.mxu0
  %525 = vmatprep.subr.bf16.mxu0 %v253
  %526 = vmatpush1.bf16.msra.mxu0 %v252
  %527 = vmatprep.subr.bf16.mxu0 %v269
  %528 = vmatpush1.bf16.msra.mxu0 %v268
  %529 = vmatprep.subr.bf16.mxu0 0
  %530 = vmatpush1.bf16.msra.mxu0 0
  %531 = vmatprep.subr.bf16.mxu0 0
  %532 = vmatpush1.bf16.msra.mxu0 0
  %533 = vmatprep.subr.bf16.mxu0 0
  %534 = vmatpush1.bf16.msra.mxu0 0
  %535 = vmatprep.subr.bf16.mxu0 0
  %536 = vmatpush1.bf16.msra.mxu0 0
  %537 = vmatprep.subr.bf16.mxu0 0
  %538 = vmatpush1.bf16.msra.mxu0 0
  %539 = vmatprep.subr.bf16.mxu0 0
  %540 = vmatpush1.bf16.msra.mxu0 0
  %541 = vmatprep.subr.bf16.mxu0 0
  %542 = vmatpush1.bf16.msra.mxu0 0
  %543 = vmatprep.subr.bf16.mxu0 0
  %544 = vmatpush1.bf16.msra.mxu0 0
  %545 = vmatprep.subr.bf16.mxu0 0
  %546 = vmatpush1.bf16.msra.mxu0 0
  %547 = vmatprep.subr.bf16.mxu0 0
  %548 = vmatpush1.bf16.msra.mxu0 0
  %549 = vmatprep.subr.bf16.mxu0 0
  %550 = vmatpush1.bf16.msra.mxu0 0
  %551 = vmatprep.subr.bf16.mxu0 0
  %552 = vmatpush1.bf16.msra.mxu0 0
  %553 = vmatprep.subr.bf16.mxu0 0
  %554 = vmatpush1.bf16.msra.mxu0 0
  %555 = vmatprep.subr.bf16.mxu0 0
  %556 = vmatpush1.bf16.msra.mxu0 0
  %557 = vmatprep.mubr.bf16.mxu0 0
  %558 = vmatmul.mubr.bf16.gmra.mrb[0].mxu0 %v308
  %v559 = vpop.f32.mrb[0].mxu0
  %v560 = vadd.f32 %v109, %v559
  %v561 = vpop.f32.mrb[0].mxu0
  %v562 = vadd.f32 %v113, %v561
  %v563 = vpop.f32.mrb[0].mxu0
  %v564 = vadd.f32 %v109, %v563
  %v565 = vpop.f32.mrb[0].mxu0
  %v566 = vadd.f32 %v113, %v565
  %567 = vdwg.mxu0
  %568 = vmatprep.subr.bf16.mxu0 %v255
  %569 = vmatpush1.bf16.msra.mxu0 %v254
  %570 = vmatprep.subr.bf16.mxu0 %v271
  %571 = vmatpush1.bf16.msra.mxu0 %v270
  %572 = vmatprep.subr.bf16.mxu0 0
  %573 = vmatpush1.bf16.msra.mxu0 0
  %574 = vmatprep.subr.bf16.mxu0 0
  %575 = vmatpush1.bf16.msra.mxu0 0
  %576 = vmatprep.subr.bf16.mxu0 0
  %577 = vmatpush1.bf16.msra.mxu0 0
  %578 = vmatprep.subr.bf16.mxu0 0
  %579 = vmatpush1.bf16.msra.mxu0 0
  %580 = vmatprep.subr.bf16.mxu0 0
  %581 = vmatpush1.bf16.msra.mxu0 0
  %582 = vmatprep.subr.bf16.mxu0 0
  %583 = vmatpush1.bf16.msra.mxu0 0
  %584 = vmatprep.subr.bf16.mxu0 0
  %585 = vmatpush1.bf16.msra.mxu0 0
  %586 = vmatprep.subr.bf16.mxu0 0
  %587 = vmatpush1.bf16.msra.mxu0 0
  %588 = vmatprep.subr.bf16.mxu0 0
  %589 = vmatpush1.bf16.msra.mxu0 0
  %590 = vmatprep.subr.bf16.mxu0 0
  %591 = vmatpush1.bf16.msra.mxu0 0
  %592 = vmatprep.subr.bf16.mxu0 0
  %593 = vmatpush1.bf16.msra.mxu0 0
  %594 = vmatprep.subr.bf16.mxu0 0
  %595 = vmatpush1.bf16.msra.mxu0 0
  %596 = vmatprep.subr.bf16.mxu0 0
  %597 = vmatpush1.bf16.msra.mxu0 0
  %598 = vmatprep.subr.bf16.mxu0 0
  %599 = vmatpush1.bf16.msra.mxu0 0
  %600 = vmatprep.mubr.bf16.mxu0 0
  %601 = vmatmul.mubr.bf16.gmra.mrb[0].mxu0 %v308
  %v602 = vpop.f32.mrb[0].mxu0
  %v603 = vadd.f32 %v117, %v602
  %v604 = vpop.f32.mrb[0].mxu0
  %v605 = vadd.f32 %v121, %v604
  %v606 = vpop.f32.mrb[0].mxu0
  %v607 = vadd.f32 %v117, %v606
  %v608 = vpop.f32.mrb[0].mxu0
  %v609 = vadd.f32 %v121, %v608
  %610 = vdwg.mxu0
  %611 = vmatprep.subr.bf16.mxu0 %v257
  %612 = vmatpush1.bf16.msra.mxu0 %v256
  %613 = vmatprep.subr.bf16.mxu0 %v273
  %614 = vmatpush1.bf16.msra.mxu0 %v272
  %615 = vmatprep.subr.bf16.mxu0 0
  %616 = vmatpush1.bf16.msra.mxu0 0
  %617 = vmatprep.subr.bf16.mxu0 0
  %618 = vmatpush1.bf16.msra.mxu0 0
  %619 = vmatprep.subr.bf16.mxu0 0
  %620 = vmatpush1.bf16.msra.mxu0 0
  %621 = vmatprep.subr.bf16.mxu0 0
  %622 = vmatpush1.bf16.msra.mxu0 0
  %623 = vmatprep.subr.bf16.mxu0 0
  %624 = vmatpush1.bf16.msra.mxu0 0
  %625 = vmatprep.subr.bf16.mxu0 0
  %626 = vmatpush1.bf16.msra.mxu0 0
  %627 = vmatprep.subr.bf16.mxu0 0
  %628 = vmatpush1.bf16.msra.mxu0 0
  %629 = vmatprep.subr.bf16.mxu0 0
  %630 = vmatpush1.bf16.msra.mxu0 0
  %631 = vmatprep.subr.bf16.mxu0 0
  %632 = vmatpush1.bf16.msra.mxu0 0
  %633 = vmatprep.subr.bf16.mxu0 0
  %634 = vmatpush1.bf16.msra.mxu0 0
  %635 = vmatprep.subr.bf16.mxu0 0
  %636 = vmatpush1.bf16.msra.mxu0 0
  %637 = vmatprep.subr.bf16.mxu0 0
  %638 = vmatpush1.bf16.msra.mxu0 0
  %639 = vmatprep.subr.bf16.mxu0 0
  %640 = vmatpush1.bf16.msra.mxu0 0
  %641 = vmatprep.subr.bf16.mxu0 0
  %642 = vmatpush1.bf16.msra.mxu0 0
  %643 = vmatprep.mubr.bf16.mxu0 0
  %644 = vmatmul.mubr.bf16.gmra.mrb[0].mxu0 %v308
  %v645 = vpop.f32.mrb[0].mxu0
  %v646 = vadd.f32 %v125, %v645
  %v647 = vpop.f32.mrb[0].mxu0
  %v648 = vadd.f32 %v129, %v647
  %v649 = vpop.f32.mrb[0].mxu0
  %v650 = vadd.f32 %v125, %v649
  %v651 = vpop.f32.mrb[0].mxu0
  %v652 = vadd.f32 %v129, %v651
  %653 = vdwg.mxu0
  %v654 = vmax.f32 %v345, 0.0
  %v655 = vmax.f32 %v347, 0.0
  %v656 = vmax.f32 %v388, 0.0
  %v657 = vmax.f32 %v390, 0.0
  %v658 = vmax.f32 %v431, 0.0
  %v659 = vmax.f32 %v433, 0.0
  %v660 = vmax.f32 %v474, 0.0
  %v661 = vmax.f32 %v476, 0.0
  %v662 = vmax.f32 %v517, 0.0
  %v663 = vmax.f32 %v519, 0.0
  %v664 = vmax.f32 %v560, 0.0
  %v665 = vmax.f32 %v562, 0.0
  %v666 = vmax.f32 %v603, 0.0
  %v667 = vmax.f32 %v605, 0.0
  %v668 = vmax.f32 %v646, 0.0
  %v669 = vmax.f32 %v648, 0.0
  %v670 = vmax.f32 %v349, 0.0
  %v671 = vmax.f32 %v351, 0.0
  %v672 = vmax.f32 %v392, 0.0
  %v673 = vmax.f32 %v394, 0.0
  %v674 = vmax.f32 %v435, 0.0
  %v675 = vmax.f32 %v437, 0.0
  %v676 = vmax.f32 %v478, 0.0
  %v677 = vmax.f32 %v480, 0.0
  %v678 = vmax.f32 %v521, 0.0
  %v679 = vmax.f32 %v523, 0.0
  %v680 = vmax.f32 %v564, 0.0
  %v681 = vmax.f32 %v566, 0.0
  %v682 = vmax.f32 %v607, 0.0
  %v683 = vmax.f32 %v609, 0.0
  %v684 = vmax.f32 %v650, 0.0
  %v685 = vmax.f32 %v652, 0.0
  %v686 = vpack.c.bf16 %v670, %v654
  %v687 = vpack.c.bf16 %v671, %v655
  %v688 = vpack.c.bf16 %v672, %v656
  %v689 = vpack.c.bf16 %v673, %v657
  %v690 = vpack.c.bf16 %v674, %v658
  %v691 = vpack.c.bf16 %v675, %v659
  %v692 = vpack.c.bf16 %v676, %v660
  %v693 = vpack.c.bf16 %v677, %v661
  %v694 = vpack.c.bf16 %v678, %v662
  %v695 = vpack.c.bf16 %v679, %v663
  %v696 = vpack.c.bf16 %v680, %v664
  %v697 = vpack.c.bf16 %v681, %v665
  %v698 = vpack.c.bf16 %v682, %v666
  %v699 = vpack.c.bf16 %v683, %v667
  %v700 = vpack.c.bf16 %v684, %v668
  %v701 = vpack.c.bf16 %v685, %v669
  %v702 = vld [vmem:[%s3] sm:$0xf]
  %v703 = vld [vmem:[%s3 + $0x4] sm:$0xf]
  %v704 = vld [vmem:[%s3 + $0x8] sm:$0xf]
  %v705 = vld [vmem:[%s3 + $0xc] sm:$0xf]
  %v706 = vld [vmem:[%s3 + $0x10] sm:$0xf]
  %v707 = vld [vmem:[%s3 + $0x14] sm:$0xf]
  %v708 = vld [vmem:[%s3 + $0x18] sm:$0xf]
  %v709 = vld [vmem:[%s3 + $0x1c] sm:$0xf]
  %v710 = vld [vmem:[%s3 + $0x20] sm:$0xf]
  %v711 = vld [vmem:[%s3 + $0x24] sm:$0xf]
  %v712 = vld [vmem:[%s3 + $0x28] sm:$0xf]
  %v713 = vld [vmem:[%s3 + $0x2c] sm:$0xf]
  %v714 = vld [vmem:[%s3 + $0x30] sm:$0xf]
  %v715 = vld [vmem:[%s3 + $0x34] sm:$0xf]
  %v716 = vld [vmem:[%s3 + $0x38] sm:$0xf]
  %v717 = vld [vmem:[%s3 + $0x3c] sm:$0xf]
  %v718 = vld [vmem:[%s3 + $0x40] sm:$0xf]
  %v719 = vld [vmem:[%s3 + $0x44] sm:$0xf]
  %v720 = vld [vmem:[%s3 + $0x48] sm:$0xf]
  %v721 = vld [vmem:[%s3 + $0x4c] sm:$0xf]
  %v722 = vld [vmem:[%s3 + $0x50] sm:$0xf]
  %v723 = vld [vmem:[%s3 + $0x54] sm:$0xf]
  %v724 = vld [vmem:[%s3 + $0x58] sm:$0xf]
  %v725 = vld [vmem:[%s3 + $0x5c] sm:$0xf]
  %v726 = vld [vmem:[%s3 + $0x60] sm:$0xf]
  %v727 = vld [vmem:[%s3 + $0x64] sm:$0xf]
  %v728 = vld [vmem:[%s3 + $0x68] sm:$0xf]
  %v729 = vld [vmem:[%s3 + $0x6c] sm:$0xf]
  %v730 = vld [vmem:[%s3 + $0x70] sm:$0xf]
  %v731 = vld [vmem:[%s3 + $0x74] sm:$0xf]
  %v732 = vld [vmem:[%s3 + $0x78] sm:$0xf]
  %v733 = vld [vmem:[%s3 + $0x7c] sm:$0xf]
  %v734 = vld [vmem:[%s3 + $0x80] sm:$0xf]
  %v735 = vld [vmem:[%s3 + $0x84] sm:$0xf]
  %v736 = vld [vmem:[%s3 + $0x88] sm:$0xf]
  %v737 = vld [vmem:[%s3 + $0x8c] sm:$0xf]
  %v738 = vld [vmem:[%s3 + $0x90] sm:$0xf]
  %v739 = vld [vmem:[%s3 + $0x94] sm:$0xf]
  %v740 = vld [vmem:[%s3 + $0x98] sm:$0xf]
  %v741 = vld [vmem:[%s3 + $0x9c] sm:$0xf]
  %v742 = vld [vmem:[%s3 + $0xa0] sm:$0xf]
  %v743 = vld [vmem:[%s3 + $0xa4] sm:$0xf]
  %v744 = vld [vmem:[%s3 + $0xa8] sm:$0xf]
  %v745 = vld [vmem:[%s3 + $0xac] sm:$0xf]
  %v746 = vld [vmem:[%s3 + $0xb0] sm:$0xf]
  %v747 = vld [vmem:[%s3 + $0xb4] sm:$0xf]
  %v748 = vld [vmem:[%s3 + $0xb8] sm:$0xf]
  %v749 = vld [vmem:[%s3 + $0xbc] sm:$0xf]
  %v750 = vld [vmem:[%s3 + $0xc0] sm:$0xf]
  %v751 = vld [vmem:[%s3 + $0xc4] sm:$0xf]
  %v752 = vld [vmem:[%s3 + $0xc8] sm:$0xf]
  %v753 = vld [vmem:[%s3 + $0xcc] sm:$0xf]
  %v754 = vld [vmem:[%s3 + $0xd0] sm:$0xf]
  %v755 = vld [vmem:[%s3 + $0xd4] sm:$0xf]
  %v756 = vld [vmem:[%s3 + $0xd8] sm:$0xf]
  %v757 = vld [vmem:[%s3 + $0xdc] sm:$0xf]
  %v758 = vld [vmem:[%s3 + $0xe0] sm:$0xf]
  %v759 = vld [vmem:[%s3 + $0xe4] sm:$0xf]
  %v760 = vld [vmem:[%s3 + $0xe8] sm:$0xf]
  %v761 = vld [vmem:[%s3 + $0xec] sm:$0xf]
  %v762 = vld [vmem:[%s3 + $0xf0] sm:$0xf]
  %v763 = vld [vmem:[%s3 + $0xf4] sm:$0xf]
  %v764 = vld [vmem:[%s3 + $0xf8] sm:$0xf]
  %v765 = vld [vmem:[%s3 + $0xfc] sm:$0xf]
  %v766 = vld [vmem:[%s3 + $0x100] sm:$0xf]
  %v767 = vld [vmem:[%s3 + $0x104] sm:$0xf]
  %v768 = vld [vmem:[%s3 + $0x108] sm:$0xf]
  %v769 = vld [vmem:[%s3 + $0x10c] sm:$0xf]
  %v770 = vld [vmem:[%s3 + $0x110] sm:$0xf]
  %v771 = vld [vmem:[%s3 + $0x114] sm:$0xf]
  %v772 = vld [vmem:[%s3 + $0x118] sm:$0xf]
  %v773 = vld [vmem:[%s3 + $0x11c] sm:$0xf]
  %v774 = vld [vmem:[%s3 + $0x120] sm:$0xf]
  %v775 = vld [vmem:[%s3 + $0x124] sm:$0xf]
  %v776 = vld [vmem:[%s3 + $0x128] sm:$0xf]
  %v777 = vld [vmem:[%s3 + $0x12c] sm:$0xf]
  %v778 = vld [vmem:[%s3 + $0x130] sm:$0xf]
  %v779 = vld [vmem:[%s3 + $0x134] sm:$0xf]
  %v780 = vld [vmem:[%s3 + $0x138] sm:$0xf]
  %v781 = vld [vmem:[%s3 + $0x13c] sm:$0xf]
  %v782 = vld [vmem:[%s3 + $0x140] sm:$0xf]
  %v783 = vld [vmem:[%s3 + $0x144] sm:$0xf]
  %v784 = vld [vmem:[%s3 + $0x148] sm:$0xf]
  %v785 = vld [vmem:[%s3 + $0x14c] sm:$0xf]
  %v786 = vld [vmem:[%s3 + $0x150] sm:$0xf]
  %v787 = vld [vmem:[%s3 + $0x154] sm:$0xf]
  %v788 = vld [vmem:[%s3 + $0x158] sm:$0xf]
  %v789 = vld [vmem:[%s3 + $0x15c] sm:$0xf]
  %v790 = vld [vmem:[%s3 + $0x160] sm:$0xf]
  %v791 = vld [vmem:[%s3 + $0x164] sm:$0xf]
  %v792 = vld [vmem:[%s3 + $0x168] sm:$0xf]
  %v793 = vld [vmem:[%s3 + $0x16c] sm:$0xf]
  %v794 = vld [vmem:[%s3 + $0x170] sm:$0xf]
  %v795 = vld [vmem:[%s3 + $0x174] sm:$0xf]
  %v796 = vld [vmem:[%s3 + $0x178] sm:$0xf]
  %v797 = vld [vmem:[%s3 + $0x17c] sm:$0xf]
  %v798 = vld [vmem:[%s3 + $0x180] sm:$0xf]
  %v799 = vld [vmem:[%s3 + $0x184] sm:$0xf]
  %v800 = vld [vmem:[%s3 + $0x188] sm:$0xf]
  %v801 = vld [vmem:[%s3 + $0x18c] sm:$0xf]
  %v802 = vld [vmem:[%s3 + $0x190] sm:$0xf]
  %v803 = vld [vmem:[%s3 + $0x194] sm:$0xf]
  %v804 = vld [vmem:[%s3 + $0x198] sm:$0xf]
  %v805 = vld [vmem:[%s3 + $0x19c] sm:$0xf]
  %v806 = vld [vmem:[%s3 + $0x1a0] sm:$0xf]
  %v807 = vld [vmem:[%s3 + $0x1a4] sm:$0xf]
  %v808 = vld [vmem:[%s3 + $0x1a8] sm:$0xf]
  %v809 = vld [vmem:[%s3 + $0x1ac] sm:$0xf]
  %v810 = vld [vmem:[%s3 + $0x1b0] sm:$0xf]
  %v811 = vld [vmem:[%s3 + $0x1b4] sm:$0xf]
  %v812 = vld [vmem:[%s3 + $0x1b8] sm:$0xf]
  %v813 = vld [vmem:[%s3 + $0x1bc] sm:$0xf]
  %v814 = vld [vmem:[%s3 + $0x1c0] sm:$0xf]
  %v815 = vld [vmem:[%s3 + $0x1c4] sm:$0xf]
  %v816 = vld [vmem:[%s3 + $0x1c8] sm:$0xf]
  %v817 = vld [vmem:[%s3 + $0x1cc] sm:$0xf]
  %v818 = vld [vmem:[%s3 + $0x1d0] sm:$0xf]
  %v819 = vld [vmem:[%s3 + $0x1d4] sm:$0xf]
  %v820 = vld [vmem:[%s3 + $0x1d8] sm:$0xf]
  %v821 = vld [vmem:[%s3 + $0x1dc] sm:$0xf]
  %v822 = vld [vmem:[%s3 + $0x1e0] sm:$0xf]
  %v823 = vld [vmem:[%s3 + $0x1e4] sm:$0xf]
  %v824 = vld [vmem:[%s3 + $0x1e8] sm:$0xf]
  %v825 = vld [vmem:[%s3 + $0x1ec] sm:$0xf]
  %v826 = vld [vmem:[%s3 + $0x1f0] sm:$0xf]
  %v827 = vld [vmem:[%s3 + $0x1f4] sm:$0xf]
  %v828 = vld [vmem:[%s3 + $0x1f8] sm:$0xf]
  %v829 = vld [vmem:[%s3 + $0x1fc] sm:$0xf]
  %v830 = vld [vmem:[%s3 + $0x200] sm:$0xf]
  %v831 = vld [vmem:[%s3 + $0x204] sm:$0xf]
  %v832 = vld [vmem:[%s3 + $0x208] sm:$0xf]
  %v833 = vld [vmem:[%s3 + $0x20c] sm:$0xf]
  %v834 = vld [vmem:[%s3 + $0x210] sm:$0xf]
  %v835 = vld [vmem:[%s3 + $0x214] sm:$0xf]
  %v836 = vld [vmem:[%s3 + $0x218] sm:$0xf]
  %v837 = vld [vmem:[%s3 + $0x21c] sm:$0xf]
  %v838 = vld [vmem:[%s3 + $0x220] sm:$0xf]
  %v839 = vld [vmem:[%s3 + $0x224] sm:$0xf]
  %v840 = vld [vmem:[%s3 + $0x228] sm:$0xf]
  %v841 = vld [vmem:[%s3 + $0x22c] sm:$0xf]
  %v842 = vld [vmem:[%s3 + $0x230] sm:$0xf]
  %v843 = vld [vmem:[%s3 + $0x234] sm:$0xf]
  %v844 = vld [vmem:[%s3 + $0x238] sm:$0xf]
  %v845 = vld [vmem:[%s3 + $0x23c] sm:$0xf]
  %v846 = vld [vmem:[%s3 + $0x240] sm:$0xf]
  %v847 = vld [vmem:[%s3 + $0x244] sm:$0xf]
  %v848 = vld [vmem:[%s3 + $0x248] sm:$0xf]
  %v849 = vld [vmem:[%s3 + $0x24c] sm:$0xf]
  %v850 = vld [vmem:[%s3 + $0x250] sm:$0xf]
  %v851 = vld [vmem:[%s3 + $0x254] sm:$0xf]
  %v852 = vld [vmem:[%s3 + $0x258] sm:$0xf]
  %v853 = vld [vmem:[%s3 + $0x25c] sm:$0xf]
  %v854 = vld [vmem:[%s3 + $0x260] sm:$0xf]
  %v855 = vld [vmem:[%s3 + $0x264] sm:$0xf]
  %v856 = vld [vmem:[%s3 + $0x268] sm:$0xf]
  %v857 = vld [vmem:[%s3 + $0x26c] sm:$0xf]
  %v858 = vld [vmem:[%s3 + $0x270] sm:$0xf]
  %v859 = vld [vmem:[%s3 + $0x274] sm:$0xf]
  %v860 = vld [vmem:[%s3 + $0x278] sm:$0xf]
  %v861 = vld [vmem:[%s3 + $0x27c] sm:$0xf]
  %v862 = vld [vmem:[%s3 + $0x280] sm:$0xf]
  %v863 = vld [vmem:[%s3 + $0x284] sm:$0xf]
  %v864 = vld [vmem:[%s3 + $0x288] sm:$0xf]
  %v865 = vld [vmem:[%s3 + $0x28c] sm:$0xf]
  %v866 = vld [vmem:[%s3 + $0x290] sm:$0xf]
  %v867 = vld [vmem:[%s3 + $0x294] sm:$0xf]
  %v868 = vld [vmem:[%s3 + $0x298] sm:$0xf]
  %v869 = vld [vmem:[%s3 + $0x29c] sm:$0xf]
  %v870 = vld [vmem:[%s3 + $0x2a0] sm:$0xf]
  %v871 = vld [vmem:[%s3 + $0x2a4] sm:$0xf]
  %v872 = vld [vmem:[%s3 + $0x2a8] sm:$0xf]
  %v873 = vld [vmem:[%s3 + $0x2ac] sm:$0xf]
  %v874 = vld [vmem:[%s3 + $0x2b0] sm:$0xf]
  %v875 = vld [vmem:[%s3 + $0x2b4] sm:$0xf]
  %v876 = vld [vmem:[%s3 + $0x2b8] sm:$0xf]
  %v877 = vld [vmem:[%s3 + $0x2bc] sm:$0xf]
  %v878 = vld [vmem:[%s3 + $0x2c0] sm:$0xf]
  %v879 = vld [vmem:[%s3 + $0x2c4] sm:$0xf]
  %v880 = vld [vmem:[%s3 + $0x2c8] sm:$0xf]
  %v881 = vld [vmem:[%s3 + $0x2cc] sm:$0xf]
  %v882 = vld [vmem:[%s3 + $0x2d0] sm:$0xf]
  %v883 = vld [vmem:[%s3 + $0x2d4] sm:$0xf]
  %v884 = vld [vmem:[%s3 + $0x2d8] sm:$0xf]
  %v885 = vld [vmem:[%s3 + $0x2dc] sm:$0xf]
  %v886 = vld [vmem:[%s3 + $0x2e0] sm:$0xf]
  %v887 = vld [vmem:[%s3 + $0x2e4] sm:$0xf]
  %v888 = vld [vmem:[%s3 + $0x2e8] sm:$0xf]
  %v889 = vld [vmem:[%s3 + $0x2ec] sm:$0xf]
  %v890 = vld [vmem:[%s3 + $0x2f0] sm:$0xf]
  %v891 = vld [vmem:[%s3 + $0x2f4] sm:$0xf]
  %v892 = vld [vmem:[%s3 + $0x2f8] sm:$0xf]
  %v893 = vld [vmem:[%s3 + $0x2fc] sm:$0xf]
  %v894 = vld [vmem:[%s3 + $0x300] sm:$0xf]
  %v895 = vld [vmem:[%s3 + $0x304] sm:$0xf]
  %v896 = vld [vmem:[%s3 + $0x308] sm:$0xf]
  %v897 = vld [vmem:[%s3 + $0x30c] sm:$0xf]
  %v898 = vld [vmem:[%s3 + $0x310] sm:$0xf]
  %v899 = vld [vmem:[%s3 + $0x314] sm:$0xf]
  %v900 = vld [vmem:[%s3 + $0x318] sm:$0xf]
  %v901 = vld [vmem:[%s3 + $0x31c] sm:$0xf]
  %v902 = vld [vmem:[%s3 + $0x320] sm:$0xf]
  %v903 = vld [vmem:[%s3 + $0x324] sm:$0xf]
  %v904 = vld [vmem:[%s3 + $0x328] sm:$0xf]
  %v905 = vld [vmem:[%s3 + $0x32c] sm:$0xf]
  %v906 = vld [vmem:[%s3 + $0x330] sm:$0xf]
  %v907 = vld [vmem:[%s3 + $0x334] sm:$0xf]
  %v908 = vld [vmem:[%s3 + $0x338] sm:$0xf]
  %v909 = vld [vmem:[%s3 + $0x33c] sm:$0xf]
  %v910 = vld [vmem:[%s3 + $0x340] sm:$0xf]
  %v911 = vld [vmem:[%s3 + $0x344] sm:$0xf]
  %v912 = vld [vmem:[%s3 + $0x348] sm:$0xf]
  %v913 = vld [vmem:[%s3 + $0x34c] sm:$0xf]
  %v914 = vld [vmem:[%s3 + $0x350] sm:$0xf]
  %v915 = vld [vmem:[%s3 + $0x354] sm:$0xf]
  %v916 = vld [vmem:[%s3 + $0x358] sm:$0xf]
  %v917 = vld [vmem:[%s3 + $0x35c] sm:$0xf]
  %v918 = vld [vmem:[%s3 + $0x360] sm:$0xf]
  %v919 = vld [vmem:[%s3 + $0x364] sm:$0xf]
  %v920 = vld [vmem:[%s3 + $0x368] sm:$0xf]
  %v921 = vld [vmem:[%s3 + $0x36c] sm:$0xf]
  %v922 = vld [vmem:[%s3 + $0x370] sm:$0xf]
  %v923 = vld [vmem:[%s3 + $0x374] sm:$0xf]
  %v924 = vld [vmem:[%s3 + $0x378] sm:$0xf]
  %v925 = vld [vmem:[%s3 + $0x37c] sm:$0xf]
  %v926 = vld [vmem:[%s3 + $0x380] sm:$0xf]
  %v927 = vld [vmem:[%s3 + $0x384] sm:$0xf]
  %v928 = vld [vmem:[%s3 + $0x388] sm:$0xf]
  %v929 = vld [vmem:[%s3 + $0x38c] sm:$0xf]
  %v930 = vld [vmem:[%s3 + $0x390] sm:$0xf]
  %v931 = vld [vmem:[%s3 + $0x394] sm:$0xf]
  %v932 = vld [vmem:[%s3 + $0x398] sm:$0xf]
  %v933 = vld [vmem:[%s3 + $0x39c] sm:$0xf]
  %v934 = vld [vmem:[%s3 + $0x3a0] sm:$0xf]
  %v935 = vld [vmem:[%s3 + $0x3a4] sm:$0xf]
  %v936 = vld [vmem:[%s3 + $0x3a8] sm:$0xf]
  %v937 = vld [vmem:[%s3 + $0x3ac] sm:$0xf]
  %v938 = vld [vmem:[%s3 + $0x3b0] sm:$0xf]
  %v939 = vld [vmem:[%s3 + $0x3b4] sm:$0xf]
  %v940 = vld [vmem:[%s3 + $0x3b8] sm:$0xf]
  %v941 = vld [vmem:[%s3 + $0x3bc] sm:$0xf]
  %v942 = vld [vmem:[%s3 + $0x3c0] sm:$0xf]
  %v943 = vld [vmem:[%s3 + $0x3c4] sm:$0xf]
  %v944 = vld [vmem:[%s3 + $0x3c8] sm:$0xf]
  %v945 = vld [vmem:[%s3 + $0x3cc] sm:$0xf]
  %v946 = vld [vmem:[%s3 + $0x3d0] sm:$0xf]
  %v947 = vld [vmem:[%s3 + $0x3d4] sm:$0xf]
  %v948 = vld [vmem:[%s3 + $0x3d8] sm:$0xf]
  %v949 = vld [vmem:[%s3 + $0x3dc] sm:$0xf]
  %v950 = vld [vmem:[%s3 + $0x3e0] sm:$0xf]
  %v951 = vld [vmem:[%s3 + $0x3e4] sm:$0xf]
  %v952 = vld [vmem:[%s3 + $0x3e8] sm:$0xf]
  %v953 = vld [vmem:[%s3 + $0x3ec] sm:$0xf]
  %v954 = vld [vmem:[%s3 + $0x3f0] sm:$0xf]
  %v955 = vld [vmem:[%s3 + $0x3f4] sm:$0xf]
  %v956 = vld [vmem:[%s3 + $0x3f8] sm:$0xf]
  %v957 = vld [vmem:[%s3 + $0x3fc] sm:$0xf]
  %v958 = vld [vmem:[%s4] sm:$0x1]
  %v960 = vlaneseq
  %v961 = vshrl.u32 %v960, 7
  %v962 = vsub.s32 0, %v961
  %v963 = vrot.slane %v958, %v962
  %v1221 = vunpack.c.l.b16 %v702
  %v1222 = vunpack.c.l.b16 %v703
  %v1223 = vunpack.c.l.b16 %v704
  %v1224 = vunpack.c.l.b16 %v705
  %v1225 = vunpack.c.l.b16 %v706
  %v1226 = vunpack.c.l.b16 %v707
  %v1227 = vunpack.c.l.b16 %v708
  %v1228 = vunpack.c.l.b16 %v709
  %v1229 = vunpack.c.l.b16 %v710
  %v1230 = vunpack.c.l.b16 %v711
  %v1231 = vunpack.c.l.b16 %v712
  %v1232 = vunpack.c.l.b16 %v713
  %v1233 = vunpack.c.l.b16 %v714
  %v1234 = vunpack.c.l.b16 %v715
  %v1235 = vunpack.c.l.b16 %v716
  %v1236 = vunpack.c.l.b16 %v717
  %v1237 = vunpack.c.l.b16 %v718
  %v1238 = vunpack.c.l.b16 %v719
  %v1239 = vunpack.c.l.b16 %v720
  %v1240 = vunpack.c.l.b16 %v721
  %v1241 = vunpack.c.l.b16 %v722
  %v1242 = vunpack.c.l.b16 %v723
  %v1243 = vunpack.c.l.b16 %v724
  %v1244 = vunpack.c.l.b16 %v725
  %v1245 = vunpack.c.l.b16 %v726
  %v1246 = vunpack.c.l.b16 %v727
  %v1247 = vunpack.c.l.b16 %v728
  %v1248 = vunpack.c.l.b16 %v729
  %v1249 = vunpack.c.l.b16 %v730
  %v1250 = vunpack.c.l.b16 %v731
  %v1251 = vunpack.c.l.b16 %v732
  %v1252 = vunpack.c.l.b16 %v733
  %v1253 = vunpack.c.l.b16 %v734
  %v1254 = vunpack.c.l.b16 %v735
  %v1255 = vunpack.c.l.b16 %v736
  %v1256 = vunpack.c.l.b16 %v737
  %v1257 = vunpack.c.l.b16 %v738
  %v1258 = vunpack.c.l.b16 %v739
  %v1259 = vunpack.c.l.b16 %v740
  %v1260 = vunpack.c.l.b16 %v741
  %v1261 = vunpack.c.l.b16 %v742
  %v1262 = vunpack.c.l.b16 %v743
  %v1263 = vunpack.c.l.b16 %v744
  %v1264 = vunpack.c.l.b16 %v745
  %v1265 = vunpack.c.l.b16 %v746
  %v1266 = vunpack.c.l.b16 %v747
  %v1267 = vunpack.c.l.b16 %v748
  %v1268 = vunpack.c.l.b16 %v749
  %v1269 = vunpack.c.l.b16 %v750
  %v1270 = vunpack.c.l.b16 %v751
  %v1271 = vunpack.c.l.b16 %v752
  %v1272 = vunpack.c.l.b16 %v753
  %v1273 = vunpack.c.l.b16 %v754
  %v1274 = vunpack.c.l.b16 %v755
  %v1275 = vunpack.c.l.b16 %v756
  %v1276 = vunpack.c.l.b16 %v757
  %v1277 = vunpack.c.l.b16 %v758
  %v1278 = vunpack.c.l.b16 %v759
  %v1279 = vunpack.c.l.b16 %v760
  %v1280 = vunpack.c.l.b16 %v761
  %v1281 = vunpack.c.l.b16 %v762
  %v1282 = vunpack.c.l.b16 %v763
  %v1283 = vunpack.c.l.b16 %v764
  %v1284 = vunpack.c.l.b16 %v765
  %v1285 = vunpack.c.l.b16 %v766
  %v1286 = vunpack.c.l.b16 %v767
  %v1287 = vunpack.c.l.b16 %v768
  %v1288 = vunpack.c.l.b16 %v769
  %v1289 = vunpack.c.l.b16 %v770
  %v1290 = vunpack.c.l.b16 %v771
  %v1291 = vunpack.c.l.b16 %v772
  %v1292 = vunpack.c.l.b16 %v773
  %v1293 = vunpack.c.l.b16 %v774
  %v1294 = vunpack.c.l.b16 %v775
  %v1295 = vunpack.c.l.b16 %v776
  %v1296 = vunpack.c.l.b16 %v777
  %v1297 = vunpack.c.l.b16 %v778
  %v1298 = vunpack.c.l.b16 %v779
  %v1299 = vunpack.c.l.b16 %v780
  %v1300 = vunpack.c.l.b16 %v781
  %v1301 = vunpack.c.l.b16 %v782
  %v1302 = vunpack.c.l.b16 %v783
  %v1303 = vunpack.c.l.b16 %v784
  %v1304 = vunpack.c.l.b16 %v785
  %v1305 = vunpack.c.l.b16 %v786
  %v1306 = vunpack.c.l.b16 %v787
  %v1307 = vunpack.c.l.b16 %v788
  %v1308 = vunpack.c.l.b16 %v789
  %v1309 = vunpack.c.l.b16 %v790
  %v1310 = vunpack.c.l.b16 %v791
  %v1311 = vunpack.c.l.b16 %v792
  %v1312 = vunpack.c.l.b16 %v793
  %v1313 = vunpack.c.l.b16 %v794
  %v1314 = vunpack.c.l.b16 %v795
  %v1315 = vunpack.c.l.b16 %v796
  %v1316 = vunpack.c.l.b16 %v797
  %v1317 = vunpack.c.l.b16 %v798
  %v1318 = vunpack.c.l.b16 %v799
  %v1319 = vunpack.c.l.b16 %v800
  %v1320 = vunpack.c.l.b16 %v801
  %v1321 = vunpack.c.l.b16 %v802
  %v1322 = vunpack.c.l.b16 %v803
  %v1323 = vunpack.c.l.b16 %v804
  %v1324 = vunpack.c.l.b16 %v805
  %v1325 = vunpack.c.l.b16 %v806
  %v1326 = vunpack.c.l.b16 %v807
  %v1327 = vunpack.c.l.b16 %v808
  %v1328 = vunpack.c.l.b16 %v809
  %v1329 = vunpack.c.l.b16 %v810
  %v1330 = vunpack.c.l.b16 %v811
  %v1331 = vunpack.c.l.b16 %v812
  %v1332 = vunpack.c.l.b16 %v813
  %v1333 = vunpack.c.l.b16 %v814
  %v1334 = vunpack.c.l.b16 %v815
  %v1335 = vunpack.c.l.b16 %v816
  %v1336 = vunpack.c.l.b16 %v817
  %v1337 = vunpack.c.l.b16 %v818
  %v1338 = vunpack.c.l.b16 %v819
  %v1339 = vunpack.c.l.b16 %v820
  %v1340 = vunpack.c.l.b16 %v821
  %v1341 = vunpack.c.l.b16 %v822
  %v1342 = vunpack.c.l.b16 %v823
  %v1343 = vunpack.c.l.b16 %v824
  %v1344 = vunpack.c.l.b16 %v825
  %v1345 = vunpack.c.l.b16 %v826
  %v1346 = vunpack.c.l.b16 %v827
  %v1347 = vunpack.c.l.b16 %v828
  %v1348 = vunpack.c.l.b16 %v829
  %v1349 = vunpack.c.l.b16 %v830
  %v1350 = vunpack.c.l.b16 %v831
  %v1351 = vunpack.c.l.b16 %v832
  %v1352 = vunpack.c.l.b16 %v833
  %v1353 = vunpack.c.l.b16 %v834
  %v1354 = vunpack.c.l.b16 %v835
  %v1355 = vunpack.c.l.b16 %v836
  %v1356 = vunpack.c.l.b16 %v837
  %v1357 = vunpack.c.l.b16 %v838
  %v1358 = vunpack.c.l.b16 %v839
  %v1359 = vunpack.c.l.b16 %v840
  %v1360 = vunpack.c.l.b16 %v841
  %v1361 = vunpack.c.l.b16 %v842
  %v1362 = vunpack.c.l.b16 %v843
  %v1363 = vunpack.c.l.b16 %v844
  %v1364 = vunpack.c.l.b16 %v845
  %v1365 = vunpack.c.l.b16 %v846
  %v1366 = vunpack.c.l.b16 %v847
  %v1367 = vunpack.c.l.b16 %v848
  %v1368 = vunpack.c.l.b16 %v849
  %v1369 = vunpack.c.l.b16 %v850
  %v1370 = vunpack.c.l.b16 %v851
  %v1371 = vunpack.c.l.b16 %v852
  %v1372 = vunpack.c.l.b16 %v853
  %v1373 = vunpack.c.l.b16 %v854
  %v1374 = vunpack.c.l.b16 %v855
  %v1375 = vunpack.c.l.b16 %v856
  %v1376 = vunpack.c.l.b16 %v857
  %v1377 = vunpack.c.l.b16 %v858
  %v1378 = vunpack.c.l.b16 %v859
  %v1379 = vunpack.c.l.b16 %v860
  %v1380 = vunpack.c.l.b16 %v861
  %v1381 = vunpack.c.l.b16 %v862
  %v1382 = vunpack.c.l.b16 %v863
  %v1383 = vunpack.c.l.b16 %v864
  %v1384 = vunpack.c.l.b16 %v865
  %v1385 = vunpack.c.l.b16 %v866
  %v1386 = vunpack.c.l.b16 %v867
  %v1387 = vunpack.c.l.b16 %v868
  %v1388 = vunpack.c.l.b16 %v869
  %v1389 = vunpack.c.l.b16 %v870
  %v1390 = vunpack.c.l.b16 %v871
  %v1391 = vunpack.c.l.b16 %v872
  %v1392 = vunpack.c.l.b16 %v873
  %v1393 = vunpack.c.l.b16 %v874
  %v1394 = vunpack.c.l.b16 %v875
  %v1395 = vunpack.c.l.b16 %v876
  %v1396 = vunpack.c.l.b16 %v877
  %v1397 = vunpack.c.l.b16 %v878
  %v1398 = vunpack.c.l.b16 %v879
  %v1399 = vunpack.c.l.b16 %v880
  %v1400 = vunpack.c.l.b16 %v881
  %v1401 = vunpack.c.l.b16 %v882
  %v1402 = vunpack.c.l.b16 %v883
  %v1403 = vunpack.c.l.b16 %v884
  %v1404 = vunpack.c.l.b16 %v885
  %v1405 = vunpack.c.l.b16 %v886
  %v1406 = vunpack.c.l.b16 %v887
  %v1407 = vunpack.c.l.b16 %v888
  %v1408 = vunpack.c.l.b16 %v889
  %v1409 = vunpack.c.l.b16 %v890
  %v1410 = vunpack.c.l.b16 %v891
  %v1411 = vunpack.c.l.b16 %v892
  %v1412 = vunpack.c.l.b16 %v893
  %v1413 = vunpack.c.l.b16 %v894
  %v1414 = vunpack.c.l.b16 %v895
  %v1415 = vunpack.c.l.b16 %v896
  %v1416 = vunpack.c.l.b16 %v897
  %v1417 = vunpack.c.l.b16 %v898
  %v1418 = vunpack.c.l.b16 %v899
  %v1419 = vunpack.c.l.b16 %v900
  %v1420 = vunpack.c.l.b16 %v901
  %v1421 = vunpack.c.l.b16 %v902
  %v1422 = vunpack.c.l.b16 %v903
  %v1423 = vunpack.c.l.b16 %v904
  %v1424 = vunpack.c.l.b16 %v905
  %v1425 = vunpack.c.l.b16 %v906
  %v1426 = vunpack.c.l.b16 %v907
  %v1427 = vunpack.c.l.b16 %v908
  %v1428 = vunpack.c.l.b16 %v909
  %v1429 = vunpack.c.l.b16 %v910
  %v1430 = vunpack.c.l.b16 %v911
  %v1431 = vunpack.c.l.b16 %v912
  %v1432 = vunpack.c.l.b16 %v913
  %v1433 = vunpack.c.l.b16 %v914
  %v1434 = vunpack.c.l.b16 %v915
  %v1435 = vunpack.c.l.b16 %v916
  %v1436 = vunpack.c.l.b16 %v917
  %v1437 = vunpack.c.l.b16 %v918
  %v1438 = vunpack.c.l.b16 %v919
  %v1439 = vunpack.c.l.b16 %v920
  %v1440 = vunpack.c.l.b16 %v921
  %v1441 = vunpack.c.l.b16 %v922
  %v1442 = vunpack.c.l.b16 %v923
  %v1443 = vunpack.c.l.b16 %v924
  %v1444 = vunpack.c.l.b16 %v925
  %v1445 = vunpack.c.l.b16 %v926
  %v1446 = vunpack.c.l.b16 %v927
  %v1447 = vunpack.c.l.b16 %v928
  %v1448 = vunpack.c.l.b16 %v929
  %v1449 = vunpack.c.l.b16 %v930
  %v1450 = vunpack.c.l.b16 %v931
  %v1451 = vunpack.c.l.b16 %v932
  %v1452 = vunpack.c.l.b16 %v933
  %v1453 = vunpack.c.l.b16 %v934
  %v1454 = vunpack.c.l.b16 %v935
  %v1455 = vunpack.c.l.b16 %v936
  %v1456 = vunpack.c.l.b16 %v937
  %v1457 = vunpack.c.l.b16 %v938
  %v1458 = vunpack.c.l.b16 %v939
  %v1459 = vunpack.c.l.b16 %v940
  %v1460 = vunpack.c.l.b16 %v941
  %v1461 = vunpack.c.l.b16 %v942
  %v1462 = vunpack.c.l.b16 %v943
  %v1463 = vunpack.c.l.b16 %v944
  %v1464 = vunpack.c.l.b16 %v945
  %v1465 = vunpack.c.l.b16 %v946
  %v1466 = vunpack.c.l.b16 %v947
  %v1467 = vunpack.c.l.b16 %v948
  %v1468 = vunpack.c.l.b16 %v949
  %v1469 = vunpack.c.l.b16 %v950
  %v1470 = vunpack.c.l.b16 %v951
  %v1471 = vunpack.c.l.b16 %v952
  %v1472 = vunpack.c.l.b16 %v953
  %v1473 = vunpack.c.l.b16 %v954
  %v1474 = vunpack.c.l.b16 %v955
  %v1475 = vunpack.c.l.b16 %v956
  %v1476 = vunpack.c.l.b16 %v957
  %v1477 = vpack.c.b16 %v1222, %v1221
  %v1478 = vpack.c.b16 %v1224, %v1223
  %v1479 = vpack.c.b16 %v1226, %v1225
  %v1480 = vpack.c.b16 %v1228, %v1227
  %v1481 = vpack.c.b16 %v1230, %v1229
  %v1482 = vpack.c.b16 %v1232, %v1231
  %v1483 = vpack.c.b16 %v1234, %v1233
  %v1484 = vpack.c.b16 %v1236, %v1235
  %v1485 = vpack.c.b16 %v1238, %v1237
  %v1486 = vpack.c.b16 %v1240, %v1239
  %v1487 = vpack.c.b16 %v1242, %v1241
  %v1488 = vpack.c.b16 %v1244, %v1243
  %v1489 = vpack.c.b16 %v1246, %v1245
  %v1490 = vpack.c.b16 %v1248, %v1247
  %v1491 = vpack.c.b16 %v1250, %v1249
  %v1492 = vpack.c.b16 %v1252, %v1251
  %v1493 = vpack.c.b16 %v1254, %v1253
  %v1494 = vpack.c.b16 %v1256, %v1255
  %v1495 = vpack.c.b16 %v1258, %v1257
  %v1496 = vpack.c.b16 %v1260, %v1259
  %v1497 = vpack.c.b16 %v1262, %v1261
  %v1498 = vpack.c.b16 %v1264, %v1263
  %v1499 = vpack.c.b16 %v1266, %v1265
  %v1500 = vpack.c.b16 %v1268, %v1267
  %v1501 = vpack.c.b16 %v1270, %v1269
  %v1502 = vpack.c.b16 %v1272, %v1271
  %v1503 = vpack.c.b16 %v1274, %v1273
  %v1504 = vpack.c.b16 %v1276, %v1275
  %v1505 = vpack.c.b16 %v1278, %v1277
  %v1506 = vpack.c.b16 %v1280, %v1279
  %v1507 = vpack.c.b16 %v1282, %v1281
  %v1508 = vpack.c.b16 %v1284, %v1283
  %v1509 = vpack.c.b16 %v1286, %v1285
  %v1510 = vpack.c.b16 %v1288, %v1287
  %v1511 = vpack.c.b16 %v1290, %v1289
  %v1512 = vpack.c.b16 %v1292, %v1291
  %v1513 = vpack.c.b16 %v1294, %v1293
  %v1514 = vpack.c.b16 %v1296, %v1295
  %v1515 = vpack.c.b16 %v1298, %v1297
  %v1516 = vpack.c.b16 %v1300, %v1299
  %v1517 = vpack.c.b16 %v1302, %v1301
  %v1518 = vpack.c.b16 %v1304, %v1303
  %v1519 = vpack.c.b16 %v1306, %v1305
  %v1520 = vpack.c.b16 %v1308, %v1307
  %v1521 = vpack.c.b16 %v1310, %v1309
  %v1522 = vpack.c.b16 %v1312, %v1311
  %v1523 = vpack.c.b16 %v1314, %v1313
  %v1524 = vpack.c.b16 %v1316, %v1315
  %v1525 = vpack.c.b16 %v1318, %v1317
  %v1526 = vpack.c.b16 %v1320, %v1319
  %v1527 = vpack.c.b16 %v1322, %v1321
  %v1528 = vpack.c.b16 %v1324, %v1323
  %v1529 = vpack.c.b16 %v1326, %v1325
  %v1530 = vpack.c.b16 %v1328, %v1327
  %v1531 = vpack.c.b16 %v1330, %v1329
  %v1532 = vpack.c.b16 %v1332, %v1331
  %v1533 = vpack.c.b16 %v1334, %v1333
  %v1534 = vpack.c.b16 %v1336, %v1335
  %v1535 = vpack.c.b16 %v1338, %v1337
  %v1536 = vpack.c.b16 %v1340, %v1339
  %v1537 = vpack.c.b16 %v1342, %v1341
  %v1538 = vpack.c.b16 %v1344, %v1343
  %v1539 = vpack.c.b16 %v1346, %v1345
  %v1540 = vpack.c.b16 %v1348, %v1347
  %v1541 = vpack.c.b16 %v1350, %v1349
  %v1542 = vpack.c.b16 %v1352, %v1351
  %v1543 = vpack.c.b16 %v1354, %v1353
  %v1544 = vpack.c.b16 %v1356, %v1355
  %v1545 = vpack.c.b16 %v1358, %v1357
  %v1546 = vpack.c.b16 %v1360, %v1359
  %v1547 = vpack.c.b16 %v1362, %v1361
  %v1548 = vpack.c.b16 %v1364, %v1363
  %v1549 = vpack.c.b16 %v1366, %v1365
  %v1550 = vpack.c.b16 %v1368, %v1367
  %v1551 = vpack.c.b16 %v1370, %v1369
  %v1552 = vpack.c.b16 %v1372, %v1371
  %v1553 = vpack.c.b16 %v1374, %v1373
  %v1554 = vpack.c.b16 %v1376, %v1375
  %v1555 = vpack.c.b16 %v1378, %v1377
  %v1556 = vpack.c.b16 %v1380, %v1379
  %v1557 = vpack.c.b16 %v1382, %v1381
  %v1558 = vpack.c.b16 %v1384, %v1383
  %v1559 = vpack.c.b16 %v1386, %v1385
  %v1560 = vpack.c.b16 %v1388, %v1387
  %v1561 = vpack.c.b16 %v1390, %v1389
  %v1562 = vpack.c.b16 %v1392, %v1391
  %v1563 = vpack.c.b16 %v1394, %v1393
  %v1564 = vpack.c.b16 %v1396, %v1395
  %v1565 = vpack.c.b16 %v1398, %v1397
  %v1566 = vpack.c.b16 %v1400, %v1399
  %v1567 = vpack.c.b16 %v1402, %v1401
  %v1568 = vpack.c.b16 %v1404, %v1403
  %v1569 = vpack.c.b16 %v1406, %v1405
  %v1570 = vpack.c.b16 %v1408, %v1407
  %v1571 = vpack.c.b16 %v1410, %v1409
  %v1572 = vpack.c.b16 %v1412, %v1411
  %v1573 = vpack.c.b16 %v1414, %v1413
  %v1574 = vpack.c.b16 %v1416, %v1415
  %v1575 = vpack.c.b16 %v1418, %v1417
  %v1576 = vpack.c.b16 %v1420, %v1419
  %v1577 = vpack.c.b16 %v1422, %v1421
  %v1578 = vpack.c.b16 %v1424, %v1423
  %v1579 = vpack.c.b16 %v1426, %v1425
  %v1580 = vpack.c.b16 %v1428, %v1427
  %v1581 = vpack.c.b16 %v1430, %v1429
  %v1582 = vpack.c.b16 %v1432, %v1431
  %v1583 = vpack.c.b16 %v1434, %v1433
  %v1584 = vpack.c.b16 %v1436, %v1435
  %v1585 = vpack.c.b16 %v1438, %v1437
  %v1586 = vpack.c.b16 %v1440, %v1439
  %v1587 = vpack.c.b16 %v1442, %v1441
  %v1588 = vpack.c.b16 %v1444, %v1443
  %v1589 = vpack.c.b16 %v1446, %v1445
  %v1590 = vpack.c.b16 %v1448, %v1447
  %v1591 = vpack.c.b16 %v1450, %v1449
  %v1592 = vpack.c.b16 %v1452, %v1451
  %v1593 = vpack.c.b16 %v1454, %v1453
  %v1594 = vpack.c.b16 %v1456, %v1455
  %v1595 = vpack.c.b16 %v1458, %v1457
  %v1596 = vpack.c.b16 %v1460, %v1459
  %v1597 = vpack.c.b16 %v1462, %v1461
  %v1598 = vpack.c.b16 %v1464, %v1463
  %v1599 = vpack.c.b16 %v1466, %v1465
  %v1600 = vpack.c.b16 %v1468, %v1467
  %v1601 = vpack.c.b16 %v1470, %v1469
  %v1602 = vpack.c.b16 %v1472, %v1471
  %v1603 = vpack.c.b16 %v1474, %v1473
  %v1604 = vpack.c.b16 %v1476, %v1475
  %1733 = vmatprep.subr.bf16.mxu0 0
  %1734 = vmatpush1.bf16.msra.mxu0 %v1477
  %1735 = vmatprep.subr.bf16.mxu0 0
  %1736 = vmatpush1.bf16.msra.mxu0 %v1478
  %1737 = vmatprep.subr.bf16.mxu0 0
  %1738 = vmatpush1.bf16.msra.mxu0 %v1479
  %1739 = vmatprep.subr.bf16.mxu0 0
  %1740 = vmatpush1.bf16.msra.mxu0 %v1480
  %1741 = vmatprep.subr.bf16.mxu0 0
  %1742 = vmatpush1.bf16.msra.mxu0 %v1481
  %1743 = vmatprep.subr.bf16.mxu0 0
  %1744 = vmatpush1.bf16.msra.mxu0 %v1482
  %1745 = vmatprep.subr.bf16.mxu0 0
  %1746 = vmatpush1.bf16.msra.mxu0 %v1483
  %1747 = vmatprep.subr.bf16.mxu0 0
  %1748 = vmatpush1.bf16.msra.mxu0 %v1484
  %1749 = vmatprep.subr.bf16.mxu0 0
  %1750 = vmatpush1.bf16.msra.mxu0 %v1485
  %1751 = vmatprep.subr.bf16.mxu0 0
  %1752 = vmatpush1.bf16.msra.mxu0 %v1486
  %1753 = vmatprep.subr.bf16.mxu0 0
  %1754 = vmatpush1.bf16.msra.mxu0 %v1487
  %1755 = vmatprep.subr.bf16.mxu0 0
  %1756 = vmatpush1.bf16.msra.mxu0 %v1488
  %1757 = vmatprep.subr.bf16.mxu0 0
  %1758 = vmatpush1.bf16.msra.mxu0 %v1489
  %1759 = vmatprep.subr.bf16.mxu0 0
  %1760 = vmatpush1.bf16.msra.mxu0 %v1490
  %1761 = vmatprep.subr.bf16.mxu0 0
  %1762 = vmatpush1.bf16.msra.mxu0 %v1491
  %1763 = vmatprep.subr.bf16.mxu0 0
  %1764 = vmatpush1.bf16.msra.mxu0 %v1492
  %1765 = vmatprep.mubr.bf16.mxu0 %v687
  %1766 = vmatmul.mubr.bf16.gmra.mrb[0].mxu0 %v686
  %v1767 = vpop.f32.mrb[0].mxu0
  %v1768 = vadd.f32 %v963, %v1767
  %v1769 = vpop.f32.mrb[0].mxu0
  %v1770 = vpop.f32.mrb[0].mxu0
  %v1771 = vadd.f32 %v963, %v1770
  %v1772 = vpop.f32.mrb[0].mxu0
  %1773 = vdwg.mxu0
  %1774 = vmatprep.subr.bf16.mxu0 0
  %1775 = vmatpush1.bf16.msra.mxu0 %v1493
  %1776 = vmatprep.subr.bf16.mxu0 0
  %1777 = vmatpush1.bf16.msra.mxu0 %v1494
  %1778 = vmatprep.subr.bf16.mxu0 0
  %1779 = vmatpush1.bf16.msra.mxu0 %v1495
  %1780 = vmatprep.subr.bf16.mxu0 0
  %1781 = vmatpush1.bf16.msra.mxu0 %v1496
  %1782 = vmatprep.subr.bf16.mxu0 0
  %1783 = vmatpush1.bf16.msra.mxu0 %v1497
  %1784 = vmatprep.subr.bf16.mxu0 0
  %1785 = vmatpush1.bf16.msra.mxu0 %v1498
  %1786 = vmatprep.subr.bf16.mxu0 0
  %1787 = vmatpush1.bf16.msra.mxu0 %v1499
  %1788 = vmatprep.subr.bf16.mxu0 0
  %1789 = vmatpush1.bf16.msra.mxu0 %v1500
  %1790 = vmatprep.subr.bf16.mxu0 0
  %1791 = vmatpush1.bf16.msra.mxu0 %v1501
  %1792 = vmatprep.subr.bf16.mxu0 0
  %1793 = vmatpush1.bf16.msra.mxu0 %v1502
  %1794 = vmatprep.subr.bf16.mxu0 0
  %1795 = vmatpush1.bf16.msra.mxu0 %v1503
  %1796 = vmatprep.subr.bf16.mxu0 0
  %1797 = vmatpush1.bf16.msra.mxu0 %v1504
  %1798 = vmatprep.subr.bf16.mxu0 0
  %1799 = vmatpush1.bf16.msra.mxu0 %v1505
  %1800 = vmatprep.subr.bf16.mxu0 0
  %1801 = vmatpush1.bf16.msra.mxu0 %v1506
  %1802 = vmatprep.subr.bf16.mxu0 0
  %1803 = vmatpush1.bf16.msra.mxu0 %v1507
  %1804 = vmatprep.subr.bf16.mxu0 0
  %1805 = vmatpush1.bf16.msra.mxu0 %v1508
  %1806 = vmatprep.mubr.bf16.mxu0 %v689
  %1807 = vmatmul.mubr.bf16.gmra.mrb[0].mxu0 %v688
  %v1808 = vpop.f32.mrb[0].mxu0
  %v1809 = vadd.f32 %v1768, %v1808
  %v1810 = vpop.f32.mrb[0].mxu0
  %v1811 = vpop.f32.mrb[0].mxu0
  %v1812 = vadd.f32 %v1771, %v1811
  %v1813 = vpop.f32.mrb[0].mxu0
  %1814 = vdwg.mxu0
  %1815 = vmatprep.subr.bf16.mxu0 0
  %1816 = vmatpush1.bf16.msra.mxu0 %v1509
  %1817 = vmatprep.subr.bf16.mxu0 0
  %1818 = vmatpush1.bf16.msra.mxu0 %v1510
  %1819 = vmatprep.subr.bf16.mxu0 0
  %1820 = vmatpush1.bf16.msra.mxu0 %v1511
  %1821 = vmatprep.subr.bf16.mxu0 0
  %1822 = vmatpush1.bf16.msra.mxu0 %v1512
  %1823 = vmatprep.subr.bf16.mxu0 0
  %1824 = vmatpush1.bf16.msra.mxu0 %v1513
  %1825 = vmatprep.subr.bf16.mxu0 0
  %1826 = vmatpush1.bf16.msra.mxu0 %v1514
  %1827 = vmatprep.subr.bf16.mxu0 0
  %1828 = vmatpush1.bf16.msra.mxu0 %v1515
  %1829 = vmatprep.subr.bf16.mxu0 0
  %1830 = vmatpush1.bf16.msra.mxu0 %v1516
  %1831 = vmatprep.subr.bf16.mxu0 0
  %1832 = vmatpush1.bf16.msra.mxu0 %v1517
  %1833 = vmatprep.subr.bf16.mxu0 0
  %1834 = vmatpush1.bf16.msra.mxu0 %v1518
  %1835 = vmatprep.subr.bf16.mxu0 0
  %1836 = vmatpush1.bf16.msra.mxu0 %v1519
  %1837 = vmatprep.subr.bf16.mxu0 0
  %1838 = vmatpush1.bf16.msra.mxu0 %v1520
  %1839 = vmatprep.subr.bf16.mxu0 0
  %1840 = vmatpush1.bf16.msra.mxu0 %v1521
  %1841 = vmatprep.subr.bf16.mxu0 0
  %1842 = vmatpush1.bf16.msra.mxu0 %v1522
  %1843 = vmatprep.subr.bf16.mxu0 0
  %1844 = vmatpush1.bf16.msra.mxu0 %v1523
  %1845 = vmatprep.subr.bf16.mxu0 0
  %1846 = vmatpush1.bf16.msra.mxu0 %v1524
  %1847 = vmatprep.mubr.bf16.mxu0 %v691
  %1848 = vmatmul.mubr.bf16.gmra.mrb[0].mxu0 %v690
  %v1849 = vpop.f32.mrb[0].mxu0
  %v1850 = vadd.f32 %v1809, %v1849
  %v1851 = vpop.f32.mrb[0].mxu0
  %v1852 = vpop.f32.mrb[0].mxu0
  %v1853 = vadd.f32 %v1812, %v1852
  %v1854 = vpop.f32.mrb[0].mxu0
  %1855 = vdwg.mxu0
  %1856 = vmatprep.subr.bf16.mxu0 0
  %1857 = vmatpush1.bf16.msra.mxu0 %v1525
  %1858 = vmatprep.subr.bf16.mxu0 0
  %1859 = vmatpush1.bf16.msra.mxu0 %v1526
  %1860 = vmatprep.subr.bf16.mxu0 0
  %1861 = vmatpush1.bf16.msra.mxu0 %v1527
  %1862 = vmatprep.subr.bf16.mxu0 0
  %1863 = vmatpush1.bf16.msra.mxu0 %v1528
  %1864 = vmatprep.subr.bf16.mxu0 0
  %1865 = vmatpush1.bf16.msra.mxu0 %v1529
  %1866 = vmatprep.subr.bf16.mxu0 0
  %1867 = vmatpush1.bf16.msra.mxu0 %v1530
  %1868 = vmatprep.subr.bf16.mxu0 0
  %1869 = vmatpush1.bf16.msra.mxu0 %v1531
  %1870 = vmatprep.subr.bf16.mxu0 0
  %1871 = vmatpush1.bf16.msra.mxu0 %v1532
  %1872 = vmatprep.subr.bf16.mxu0 0
  %1873 = vmatpush1.bf16.msra.mxu0 %v1533
  %1874 = vmatprep.subr.bf16.mxu0 0
  %1875 = vmatpush1.bf16.msra.mxu0 %v1534
  %1876 = vmatprep.subr.bf16.mxu0 0
  %1877 = vmatpush1.bf16.msra.mxu0 %v1535
  %1878 = vmatprep.subr.bf16.mxu0 0
  %1879 = vmatpush1.bf16.msra.mxu0 %v1536
  %1880 = vmatprep.subr.bf16.mxu0 0
  %1881 = vmatpush1.bf16.msra.mxu0 %v1537
  %1882 = vmatprep.subr.bf16.mxu0 0
  %1883 = vmatpush1.bf16.msra.mxu0 %v1538
  %1884 = vmatprep.subr.bf16.mxu0 0
  %1885 = vmatpush1.bf16.msra.mxu0 %v1539
  %1886 = vmatprep.subr.bf16.mxu0 0
  %1887 = vmatpush1.bf16.msra.mxu0 %v1540
  %1888 = vmatprep.mubr.bf16.mxu0 %v693
  %1889 = vmatmul.mubr.bf16.gmra.mrb[0].mxu0 %v692
  %v1890 = vpop.f32.mrb[0].mxu0
  %v1891 = vadd.f32 %v1850, %v1890
  %v1892 = vpop.f32.mrb[0].mxu0
  %v1893 = vpop.f32.mrb[0].mxu0
  %v1894 = vadd.f32 %v1853, %v1893
  %v1895 = vpop.f32.mrb[0].mxu0
  %1896 = vdwg.mxu0
  %1897 = vmatprep.subr.bf16.mxu0 0
  %1898 = vmatpush1.bf16.msra.mxu0 %v1541
  %1899 = vmatprep.subr.bf16.mxu0 0
  %1900 = vmatpush1.bf16.msra.mxu0 %v1542
  %1901 = vmatprep.subr.bf16.mxu0 0
  %1902 = vmatpush1.bf16.msra.mxu0 %v1543
  %1903 = vmatprep.subr.bf16.mxu0 0
  %1904 = vmatpush1.bf16.msra.mxu0 %v1544
  %1905 = vmatprep.subr.bf16.mxu0 0
  %1906 = vmatpush1.bf16.msra.mxu0 %v1545
  %1907 = vmatprep.subr.bf16.mxu0 0
  %1908 = vmatpush1.bf16.msra.mxu0 %v1546
  %1909 = vmatprep.subr.bf16.mxu0 0
  %1910 = vmatpush1.bf16.msra.mxu0 %v1547
  %1911 = vmatprep.subr.bf16.mxu0 0
  %1912 = vmatpush1.bf16.msra.mxu0 %v1548
  %1913 = vmatprep.subr.bf16.mxu0 0
  %1914 = vmatpush1.bf16.msra.mxu0 %v1549
  %1915 = vmatprep.subr.bf16.mxu0 0
  %1916 = vmatpush1.bf16.msra.mxu0 %v1550
  %1917 = vmatprep.subr.bf16.mxu0 0
  %1918 = vmatpush1.bf16.msra.mxu0 %v1551
  %1919 = vmatprep.subr.bf16.mxu0 0
  %1920 = vmatpush1.bf16.msra.mxu0 %v1552
  %1921 = vmatprep.subr.bf16.mxu0 0
  %1922 = vmatpush1.bf16.msra.mxu0 %v1553
  %1923 = vmatprep.subr.bf16.mxu0 0
  %1924 = vmatpush1.bf16.msra.mxu0 %v1554
  %1925 = vmatprep.subr.bf16.mxu0 0
  %1926 = vmatpush1.bf16.msra.mxu0 %v1555
  %1927 = vmatprep.subr.bf16.mxu0 0
  %1928 = vmatpush1.bf16.msra.mxu0 %v1556
  %1929 = vmatprep.mubr.bf16.mxu0 %v695
  %1930 = vmatmul.mubr.bf16.gmra.mrb[0].mxu0 %v694
  %v1931 = vpop.f32.mrb[0].mxu0
  %v1932 = vadd.f32 %v1891, %v1931
  %v1933 = vpop.f32.mrb[0].mxu0
  %v1934 = vpop.f32.mrb[0].mxu0
  %v1935 = vadd.f32 %v1894, %v1934
  %v1936 = vpop.f32.mrb[0].mxu0
  %1937 = vdwg.mxu0
  %1938 = vmatprep.subr.bf16.mxu0 0
  %1939 = vmatpush1.bf16.msra.mxu0 %v1557
  %1940 = vmatprep.subr.bf16.mxu0 0
  %1941 = vmatpush1.bf16.msra.mxu0 %v1558
  %1942 = vmatprep.subr.bf16.mxu0 0
  %1943 = vmatpush1.bf16.msra.mxu0 %v1559
  %1944 = vmatprep.subr.bf16.mxu0 0
  %1945 = vmatpush1.bf16.msra.mxu0 %v1560
  %1946 = vmatprep.subr.bf16.mxu0 0
  %1947 = vmatpush1.bf16.msra.mxu0 %v1561
  %1948 = vmatprep.subr.bf16.mxu0 0
  %1949 = vmatpush1.bf16.msra.mxu0 %v1562
  %1950 = vmatprep.subr.bf16.mxu0 0
  %1951 = vmatpush1.bf16.msra.mxu0 %v1563
  %1952 = vmatprep.subr.bf16.mxu0 0
  %1953 = vmatpush1.bf16.msra.mxu0 %v1564
  %1954 = vmatprep.subr.bf16.mxu0 0
  %1955 = vmatpush1.bf16.msra.mxu0 %v1565
  %1956 = vmatprep.subr.bf16.mxu0 0
  %1957 = vmatpush1.bf16.msra.mxu0 %v1566
  %1958 = vmatprep.subr.bf16.mxu0 0
  %1959 = vmatpush1.bf16.msra.mxu0 %v1567
  %1960 = vmatprep.subr.bf16.mxu0 0
  %1961 = vmatpush1.bf16.msra.mxu0 %v1568
  %1962 = vmatprep.subr.bf16.mxu0 0
  %1963 = vmatpush1.bf16.msra.mxu0 %v1569
  %1964 = vmatprep.subr.bf16.mxu0 0
  %1965 = vmatpush1.bf16.msra.mxu0 %v1570
  %1966 = vmatprep.subr.bf16.mxu0 0
  %1967 = vmatpush1.bf16.msra.mxu0 %v1571
  %1968 = vmatprep.subr.bf16.mxu0 0
  %1969 = vmatpush1.bf16.msra.mxu0 %v1572
  %1970 = vmatprep.mubr.bf16.mxu0 %v697
  %1971 = vmatmul.mubr.bf16.gmra.mrb[0].mxu0 %v696
  %v1972 = vpop.f32.mrb[0].mxu0
  %v1973 = vadd.f32 %v1932, %v1972
  %v1974 = vpop.f32.mrb[0].mxu0
  %v1975 = vpop.f32.mrb[0].mxu0
  %v1976 = vadd.f32 %v1935, %v1975
  %v1977 = vpop.f32.mrb[0].mxu0
  %1978 = vdwg.mxu0
  %1979 = vmatprep.subr.bf16.mxu0 0
  %1980 = vmatpush1.bf16.msra.mxu0 %v1573
  %1981 = vmatprep.subr.bf16.mxu0 0
  %1982 = vmatpush1.bf16.msra.mxu0 %v1574
  %1983 = vmatprep.subr.bf16.mxu0 0
  %1984 = vmatpush1.bf16.msra.mxu0 %v1575
  %1985 = vmatprep.subr.bf16.mxu0 0
  %1986 = vmatpush1.bf16.msra.mxu0 %v1576
  %1987 = vmatprep.subr.bf16.mxu0 0
  %1988 = vmatpush1.bf16.msra.mxu0 %v1577
  %1989 = vmatprep.subr.bf16.mxu0 0
  %1990 = vmatpush1.bf16.msra.mxu0 %v1578
  %1991 = vmatprep.subr.bf16.mxu0 0
  %1992 = vmatpush1.bf16.msra.mxu0 %v1579
  %1993 = vmatprep.subr.bf16.mxu0 0
  %1994 = vmatpush1.bf16.msra.mxu0 %v1580
  %1995 = vmatprep.subr.bf16.mxu0 0
  %1996 = vmatpush1.bf16.msra.mxu0 %v1581
  %1997 = vmatprep.subr.bf16.mxu0 0
  %1998 = vmatpush1.bf16.msra.mxu0 %v1582
  %1999 = vmatprep.subr.bf16.mxu0 0
  %2000 = vmatpush1.bf16.msra.mxu0 %v1583
  %2001 = vmatprep.subr.bf16.mxu0 0
  %2002 = vmatpush1.bf16.msra.mxu0 %v1584
  %2003 = vmatprep.subr.bf16.mxu0 0
  %2004 = vmatpush1.bf16.msra.mxu0 %v1585
  %2005 = vmatprep.subr.bf16.mxu0 0
  %2006 = vmatpush1.bf16.msra.mxu0 %v1586
  %2007 = vmatprep.subr.bf16.mxu0 0
  %2008 = vmatpush1.bf16.msra.mxu0 %v1587
  %2009 = vmatprep.subr.bf16.mxu0 0
  %2010 = vmatpush1.bf16.msra.mxu0 %v1588
  %2011 = vmatprep.mubr.bf16.mxu0 %v699
  %2012 = vmatmul.mubr.bf16.gmra.mrb[0].mxu0 %v698
  %v2013 = vpop.f32.mrb[0].mxu0
  %v2014 = vadd.f32 %v1973, %v2013
  %v2015 = vpop.f32.mrb[0].mxu0
  %v2016 = vpop.f32.mrb[0].mxu0
  %v2017 = vadd.f32 %v1976, %v2016
  %v2018 = vpop.f32.mrb[0].mxu0
  %2019 = vdwg.mxu0
  %2020 = vmatprep.subr.bf16.mxu0 0
  %2021 = vmatpush1.bf16.msra.mxu0 %v1589
  %2022 = vmatprep.subr.bf16.mxu0 0
  %2023 = vmatpush1.bf16.msra.mxu0 %v1590
  %2024 = vmatprep.subr.bf16.mxu0 0
  %2025 = vmatpush1.bf16.msra.mxu0 %v1591
  %2026 = vmatprep.subr.bf16.mxu0 0
  %2027 = vmatpush1.bf16.msra.mxu0 %v1592
  %2028 = vmatprep.subr.bf16.mxu0 0
  %2029 = vmatpush1.bf16.msra.mxu0 %v1593
  %2030 = vmatprep.subr.bf16.mxu0 0
  %2031 = vmatpush1.bf16.msra.mxu0 %v1594
  %2032 = vmatprep.subr.bf16.mxu0 0
  %2033 = vmatpush1.bf16.msra.mxu0 %v1595
  %2034 = vmatprep.subr.bf16.mxu0 0
  %2035 = vmatpush1.bf16.msra.mxu0 %v1596
  %2036 = vmatprep.subr.bf16.mxu0 0
  %2037 = vmatpush1.bf16.msra.mxu0 %v1597
  %2038 = vmatprep.subr.bf16.mxu0 0
  %2039 = vmatpush1.bf16.msra.mxu0 %v1598
  %2040 = vmatprep.subr.bf16.mxu0 0
  %2041 = vmatpush1.bf16.msra.mxu0 %v1599
  %2042 = vmatprep.subr.bf16.mxu0 0
  %2043 = vmatpush1.bf16.msra.mxu0 %v1600
  %2044 = vmatprep.subr.bf16.mxu0 0
  %2045 = vmatpush1.bf16.msra.mxu0 %v1601
  %2046 = vmatprep.subr.bf16.mxu0 0
  %2047 = vmatpush1.bf16.msra.mxu0 %v1602
  %2048 = vmatprep.subr.bf16.mxu0 0
  %2049 = vmatpush1.bf16.msra.mxu0 %v1603
  %2050 = vmatprep.subr.bf16.mxu0 0
  %2051 = vmatpush1.bf16.msra.mxu0 %v1604
  %2052 = vmatprep.mubr.bf16.mxu0 %v701
  %2053 = vmatmul.mubr.bf16.gmra.mrb[0].mxu0 %v700
  %v2054 = vpop.f32.mrb[0].mxu0
  %v2055 = vadd.f32 %v2014, %v2054
  %v2056 = vpop.f32.mrb[0].mxu0
  %v2057 = vpop.f32.mrb[0].mxu0
  %v2058 = vadd.f32 %v2017, %v2057
  %v2059 = vpop.f32.mrb[0].mxu0
  %2060 = vdwg.mxu0
  %v2061 = vadd.f32 %v2055, %v27
  %v2062 = vadd.f32 %v2058, %v28
  %v2063 = vld [vmem:[%s5] sm:$0x1]
  %v2064 = vld [vmem:[%s6] sm:$0x1]
  %v2065 = vsel %vm306, %v2061, 0.0
  %2066 = vadd.xlane.f32.xlu0 %v2065
  %v2067 = vpop.xlane.xlu0 %2066
  %v2068 = vsel %vm306, %v2062, 0.0
  %2069 = vadd.xlane.f32.xlu0 %v2068
  %v2070 = vpop.xlane.xlu0 %2069
  %v2071 = vrcp.pop 32.0
  %v2072 = vmul.f32 %v2067, %v2071
  %v2073 = vmul.f32 %v2070, %v2071
  %v2074 = vsub.f32 %v2061, %v2072
  %v2075 = vsub.f32 %v2062, %v2073
  %v2076 = vmul.f32 %v2074, %v2074
  %v2077 = vmul.f32 %v2075, %v2075
  %v2078 = vsel %vm306, %v2076, 0.0
  %2079 = vadd.xlane.f32.xlu0 %v2078
  %v2080 = vpop.xlane.xlu0 %2079
  %v2081 = vsel %vm306, %v2077, 0.0
  %2082 = vadd.xlane.f32.xlu0 %v2081
  %v2083 = vpop.xlane.xlu0 %2082
  %v2084 = vmul.f32 %v2080, %v2071
  %v2085 = vmul.f32 %v2083, %v2071
  %v2086 = vadd.f32 %v2084, 1e-05
  %v2087 = vadd.f32 %v2085, 1e-05
  %v2088 = vrsqrt.pop %v2086
  %v2089 = vrsqrt.pop %v2087
  %v2090 = vmul.f32 %v2074, %v2088
  %v2091 = vmul.f32 %v2075, %v2089
  %v2093 = vlaneseq
  %v2094 = vshrl.u32 %v2093, 7
  %v2095 = vsub.s32 0, %v2094
  %v2096 = vrot.slane %v2063, %v2095
  %v2098 = vmul.f32 %v2090, %v2096
  %v2099 = vmul.f32 %v2091, %v2096
  %v2101 = vlaneseq
  %v2102 = vshrl.u32 %v2101, 7
  %v2103 = vsub.s32 0, %v2102
  %v2104 = vrot.slane %v2064, %v2103
  %v2106 = vadd.f32 %v2098, %v2104
  %v2107 = vadd.f32 %v2099, %v2104
  %2108 = vst.msk [vmem:[%s7] sm:$0xff] %vm306, %v2106
  %2109 = vst.msk [vmem:[%s7 + $0x8] sm:$0xff] %vm306, %v2107
  // Predicated region
  $region30: #{transformer_forward.12} parent=0 // pred_check
    _
  $region31: #{transformer_forward.12} parent=0 // pred_check_branch
    %2111 = sbr.rel (0) target = $region33
  $region32: #{transformer_forward.12} parent=0 // pred_region
    _
  $region33: #{transformer_forward.12} parent=0 // pred_fallthru
    _
  // Predicated region
  $region34: #{transformer_forward.12} parent=0 // pred_check
    _
  $region35: #{transformer_forward.12} parent=0 // pred_check_branch
    %2113 = sbr.rel (0) target = $region37
  $region36: #{transformer_forward.12} parent=0 // pred_region
    _
  $region37: #{transformer_forward.12} parent=0 // pred_fallthru
    _

</llo_original>
